<compile_context>
chip_gen: v6e
topology: v6e:2x2x1
jax: 0.10.0
libtpu: 0.0.40
codegen_flags: <defaults>
</compile_context>

<pallas_src>
import functools

import jax
import jax.numpy as jnp
from jax.experimental import pallas as pl
from jax.experimental.pallas import tpu as pltpu

# ----------------------------- model config ---------------------------------
VOCAB = 256
HIDDEN = 128
N_LAYERS = 2
N_HEADS = 4
N_KV_HEADS = 2
HEAD_DIM = HIDDEN // N_HEADS
INTER = 256
EPS = 1e-6
ROPE_BASE = 10000.0

Q_DIM = N_HEADS * HEAD_DIM            # 128
KV_DIM = N_KV_HEADS * HEAD_DIM        # 64
QKV_DIM = Q_DIM + 2 * KV_DIM          # 256  (lane-dense fused projection)
GU_DIM = 2 * INTER                    # 512  (lane-dense fused gate|up)
KV_GROUP = N_HEADS // N_KV_HEADS


def _dot_bf16(a, b):
    """a @ b with bf16 MXU inputs, f32 accumulation."""
    return jnp.dot(a.astype(jnp.bfloat16), b.astype(jnp.bfloat16),
                   preferred_element_type=jnp.float32)


def _dot_nt_bf16(a, b):
    """a @ b.T (contract last dims) with bf16 MXU inputs, f32 accumulation."""
    return jax.lax.dot_general(
        a.astype(jnp.bfloat16), b.astype(jnp.bfloat16),
        (((1,), (1,)), ((), ())),
        preferred_element_type=jnp.float32)


# -------------------------- fused decoder layer ------------------------------
def _layer_kernel(h_ref, ln1_ref, ln2_ref, wqkv_ref, wo_ref, wgu_ref, wd_ref,
                  cos_ref, sin_ref, o_ref):
    S = h_ref.shape[1]
    h = h_ref[0].astype(jnp.float32)                       # (S, H) residual

    # ---- RMSNorm 1 (f32 elementwise) ----
    var = jnp.mean(h * h, axis=-1, keepdims=True)
    xn = h * jax.lax.rsqrt(var + EPS) * ln1_ref[...]       # (S, H)

    # ---- fused QKV projection (one lane-dense 256-wide matmul) ----
    qkv = _dot_bf16(xn, wqkv_ref[...])                     # (S, QKV_DIM) f32

    cos = cos_ref[...]                                     # (S, D)
    sin = sin_ref[...]
    half = HEAD_DIM // 2

    def rope(x):                                           # x: (S, D) f32
        x1 = x[:, :half]
        x2 = x[:, half:]
        x_rot = jnp.concatenate([-x2, x1], axis=-1)
        return x * cos + x_rot * sin

    # roped K / raw V per KV head (computed once; shared across the GQA group)
    k_heads = []
    v_heads = []
    for kh in range(N_KV_HEADS):
        ks = qkv[:, Q_DIM + kh * HEAD_DIM: Q_DIM + (kh + 1) * HEAD_DIM]
        vs = qkv[:, Q_DIM + KV_DIM + kh * HEAD_DIM:
                 Q_DIM + KV_DIM + (kh + 1) * HEAD_DIM]
        k_heads.append(rope(ks))
        v_heads.append(vs)

    row = jax.lax.broadcasted_iota(jnp.int32, (S, S), 0)
    col = jax.lax.broadcasted_iota(jnp.int32, (S, S), 1)
    causal = col <= row
    scale = jnp.float32(1.0 / (HEAD_DIM ** 0.5))

    outs = []
    for qh in range(N_HEADS):                              # static unrolled loop
        qs = rope(qkv[:, qh * HEAD_DIM: (qh + 1) * HEAD_DIM]) * scale
        kh = k_heads[qh // KV_GROUP]
        vh = v_heads[qh // KV_GROUP]
        s = _dot_nt_bf16(qs, kh)                           # (S, S) f32
        s = jnp.where(causal, s, jnp.float32(-1e30))
        m = jnp.max(s, axis=-1, keepdims=True)
        p = jnp.exp(s - m)                                 # f32 (EUP)
        denom = jnp.sum(p, axis=-1, keepdims=True)
        o = _dot_bf16(p, vh)                               # (S, D) f32
        outs.append(o * pl.reciprocal(denom, approx=True))
    attn = jnp.concatenate(outs, axis=-1)                  # (S, Q_DIM)

    # ---- output projection + residual ----
    h2 = h + _dot_bf16(attn, wo_ref[...])                  # (S, H)

    # ---- RMSNorm 2 + fused SwiGLU MLP + residual ----
    var2 = jnp.mean(h2 * h2, axis=-1, keepdims=True)
    x2 = h2 * jax.lax.rsqrt(var2 + EPS) * ln2_ref[...]
    gu = _dot_bf16(x2, wgu_ref[...])                       # (S, 2*INTER)
    g = gu[:, :INTER]
    u = gu[:, INTER:]
    act = (g * jax.nn.sigmoid(g)) * u                      # SiLU(gate) * up, f32
    mo = _dot_bf16(act, wd_ref[...])                       # (S, H)

    o_ref[0] = (h2 + mo).astype(o_ref.dtype)


def fused_decoder_layer(h, lp, cos, sin):
    """h: (B, S, H) f32 -> (B, S, H) f32. One pallas_call per layer."""
    B, S, H = h.shape
    return pl.pallas_call(
        _layer_kernel,
        out_shape=jax.ShapeDtypeStruct((B, S, H), jnp.float32),
        grid=(B,),
        in_specs=[
            pl.BlockSpec((1, S, H), lambda b: (b, 0, 0)),          # hidden
            pl.BlockSpec((1, H), lambda b: (0, 0)),                # ln1
            pl.BlockSpec((1, H), lambda b: (0, 0)),                # ln2
            pl.BlockSpec((H, QKV_DIM), lambda b: (0, 0)),          # wqkv (H,256)
            pl.BlockSpec((Q_DIM, H), lambda b: (0, 0)),            # wo   (128,H)
            pl.BlockSpec((H, GU_DIM), lambda b: (0, 0)),           # wgu  (H,512)
            pl.BlockSpec((INTER, H), lambda b: (0, 0)),            # wd   (I,H)
            pl.BlockSpec((S, HEAD_DIM), lambda b: (0, 0)),         # cos
            pl.BlockSpec((S, HEAD_DIM), lambda b: (0, 0)),         # sin
        ],
        out_specs=pl.BlockSpec((1, S, H), lambda b: (b, 0, 0)),
        compiler_params=pltpu.CompilerParams(
            dimension_semantics=("parallel",)),
    )(h, lp["ln1"], lp["ln2"], lp["wqkv_t"], lp["wo_t"], lp["wgu_t"],
      lp["wd_t"], cos, sin)


# ---------------------- fused final norm + lm_head ---------------------------
def _head_kernel(h_ref, lnf_ref, wlm_ref, logits_ref):
    h = h_ref[0].astype(jnp.float32)                       # (S, H)
    var = jnp.mean(h * h, axis=-1, keepdims=True)
    xn = h * jax.lax.rsqrt(var + EPS) * lnf_ref[...]
    logits_ref[0] = _dot_bf16(xn, wlm_ref[...])            # (S, V) f32


def final_norm_lm_head(h, lnf, wlm_t):
    B, S, H = h.shape
    V = wlm_t.shape[1]
    return pl.pallas_call(
        _head_kernel,
        out_shape=jax.ShapeDtypeStruct((B, S, V), jnp.float32),
        grid=(B,),
        in_specs=[
            pl.BlockSpec((1, S, H), lambda b: (b, 0, 0)),
            pl.BlockSpec((1, H), lambda b: (0, 0)),
            pl.BlockSpec((H, V), lambda b: (0, 0)),
        ],
        out_specs=pl.BlockSpec((1, S, V), lambda b: (b, 0, 0)),
        compiler_params=pltpu.CompilerParams(
            dimension_semantics=("parallel",)),
    )(h, lnf, wlm_t)


# ------------------------------ glue (JAX) -----------------------------------
def rotary_cos_sin(seq_len, dim):
    inv_freq = 1.0 / (ROPE_BASE ** (jnp.arange(0, dim, 2, dtype=jnp.float32) / dim))
    t = jnp.arange(seq_len, dtype=jnp.float32)
    freqs = jnp.outer(t, inv_freq)                   # (S, dim/2)
    emb = jnp.concatenate([freqs, freqs], axis=-1)   # (S, dim)
    return jnp.cos(emb), jnp.sin(emb)


def decoder_forward(fast_params, input_ids, labels=None):
    """model_forward / model_model_forward semantics (generation path)."""
    B, S = input_ids.shape
    h = jnp.take(fast_params["embed"], input_ids, axis=0)   # (B, S, H) f32

    # rotary tables are layer-invariant: compute once per forward
    cos, sin = rotary_cos_sin(S, HEAD_DIM)

    for lp in fast_params["layers"]:
        h = fused_decoder_layer(h, lp, cos, sin)

    logits = final_norm_lm_head(h, fast_params["final_norm"],
                                fast_params["lm_head_t"])   # (B, S, V) f32

    loss = None
    if labels is not None:
        shift_logits = logits[:, :-1, :].reshape(-1, VOCAB)
        shift_labels = labels[:, 1:].reshape(-1)
        logp = jax.nn.log_softmax(shift_logits, axis=-1)
        nll = -jnp.take_along_axis(logp, shift_labels[:, None], axis=-1)[:, 0]
        loss = jnp.mean(nll)
    return loss, logits


# --------------------------- parameter init ----------------------------------
def init_params(key):
    """PyTorch-style parameters (Linear weights are (out_features, in_features))."""
    def nrm(k, shape, scale=0.02):
        return (scale * jax.random.normal(k, shape)).astype(jnp.float32)

    keys = jax.random.split(key, 2 + N_LAYERS)
    params = {
        "embed": nrm(keys[0], (VOCAB, HIDDEN)),
        "lm_head": nrm(keys[1], (VOCAB, HIDDEN)),
        "final_norm": jnp.ones((HIDDEN,), jnp.float32),
        "layers": [],
    }
    for li in range(N_LAYERS):
        lk = jax.random.split(keys[2 + li], 7)
        params["layers"].append({
            "ln1": jnp.ones((HIDDEN,), jnp.float32),
            "ln2": jnp.ones((HIDDEN,), jnp.float32),
            "wq": nrm(lk[0], (N_HEADS * HEAD_DIM, HIDDEN)),
            "wk": nrm(lk[1], (N_KV_HEADS * HEAD_DIM, HIDDEN)),
            "wv": nrm(lk[2], (N_KV_HEADS * HEAD_DIM, HIDDEN)),
            "wo": nrm(lk[3], (HIDDEN, N_HEADS * HEAD_DIM)),
            "wg": nrm(lk[4], (INTER, HIDDEN)),
            "wu": nrm(lk[5], (INTER, HIDDEN)),
            "wd": nrm(lk[6], (HIDDEN, INTER)),
        })
    return params


def prepare_params(params):
    """One-time fuse + transpose (to (in, out)) + bf16 cast of MXU weights.

    Elementwise parameters (embeddings, RMSNorm weights) stay float32.
    """
    fast = {
        "embed": params["embed"],
        "final_norm": params["final_norm"].reshape(1, HIDDEN),
        "lm_head_t": jnp.transpose(params["lm_head"]).astype(jnp.bfloat16),
        "layers": [],
    }
    for lp in params["layers"]:
        wqkv = jnp.concatenate([lp["wq"], lp["wk"], lp["wv"]], axis=0)  # (256, H)
        wgu = jnp.concatenate([lp["wg"], lp["wu"]], axis=0)             # (512, H)
        fast["layers"].append({
            "ln1": lp["ln1"].reshape(1, HIDDEN),
            "ln2": lp["ln2"].reshape(1, HIDDEN),
            "wqkv_t": jnp.transpose(wqkv).astype(jnp.bfloat16),   # (H, 256)
            "wo_t": jnp.transpose(lp["wo"]).astype(jnp.bfloat16), # (128, H)
            "wgu_t": jnp.transpose(wgu).astype(jnp.bfloat16),     # (H, 512)
            "wd_t": jnp.transpose(lp["wd"]).astype(jnp.bfloat16), # (I, H)
        })
    return fast


# --------------------------------- main ---------------------------------------
if __name__ == "__main__":
    B, S = 2, 16
    key = jax.random.PRNGKey(0)
    k_param, k_ids = jax.random.split(key)
    params = init_params(k_param)
    fast_params = jax.tree_util.tree_map(lambda x: x, prepare_params(params))
    input_ids = jax.random.randint(k_ids, (B, S), 0, VOCAB, dtype=jnp.int32)
    labels = input_ids  # next-token prediction on the same sequence

    fwd = jax.jit(lambda ids, lbl: decoder_forward(fast_params, ids, lbl))
    loss, logits = fwd(input_ids, labels)
    jax.block_until_ready((loss, logits))

    assert logits.shape == (B, S, VOCAB)
    assert logits.dtype == jnp.float32
    assert bool(jnp.isfinite(loss))
    assert bool(jnp.all(jnp.isfinite(logits)))
    print("KERNEL_OK")
</pallas_src>

<mosaic_0001>
module attributes {stable_mosaic.version = 11 : i64} {
  func.func @_head_kernel(%arg0: i32, %arg1: memref<1x16x128xf32, #tpu.memory_space<vmem>>, %arg2: memref<1x128xf32, #tpu.memory_space<vmem>>, %arg3: memref<128x256xbf16, #tpu.memory_space<vmem>>, %arg4: memref<1x16x256xf32, #tpu.memory_space<vmem>>) attributes {dimension_semantics = [#tpu.dimension_semantics<parallel>], iteration_bounds = array<i64: 2>, scalar_prefetch = 0 : i64, scratch_operands = 0 : i64, tpu.core_type = #tpu.core_type<tc>, window_params = [{transform_indices = @transform_0, window_bounds = array<i64: 1, 16, 128>}, {pipeline_mode = #tpu.pipeline_mode<synchronous>, transform_indices = @transform_1, window_bounds = array<i64: 1, 128>}, {pipeline_mode = #tpu.pipeline_mode<synchronous>, transform_indices = @transform_2, window_bounds = array<i64: 128, 256>}, {transform_indices = @transform_3, window_bounds = array<i64: 1, 16, 256>}]} {
    %c0 = arith.constant 0 : index
    %c0_0 = arith.constant 0 : index
    %c0_1 = arith.constant 0 : index
    %0 = vector.load %arg1[%c0, %c0_0, %c0_1] : memref<1x16x128xf32, #tpu.memory_space<vmem>>, vector<1x16x128xf32>
    %1 = vector.shape_cast %0 : vector<1x16x128xf32> to vector<16x128xf32>
    %2 = arith.mulf %1, %1 : vector<16x128xf32>
    %cst = arith.constant dense<0.000000e+00> : vector<16xf32>
    %3 = vector.multi_reduction <add>, %2, %cst [1] : vector<16x128xf32> to vector<16xf32>
    %4 = vector.shape_cast %3 : vector<16xf32> to vector<16x1xf32>
    %cst_2 = arith.constant 1.280000e+02 : f32
    %5 = vector.broadcast %cst_2 : f32 to vector<16x1xf32>
    %6 = arith.divf %4, %5 : vector<16x1xf32>
    %cst_3 = arith.constant 9.99999997E-7 : f32
    %7 = vector.broadcast %cst_3 : f32 to vector<16x1xf32>
    %8 = arith.addf %6, %7 : vector<16x1xf32>
    %9 = math.rsqrt %8 : vector<16x1xf32>
    %10 = vector.broadcast %9 : vector<16x1xf32> to vector<16x128xf32>
    %11 = arith.mulf %1, %10 : vector<16x128xf32>
    %c0_4 = arith.constant 0 : index
    %c0_5 = arith.constant 0 : index
    %12 = vector.load %arg2[%c0_4, %c0_5] : memref<1x128xf32, #tpu.memory_space<vmem>>, vector<1x128xf32>
    %13 = vector.broadcast %12 : vector<1x128xf32> to vector<16x128xf32>
    %14 = arith.mulf %11, %13 : vector<16x128xf32>
    %c0_6 = arith.constant 0 : index
    %c0_7 = arith.constant 0 : index
    %15 = vector.load %arg3[%c0_6, %c0_7] : memref<128x256xbf16, #tpu.memory_space<vmem>>, vector<128x256xbf16>
    %16 = arith.truncf %14 : vector<16x128xf32> to vector<16x128xbf16>
    %cst_8 = arith.constant dense<0.000000e+00> : vector<16x256xf32>
    %17 = tpu.matmul %16, %15, %cst_8 {dimension_numbers = #tpu.dot_dimension_numbers<[1], [0], [0], [1], [0, 0, 1, 1], [], []>} : vector<16x128xbf16>, vector<128x256xbf16>, vector<16x256xf32> -> vector<16x256xf32>
    %c0_9 = arith.constant 0 : index
    %c0_10 = arith.constant 0 : index
    %c0_11 = arith.constant 0 : index
    %18 = vector.load %arg4[%c0_9, %c0_10, %c0_11] : memref<1x16x256xf32, #tpu.memory_space<vmem>>, vector<1x16x256xf32>
    %19 = vector.shape_cast %18 : vector<1x16x256xf32> to vector<16x256xf32>
    %20 = vector.shape_cast %17 : vector<16x256xf32> to vector<1x16x256xf32>
    tpu.vector_store %arg4[%c0_9, %c0_10, %c0_11], %20 {strides = array<i32>} : memref<1x16x256xf32, #tpu.memory_space<vmem>>, vector<1x16x256xf32>,
    return
  }
  func.func @transform_0(%arg0: i32) -> (i32, i32, i32) {
    %c0_i32 = arith.constant 0 : i32
    %c0_i32_0 = arith.constant 0 : i32
    %c0_i32_1 = arith.constant 0 : i32
    return %arg0, %c0_i32, %c0_i32_0 : i32, i32, i32
  }
  func.func @transform_1(%arg0: i32) -> (i32, i32) {
    %c0_i32 = arith.constant 0 : i32
    %c0_i32_0 = arith.constant 0 : i32
    %c0_i32_1 = arith.constant 0 : i32
    return %c0_i32, %c0_i32_0 : i32, i32
  }
  func.func @transform_2(%arg0: i32) -> (i32, i32) {
    %c0_i32 = arith.constant 0 : i32
    %c0_i32_0 = arith.constant 0 : i32
    %c0_i32_1 = arith.constant 0 : i32
    return %c0_i32, %c0_i32_0 : i32, i32
  }
  func.func @transform_3(%arg0: i32) -> (i32, i32, i32) {
    %c0_i32 = arith.constant 0 : i32
    %c0_i32_0 = arith.constant 0 : i32
    %c0_i32_1 = arith.constant 0 : i32
    return %arg0, %c0_i32, %c0_i32_0 : i32, i32, i32
  }
}

module attributes {stable_mosaic.version = 11 : i64} {
  func.func @_layer_kernel(%arg0: i32, %arg1: memref<1x16x128xf32, #tpu.memory_space<vmem>>, %arg2: memref<1x128xf32, #tpu.memory_space<vmem>>, %arg3: memref<1x128xf32, #tpu.memory_space<vmem>>, %arg4: memref<128x256xbf16, #tpu.memory_space<vmem>>, %arg5: memref<128x128xbf16, #tpu.memory_space<vmem>>, %arg6: memref<128x512xbf16, #tpu.memory_space<vmem>>, %arg7: memref<256x128xbf16, #tpu.memory_space<vmem>>, %arg8: memref<16x32xf32, #tpu.memory_space<vmem>>, %arg9: memref<16x32xf32, #tpu.memory_space<vmem>>, %arg10: memref<1x16x128xf32, #tpu.memory_space<vmem>>) attributes {dimension_semantics = [#tpu.dimension_semantics<parallel>], iteration_bounds = array<i64: 2>, scalar_prefetch = 0 : i64, scratch_operands = 0 : i64, tpu.core_type = #tpu.core_type<tc>, window_params = [{transform_indices = @transform_0, window_bounds = array<i64: 1, 16, 128>}, {pipeline_mode = #tpu.pipeline_mode<synchronous>, transform_indices = @transform_1, window_bounds = array<i64: 1, 128>}, {pipeline_mode = #tpu.pipeline_mode<synchronous>, transform_indices = @transform_2, window_bounds = array<i64: 1, 128>}, {pipeline_mode = #tpu.pipeline_mode<synchronous>, transform_indices = @transform_3, window_bounds = array<i64: 128, 256>}, {pipeline_mode = #tpu.pipeline_mode<synchronous>, transform_indices = @transform_4, window_bounds = array<i64: 128, 128>}, {pipeline_mode = #tpu.pipeline_mode<synchronous>, transform_indices = @transform_5, window_bounds = array<i64: 128, 512>}, {pipeline_mode = #tpu.pipeline_mode<synchronous>, transform_indices = @transform_6, window_bounds = array<i64: 256, 128>}, {pipeline_mode = #tpu.pipeline_mode<synchronous>, transform_indices = @transform_7, window_bounds = array<i64: 16, 32>}, {pipeline_mode = #tpu.pipeline_mode<synchronous>, transform_indices = @transform_8, window_bounds = array<i64: 16, 32>}, {transform_indices = @transform_9, window_bounds = array<i64: 1, 16, 128>}]} {
    %c0 = arith.constant 0 : index
    %c0_0 = arith.constant 0 : index
    %c0_1 = arith.constant 0 : index
    %0 = vector.load %arg1[%c0, %c0_0, %c0_1] : memref<1x16x128xf32, #tpu.memory_space<vmem>>, vector<1x16x128xf32>
    %1 = vector.shape_cast %0 : vector<1x16x128xf32> to vector<16x128xf32>
    %2 = arith.mulf %1, %1 : vector<16x128xf32>
    %cst = arith.constant dense<0.000000e+00> : vector<16xf32>
    %3 = vector.multi_reduction <add>, %2, %cst [1] : vector<16x128xf32> to vector<16xf32>
    %4 = vector.shape_cast %3 : vector<16xf32> to vector<16x1xf32>
    %cst_2 = arith.constant 1.280000e+02 : f32
    %5 = vector.broadcast %cst_2 : f32 to vector<16x1xf32>
    %6 = arith.divf %4, %5 : vector<16x1xf32>
    %cst_3 = arith.constant 9.99999997E-7 : f32
    %7 = vector.broadcast %cst_3 : f32 to vector<16x1xf32>
    %8 = arith.addf %6, %7 : vector<16x1xf32>
    %9 = math.rsqrt %8 : vector<16x1xf32>
    %10 = vector.broadcast %9 : vector<16x1xf32> to vector<16x128xf32>
    %11 = arith.mulf %1, %10 : vector<16x128xf32>
    %c0_4 = arith.constant 0 : index
    %c0_5 = arith.constant 0 : index
    %12 = vector.load %arg2[%c0_4, %c0_5] : memref<1x128xf32, #tpu.memory_space<vmem>>, vector<1x128xf32>
    %13 = vector.broadcast %12 : vector<1x128xf32> to vector<16x128xf32>
    %14 = arith.mulf %11, %13 : vector<16x128xf32>
    %c0_6 = arith.constant 0 : index
    %c0_7 = arith.constant 0 : index
    %15 = vector.load %arg4[%c0_6, %c0_7] : memref<128x256xbf16, #tpu.memory_space<vmem>>, vector<128x256xbf16>
    %16 = arith.truncf %14 : vector<16x128xf32> to vector<16x128xbf16>
    %cst_8 = arith.constant dense<0.000000e+00> : vector<16x256xf32>
    %17 = tpu.matmul %16, %15, %cst_8 {dimension_numbers = #tpu.dot_dimension_numbers<[1], [0], [0], [1], [0, 0, 1, 1], [], []>} : vector<16x128xbf16>, vector<128x256xbf16>, vector<16x256xf32> -> vector<16x256xf32>
    %c0_9 = arith.constant 0 : index
    %c0_10 = arith.constant 0 : index
    %18 = vector.load %arg8[%c0_9, %c0_10] : memref<16x32xf32, #tpu.memory_space<vmem>>, vector<16x32xf32>
    %c0_11 = arith.constant 0 : index
    %c0_12 = arith.constant 0 : index
    %19 = vector.load %arg9[%c0_11, %c0_12] : memref<16x32xf32, #tpu.memory_space<vmem>>, vector<16x32xf32>
    %20 = vector.extract_strided_slice %17 {offsets = [0, 128], sizes = [16, 32], strides = [1, 1]} : vector<16x256xf32> to vector<16x32xf32>
    %21 = vector.extract_strided_slice %17 {offsets = [0, 192], sizes = [16, 32], strides = [1, 1]} : vector<16x256xf32> to vector<16x32xf32>
    %22 = vector.extract_strided_slice %20 {offsets = [0, 0], sizes = [16, 16], strides = [1, 1]} : vector<16x32xf32> to vector<16x16xf32>
    %23 = vector.extract_strided_slice %20 {offsets = [0, 16], sizes = [16, 16], strides = [1, 1]} : vector<16x32xf32> to vector<16x16xf32>
    %cst_13 = arith.constant 0.000000e+00 : f32
    %24 = vector.broadcast %cst_13 : f32 to vector<16x16xf32>
    %25 = arith.subf %24, %23 : vector<16x16xf32>
    %26 = tpu.concatenate %25, %22 in 1 : vector<16x16xf32>, vector<16x16xf32> -> vector<16x32xf32>
    %27 = arith.mulf %20, %18 : vector<16x32xf32>
    %28 = arith.mulf %26, %19 : vector<16x32xf32>
    %29 = arith.addf %27, %28 : vector<16x32xf32>
    %30 = vector.extract_strided_slice %17 {offsets = [0, 160], sizes = [16, 32], strides = [1, 1]} : vector<16x256xf32> to vector<16x32xf32>
    %31 = vector.extract_strided_slice %17 {offsets = [0, 224], sizes = [16, 32], strides = [1, 1]} : vector<16x256xf32> to vector<16x32xf32>
    %32 = vector.extract_strided_slice %30 {offsets = [0, 0], sizes = [16, 16], strides = [1, 1]} : vector<16x32xf32> to vector<16x16xf32>
    %33 = vector.extract_strided_slice %30 {offsets = [0, 16], sizes = [16, 16], strides = [1, 1]} : vector<16x32xf32> to vector<16x16xf32>
    %cst_14 = arith.constant 0.000000e+00 : f32
    %34 = vector.broadcast %cst_14 : f32 to vector<16x16xf32>
    %35 = arith.subf %34, %33 : vector<16x16xf32>
    %36 = tpu.concatenate %35, %32 in 1 : vector<16x16xf32>, vector<16x16xf32> -> vector<16x32xf32>
    %37 = arith.mulf %30, %18 : vector<16x32xf32>
    %38 = arith.mulf %36, %19 : vector<16x32xf32>
    %39 = arith.addf %37, %38 : vector<16x32xf32>
    %40 = tpu.iota {dimensions = array<i32: 0>} : vector<16x16xi32>
    %41 = tpu.iota {dimensions = array<i32: 1>} : vector<16x16xi32>
    %42 = arith.cmpi sle, %41, %40 : vector<16x16xi32>
    %43 = vector.extract_strided_slice %17 {offsets = [0, 0], sizes = [16, 32], strides = [1, 1]} : vector<16x256xf32> to vector<16x32xf32>
    %44 = vector.extract_strided_slice %43 {offsets = [0, 0], sizes = [16, 16], strides = [1, 1]} : vector<16x32xf32> to vector<16x16xf32>
    %45 = vector.extract_strided_slice %43 {offsets = [0, 16], sizes = [16, 16], strides = [1, 1]} : vector<16x32xf32> to vector<16x16xf32>
    %cst_15 = arith.constant 0.000000e+00 : f32
    %46 = vector.broadcast %cst_15 : f32 to vector<16x16xf32>
    %47 = arith.subf %46, %45 : vector<16x16xf32>
    %48 = tpu.concatenate %47, %44 in 1 : vector<16x16xf32>, vector<16x16xf32> -> vector<16x32xf32>
    %49 = arith.mulf %43, %18 : vector<16x32xf32>
    %50 = arith.mulf %48, %19 : vector<16x32xf32>
    %51 = arith.addf %49, %50 : vector<16x32xf32>
    %cst_16 = arith.constant 0.176776692 : f32
    %52 = vector.broadcast %cst_16 : f32 to vector<16x32xf32>
    %53 = arith.mulf %51, %52 : vector<16x32xf32>
    %54 = arith.truncf %53 : vector<16x32xf32> to vector<16x32xbf16>
    %55 = arith.truncf %29 : vector<16x32xf32> to vector<16x32xbf16>
    %cst_17 = arith.constant dense<0.000000e+00> : vector<16x16xf32>
    %56 = tpu.matmul %54, %55, %cst_17 {dimension_numbers = #tpu.dot_dimension_numbers<[1], [1], [0], [0], [0, 0, 1, 0], [], []>} : vector<16x32xbf16>, vector<16x32xbf16>, vector<16x16xf32> -> vector<16x16xf32>
    %cst_18 = arith.constant -1.000000e+30 : f32
    %57 = vector.broadcast %cst_18 : f32 to vector<16x16xf32>
    %58 = arith.select %42, %56, %57 : vector<16x16xi1>, vector<16x16xf32>
    %cst_19 = arith.constant dense<0xFF800000> : vector<16xf32>
    %59 = vector.multi_reduction <maximumf>, %58, %cst_19 [1] : vector<16x16xf32> to vector<16xf32>
    %60 = vector.shape_cast %59 : vector<16xf32> to vector<16x1xf32>
    %61 = vector.broadcast %60 : vector<16x1xf32> to vector<16x16xf32>
    %62 = arith.subf %58, %61 : vector<16x16xf32>
    %63 = math.exp %62 : vector<16x16xf32>
    %cst_20 = arith.constant dense<0.000000e+00> : vector<16xf32>
    %64 = vector.multi_reduction <add>, %63, %cst_20 [1] : vector<16x16xf32> to vector<16xf32>
    %65 = vector.shape_cast %64 : vector<16xf32> to vector<16x1xf32>
    %66 = arith.truncf %63 : vector<16x16xf32> to vector<16x16xbf16>
    %67 = arith.truncf %21 : vector<16x32xf32> to vector<16x32xbf16>
    %cst_21 = arith.constant dense<0.000000e+00> : vector<16x32xf32>
    %68 = tpu.matmul %66, %67, %cst_21 {dimension_numbers = #tpu.dot_dimension_numbers<[1], [0], [0], [1], [0, 0, 1, 1], [], []>} : vector<16x16xbf16>, vector<16x32xbf16>, vector<16x32xf32> -> vector<16x32xf32>
    %69 = tpu.reciprocal %65 {approx = true} : vector<16x1xf32> -> vector<16x1xf32>
    %70 = vector.broadcast %69 : vector<16x1xf32> to vector<16x32xf32>
    %71 = arith.mulf %68, %70 : vector<16x32xf32>
    %72 = vector.extract_strided_slice %17 {offsets = [0, 32], sizes = [16, 32], strides = [1, 1]} : vector<16x256xf32> to vector<16x32xf32>
    %73 = vector.extract_strided_slice %72 {offsets = [0, 0], sizes = [16, 16], strides = [1, 1]} : vector<16x32xf32> to vector<16x16xf32>
    %74 = vector.extract_strided_slice %72 {offsets = [0, 16], sizes = [16, 16], strides = [1, 1]} : vector<16x32xf32> to vector<16x16xf32>
    %cst_22 = arith.constant 0.000000e+00 : f32
    %75 = vector.broadcast %cst_22 : f32 to vector<16x16xf32>
    %76 = arith.subf %75, %74 : vector<16x16xf32>
    %77 = tpu.concatenate %76, %73 in 1 : vector<16x16xf32>, vector<16x16xf32> -> vector<16x32xf32>
    %78 = arith.mulf %72, %18 : vector<16x32xf32>
    %79 = arith.mulf %77, %19 : vector<16x32xf32>
    %80 = arith.addf %78, %79 : vector<16x32xf32>
    %cst_23 = arith.constant 0.176776692 : f32
    %81 = vector.broadcast %cst_23 : f32 to vector<16x32xf32>
    %82 = arith.mulf %80, %81 : vector<16x32xf32>
    %83 = arith.truncf %82 : vector<16x32xf32> to vector<16x32xbf16>
    %84 = arith.truncf %29 : vector<16x32xf32> to vector<16x32xbf16>
    %cst_24 = arith.constant dense<0.000000e+00> : vector<16x16xf32>
    %85 = tpu.matmul %83, %84, %cst_24 {dimension_numbers = #tpu.dot_dimension_numbers<[1], [1], [0], [0], [0, 0, 1, 0], [], []>} : vector<16x32xbf16>, vector<16x32xbf16>, vector<16x16xf32> -> vector<16x16xf32>
    %cst_25 = arith.constant -1.000000e+30 : f32
    %86 = vector.broadcast %cst_25 : f32 to vector<16x16xf32>
    %87 = arith.select %42, %85, %86 : vector<16x16xi1>, vector<16x16xf32>
    %cst_26 = arith.constant dense<0xFF800000> : vector<16xf32>
    %88 = vector.multi_reduction <maximumf>, %87, %cst_26 [1] : vector<16x16xf32> to vector<16xf32>
    %89 = vector.shape_cast %88 : vector<16xf32> to vector<16x1xf32>
    %90 = vector.broadcast %89 : vector<16x1xf32> to vector<16x16xf32>
    %91 = arith.subf %87, %90 : vector<16x16xf32>
    %92 = math.exp %91 : vector<16x16xf32>
    %cst_27 = arith.constant dense<0.000000e+00> : vector<16xf32>
    %93 = vector.multi_reduction <add>, %92, %cst_27 [1] : vector<16x16xf32> to vector<16xf32>
    %94 = vector.shape_cast %93 : vector<16xf32> to vector<16x1xf32>
    %95 = arith.truncf %92 : vector<16x16xf32> to vector<16x16xbf16>
    %96 = arith.truncf %21 : vector<16x32xf32> to vector<16x32xbf16>
    %cst_28 = arith.constant dense<0.000000e+00> : vector<16x32xf32>
    %97 = tpu.matmul %95, %96, %cst_28 {dimension_numbers = #tpu.dot_dimension_numbers<[1], [0], [0], [1], [0, 0, 1, 1], [], []>} : vector<16x16xbf16>, vector<16x32xbf16>, vector<16x32xf32> -> vector<16x32xf32>
    %98 = tpu.reciprocal %94 {approx = true} : vector<16x1xf32> -> vector<16x1xf32>
    %99 = vector.broadcast %98 : vector<16x1xf32> to vector<16x32xf32>
    %100 = arith.mulf %97, %99 : vector<16x32xf32>
    %101 = vector.extract_strided_slice %17 {offsets = [0, 64], sizes = [16, 32], strides = [1, 1]} : vector<16x256xf32> to vector<16x32xf32>
    %102 = vector.extract_strided_slice %101 {offsets = [0, 0], sizes = [16, 16], strides = [1, 1]} : vector<16x32xf32> to vector<16x16xf32>
    %103 = vector.extract_strided_slice %101 {offsets = [0, 16], sizes = [16, 16], strides = [1, 1]} : vector<16x32xf32> to vector<16x16xf32>
    %cst_29 = arith.constant 0.000000e+00 : f32
    %104 = vector.broadcast %cst_29 : f32 to vector<16x16xf32>
    %105 = arith.subf %104, %103 : vector<16x16xf32>
    %106 = tpu.concatenate %105, %102 in 1 : vector<16x16xf32>, vector<16x16xf32> -> vector<16x32xf32>
    %107 = arith.mulf %101, %18 : vector<16x32xf32>
    %108 = arith.mulf %106, %19 : vector<16x32xf32>
    %109 = arith.addf %107, %108 : vector<16x32xf32>
    %cst_30 = arith.constant 0.176776692 : f32
    %110 = vector.broadcast %cst_30 : f32 to vector<16x32xf32>
    %111 = arith.mulf %109, %110 : vector<16x32xf32>
    %112 = arith.truncf %111 : vector<16x32xf32> to vector<16x32xbf16>
    %113 = arith.truncf %39 : vector<16x32xf32> to vector<16x32xbf16>
    %cst_31 = arith.constant dense<0.000000e+00> : vector<16x16xf32>
    %114 = tpu.matmul %112, %113, %cst_31 {dimension_numbers = #tpu.dot_dimension_numbers<[1], [1], [0], [0], [0, 0, 1, 0], [], []>} : vector<16x32xbf16>, vector<16x32xbf16>, vector<16x16xf32> -> vector<16x16xf32>
    %cst_32 = arith.constant -1.000000e+30 : f32
    %115 = vector.broadcast %cst_32 : f32 to vector<16x16xf32>
    %116 = arith.select %42, %114, %115 : vector<16x16xi1>, vector<16x16xf32>
    %cst_33 = arith.constant dense<0xFF800000> : vector<16xf32>
    %117 = vector.multi_reduction <maximumf>, %116, %cst_33 [1] : vector<16x16xf32> to vector<16xf32>
    %118 = vector.shape_cast %117 : vector<16xf32> to vector<16x1xf32>
    %119 = vector.broadcast %118 : vector<16x1xf32> to vector<16x16xf32>
    %120 = arith.subf %116, %119 : vector<16x16xf32>
    %121 = math.exp %120 : vector<16x16xf32>
    %cst_34 = arith.constant dense<0.000000e+00> : vector<16xf32>
    %122 = vector.multi_reduction <add>, %121, %cst_34 [1] : vector<16x16xf32> to vector<16xf32>
    %123 = vector.shape_cast %122 : vector<16xf32> to vector<16x1xf32>
    %124 = arith.truncf %121 : vector<16x16xf32> to vector<16x16xbf16>
    %125 = arith.truncf %31 : vector<16x32xf32> to vector<16x32xbf16>
    %cst_35 = arith.constant dense<0.000000e+00> : vector<16x32xf32>
    %126 = tpu.matmul %124, %125, %cst_35 {dimension_numbers = #tpu.dot_dimension_numbers<[1], [0], [0], [1], [0, 0, 1, 1], [], []>} : vector<16x16xbf16>, vector<16x32xbf16>, vector<16x32xf32> -> vector<16x32xf32>
    %127 = tpu.reciprocal %123 {approx = true} : vector<16x1xf32> -> vector<16x1xf32>
    %128 = vector.broadcast %127 : vector<16x1xf32> to vector<16x32xf32>
    %129 = arith.mulf %126, %128 : vector<16x32xf32>
    %130 = vector.extract_strided_slice %17 {offsets = [0, 96], sizes = [16, 32], strides = [1, 1]} : vector<16x256xf32> to vector<16x32xf32>
    %131 = vector.extract_strided_slice %130 {offsets = [0, 0], sizes = [16, 16], strides = [1, 1]} : vector<16x32xf32> to vector<16x16xf32>
    %132 = vector.extract_strided_slice %130 {offsets = [0, 16], sizes = [16, 16], strides = [1, 1]} : vector<16x32xf32> to vector<16x16xf32>
    %cst_36 = arith.constant 0.000000e+00 : f32
    %133 = vector.broadcast %cst_36 : f32 to vector<16x16xf32>
    %134 = arith.subf %133, %132 : vector<16x16xf32>
    %135 = tpu.concatenate %134, %131 in 1 : vector<16x16xf32>, vector<16x16xf32> -> vector<16x32xf32>
    %136 = arith.mulf %130, %18 : vector<16x32xf32>
    %137 = arith.mulf %135, %19 : vector<16x32xf32>
    %138 = arith.addf %136, %137 : vector<16x32xf32>
    %cst_37 = arith.constant 0.176776692 : f32
    %139 = vector.broadcast %cst_37 : f32 to vector<16x32xf32>
    %140 = arith.mulf %138, %139 : vector<16x32xf32>
    %141 = arith.truncf %140 : vector<16x32xf32> to vector<16x32xbf16>
    %142 = arith.truncf %39 : vector<16x32xf32> to vector<16x32xbf16>
    %cst_38 = arith.constant dense<0.000000e+00> : vector<16x16xf32>
    %143 = tpu.matmul %141, %142, %cst_38 {dimension_numbers = #tpu.dot_dimension_numbers<[1], [1], [0], [0], [0, 0, 1, 0], [], []>} : vector<16x32xbf16>, vector<16x32xbf16>, vector<16x16xf32> -> vector<16x16xf32>
    %cst_39 = arith.constant -1.000000e+30 : f32
    %144 = vector.broadcast %cst_39 : f32 to vector<16x16xf32>
    %145 = arith.select %42, %143, %144 : vector<16x16xi1>, vector<16x16xf32>
    %cst_40 = arith.constant dense<0xFF800000> : vector<16xf32>
    %146 = vector.multi_reduction <maximumf>, %145, %cst_40 [1] : vector<16x16xf32> to vector<16xf32>
    %147 = vector.shape_cast %146 : vector<16xf32> to vector<16x1xf32>
    %148 = vector.broadcast %147 : vector<16x1xf32> to vector<16x16xf32>
    %149 = arith.subf %145, %148 : vector<16x16xf32>
    %150 = math.exp %149 : vector<16x16xf32>
    %cst_41 = arith.constant dense<0.000000e+00> : vector<16xf32>
    %151 = vector.multi_reduction <add>, %150, %cst_41 [1] : vector<16x16xf32> to vector<16xf32>
    %152 = vector.shape_cast %151 : vector<16xf32> to vector<16x1xf32>
    %153 = arith.truncf %150 : vector<16x16xf32> to vector<16x16xbf16>
    %154 = arith.truncf %31 : vector<16x32xf32> to vector<16x32xbf16>
    %cst_42 = arith.constant dense<0.000000e+00> : vector<16x32xf32>
    %155 = tpu.matmul %153, %154, %cst_42 {dimension_numbers = #tpu.dot_dimension_numbers<[1], [0], [0], [1], [0, 0, 1, 1], [], []>} : vector<16x16xbf16>, vector<16x32xbf16>, vector<16x32xf32> -> vector<16x32xf32>
    %156 = tpu.reciprocal %152 {approx = true} : vector<16x1xf32> -> vector<16x1xf32>
    %157 = vector.broadcast %156 : vector<16x1xf32> to vector<16x32xf32>
    %158 = arith.mulf %155, %157 : vector<16x32xf32>
    %159 = tpu.concatenate %71, %100, %129, %158 in 1 : vector<16x32xf32>, vector<16x32xf32>, vector<16x32xf32>, vector<16x32xf32> -> vector<16x128xf32>
    %c0_43 = arith.constant 0 : index
    %c0_44 = arith.constant 0 : index
    %160 = vector.load %arg5[%c0_43, %c0_44] : memref<128x128xbf16, #tpu.memory_space<vmem>>, vector<128x128xbf16>
    %161 = arith.truncf %159 : vector<16x128xf32> to vector<16x128xbf16>
    %cst_45 = arith.constant dense<0.000000e+00> : vector<16x128xf32>
    %162 = tpu.matmul %161, %160, %cst_45 {dimension_numbers = #tpu.dot_dimension_numbers<[1], [0], [0], [1], [0, 0, 1, 1], [], []>} : vector<16x128xbf16>, vector<128x128xbf16>, vector<16x128xf32> -> vector<16x128xf32>
    %163 = arith.addf %1, %162 : vector<16x128xf32>
    %164 = arith.mulf %163, %163 : vector<16x128xf32>
    %cst_46 = arith.constant dense<0.000000e+00> : vector<16xf32>
    %165 = vector.multi_reduction <add>, %164, %cst_46 [1] : vector<16x128xf32> to vector<16xf32>
    %166 = vector.shape_cast %165 : vector<16xf32> to vector<16x1xf32>
    %cst_47 = arith.constant 1.280000e+02 : f32
    %167 = vector.broadcast %cst_47 : f32 to vector<16x1xf32>
    %168 = arith.divf %166, %167 : vector<16x1xf32>
    %cst_48 = arith.constant 9.99999997E-7 : f32
    %169 = vector.broadcast %cst_48 : f32 to vector<16x1xf32>
    %170 = arith.addf %168, %169 : vector<16x1xf32>
    %171 = math.rsqrt %170 : vector<16x1xf32>
    %172 = vector.broadcast %171 : vector<16x1xf32> to vector<16x128xf32>
    %173 = arith.mulf %163, %172 : vector<16x128xf32>
    %c0_49 = arith.constant 0 : index
    %c0_50 = arith.constant 0 : index
    %174 = vector.load %arg3[%c0_49, %c0_50] : memref<1x128xf32, #tpu.memory_space<vmem>>, vector<1x128xf32>
    %175 = vector.broadcast %174 : vector<1x128xf32> to vector<16x128xf32>
    %176 = arith.mulf %173, %175 : vector<16x128xf32>
    %c0_51 = arith.constant 0 : index
    %c0_52 = arith.constant 0 : index
    %177 = vector.load %arg6[%c0_51, %c0_52] : memref<128x512xbf16, #tpu.memory_space<vmem>>, vector<128x512xbf16>
    %178 = arith.truncf %176 : vector<16x128xf32> to vector<16x128xbf16>
    %cst_53 = arith.constant dense<0.000000e+00> : vector<16x512xf32>
    %179 = tpu.matmul %178, %177, %cst_53 {dimension_numbers = #tpu.dot_dimension_numbers<[1], [0], [0], [1], [0, 0, 1, 1], [], []>} : vector<16x128xbf16>, vector<128x512xbf16>, vector<16x512xf32> -> vector<16x512xf32>
    %180 = vector.extract_strided_slice %179 {offsets = [0, 0], sizes = [16, 256], strides = [1, 1]} : vector<16x512xf32> to vector<16x256xf32>
    %181 = vector.extract_strided_slice %179 {offsets = [0, 256], sizes = [16, 256], strides = [1, 1]} : vector<16x512xf32> to vector<16x256xf32>
    %182 = arith.negf %180 : vector<16x256xf32>
    %183 = math.exp %182 : vector<16x256xf32>
    %cst_54 = arith.constant 1.000000e+00 : f32
    %184 = vector.broadcast %cst_54 : f32 to vector<16x256xf32>
    %185 = arith.addf %184, %183 : vector<16x256xf32>
    %186 = arith.divf %184, %185 : vector<16x256xf32>
    %187 = arith.mulf %180, %186 : vector<16x256xf32>
    %188 = arith.mulf %187, %181 : vector<16x256xf32>
    %c0_55 = arith.constant 0 : index
    %c0_56 = arith.constant 0 : index
    %189 = vector.load %arg7[%c0_55, %c0_56] : memref<256x128xbf16, #tpu.memory_space<vmem>>, vector<256x128xbf16>
    %190 = arith.truncf %188 : vector<16x256xf32> to vector<16x256xbf16>
    %cst_57 = arith.constant dense<0.000000e+00> : vector<16x128xf32>
    %191 = tpu.matmul %190, %189, %cst_57 {dimension_numbers = #tpu.dot_dimension_numbers<[1], [0], [0], [1], [0, 0, 1, 1], [], []>} : vector<16x256xbf16>, vector<256x128xbf16>, vector<16x128xf32> -> vector<16x128xf32>
    %192 = arith.addf %163, %191 : vector<16x128xf32>
    %c0_58 = arith.constant 0 : index
    %c0_59 = arith.constant 0 : index
    %c0_60 = arith.constant 0 : index
    %193 = vector.load %arg10[%c0_58, %c0_59, %c0_60] : memref<1x16x128xf32, #tpu.memory_space<vmem>>, vector<1x16x128xf32>
    %194 = vector.shape_cast %193 : vector<1x16x128xf32> to vector<16x128xf32>
    %195 = vector.shape_cast %192 : vector<16x128xf32> to vector<1x16x128xf32>
    tpu.vector_store %arg10[%c0_58, %c0_59, %c0_60], %195 {strides = array<i32>} : memref<1x16x128xf32, #tpu.memory_space<vmem>>, vector<1x16x128xf32>,
    return
  }
  func.func @transform_0(%arg0: i32) -> (i32, i32, i32) {
    %c0_i32 = arith.constant 0 : i32
    %c0_i32_0 = arith.constant 0 : i32
    %c0_i32_1 = arith.constant 0 : i32
    return %arg0, %c0_i32, %c0_i32_0 : i32, i32, i32
  }
  func.func @transform_1(%arg0: i32) -> (i32, i32) {
    %c0_i32 = arith.constant 0 : i32
    %c0_i32_0 = arith.constant 0 : i32
    %c0_i32_1 = arith.constant 0 : i32
    return %c0_i32, %c0_i32_0 : i32, i32
  }
  func.func @transform_2(%arg0: i32) -> (i32, i32) {
    %c0_i32 = arith.constant 0 : i32
    %c0_i32_0 = arith.constant 0 : i32
    %c0_i32_1 = arith.constant 0 : i32
    return %c0_i32, %c0_i32_0 : i32, i32
  }
  func.func @transform_3(%arg0: i32) -> (i32, i32) {
    %c0_i32 = arith.constant 0 : i32
    %c0_i32_0 = arith.constant 0 : i32
    %c0_i32_1 = arith.constant 0 : i32
    return %c0_i32, %c0_i32_0 : i32, i32
  }
  func.func @transform_4(%arg0: i32) -> (i32, i32) {
    %c0_i32 = arith.constant 0 : i32
    %c0_i32_0 = arith.constant 0 : i32
    %c0_i32_1 = arith.constant 0 : i32
    return %c0_i32, %c0_i32_0 : i32, i32
  }
  func.func @transform_5(%arg0: i32) -> (i32, i32) {
    %c0_i32 = arith.constant 0 : i32
    %c0_i32_0 = arith.constant 0 : i32
    %c0_i32_1 = arith.constant 0 : i32
    return %c0_i32, %c0_i32_0 : i32, i32
  }
  func.func @transform_6(%arg0: i32) -> (i32, i32) {
    %c0_i32 = arith.constant 0 : i32
    %c0_i32_0 = arith.constant 0 : i32
    %c0_i32_1 = arith.constant 0 : i32
    return %c0_i32, %c0_i32_0 : i32, i32
  }
  func.func @transform_7(%arg0: i32) -> (i32, i32) {
    %c0_i32 = arith.constant 0 : i32
    %c0_i32_0 = arith.constant 0 : i32
    %c0_i32_1 = arith.constant 0 : i32
    return %c0_i32, %c0_i32_0 : i32, i32
  }
  func.func @transform_8(%arg0: i32) -> (i32, i32) {
    %c0_i32 = arith.constant 0 : i32
    %c0_i32_0 = arith.constant 0 : i32
    %c0_i32_1 = arith.constant 0 : i32
    return %c0_i32, %c0_i32_0 : i32, i32
  }
  func.func @transform_9(%arg0: i32) -> (i32, i32, i32) {
    %c0_i32 = arith.constant 0 : i32
    %c0_i32_0 = arith.constant 0 : i32
    %c0_i32_1 = arith.constant 0 : i32
    return %arg0, %c0_i32, %c0_i32_0 : i32, i32, i32
  }
}

module attributes {stable_mosaic.version = 11 : i64} {
  func.func @_layer_kernel(%arg0: i32, %arg1: memref<1x16x128xf32, #tpu.memory_space<vmem>>, %arg2: memref<1x128xf32, #tpu.memory_space<vmem>>, %arg3: memref<1x128xf32, #tpu.memory_space<vmem>>, %arg4: memref<128x256xbf16, #tpu.memory_space<vmem>>, %arg5: memref<128x128xbf16, #tpu.memory_space<vmem>>, %arg6: memref<128x512xbf16, #tpu.memory_space<vmem>>, %arg7: memref<256x128xbf16, #tpu.memory_space<vmem>>, %arg8: memref<16x32xf32, #tpu.memory_space<vmem>>, %arg9: memref<16x32xf32, #tpu.memory_space<vmem>>, %arg10: memref<1x16x128xf32, #tpu.memory_space<vmem>>) attributes {dimension_semantics = [#tpu.dimension_semantics<parallel>], iteration_bounds = array<i64: 2>, scalar_prefetch = 0 : i64, scratch_operands = 0 : i64, tpu.core_type = #tpu.core_type<tc>, window_params = [{transform_indices = @transform_0, window_bounds = array<i64: 1, 16, 128>}, {pipeline_mode = #tpu.pipeline_mode<synchronous>, transform_indices = @transform_1, window_bounds = array<i64: 1, 128>}, {pipeline_mode = #tpu.pipeline_mode<synchronous>, transform_indices = @transform_2, window_bounds = array<i64: 1, 128>}, {pipeline_mode = #tpu.pipeline_mode<synchronous>, transform_indices = @transform_3, window_bounds = array<i64: 128, 256>}, {pipeline_mode = #tpu.pipeline_mode<synchronous>, transform_indices = @transform_4, window_bounds = array<i64: 128, 128>}, {pipeline_mode = #tpu.pipeline_mode<synchronous>, transform_indices = @transform_5, window_bounds = array<i64: 128, 512>}, {pipeline_mode = #tpu.pipeline_mode<synchronous>, transform_indices = @transform_6, window_bounds = array<i64: 256, 128>}, {pipeline_mode = #tpu.pipeline_mode<synchronous>, transform_indices = @transform_7, window_bounds = array<i64: 16, 32>}, {pipeline_mode = #tpu.pipeline_mode<synchronous>, transform_indices = @transform_8, window_bounds = array<i64: 16, 32>}, {transform_indices = @transform_9, window_bounds = array<i64: 1, 16, 128>}]} {
    %c0 = arith.constant 0 : index
    %c0_0 = arith.constant 0 : index
    %c0_1 = arith.constant 0 : index
    %0 = vector.load %arg1[%c0, %c0_0, %c0_1] : memref<1x16x128xf32, #tpu.memory_space<vmem>>, vector<1x16x128xf32>
    %1 = vector.shape_cast %0 : vector<1x16x128xf32> to vector<16x128xf32>
    %2 = arith.mulf %1, %1 : vector<16x128xf32>
    %cst = arith.constant dense<0.000000e+00> : vector<16xf32>
    %3 = vector.multi_reduction <add>, %2, %cst [1] : vector<16x128xf32> to vector<16xf32>
    %4 = vector.shape_cast %3 : vector<16xf32> to vector<16x1xf32>
    %cst_2 = arith.constant 1.280000e+02 : f32
    %5 = vector.broadcast %cst_2 : f32 to vector<16x1xf32>
    %6 = arith.divf %4, %5 : vector<16x1xf32>
    %cst_3 = arith.constant 9.99999997E-7 : f32
    %7 = vector.broadcast %cst_3 : f32 to vector<16x1xf32>
    %8 = arith.addf %6, %7 : vector<16x1xf32>
    %9 = math.rsqrt %8 : vector<16x1xf32>
    %10 = vector.broadcast %9 : vector<16x1xf32> to vector<16x128xf32>
    %11 = arith.mulf %1, %10 : vector<16x128xf32>
    %c0_4 = arith.constant 0 : index
    %c0_5 = arith.constant 0 : index
    %12 = vector.load %arg2[%c0_4, %c0_5] : memref<1x128xf32, #tpu.memory_space<vmem>>, vector<1x128xf32>
    %13 = vector.broadcast %12 : vector<1x128xf32> to vector<16x128xf32>
    %14 = arith.mulf %11, %13 : vector<16x128xf32>
    %c0_6 = arith.constant 0 : index
    %c0_7 = arith.constant 0 : index
    %15 = vector.load %arg4[%c0_6, %c0_7] : memref<128x256xbf16, #tpu.memory_space<vmem>>, vector<128x256xbf16>
    %16 = arith.truncf %14 : vector<16x128xf32> to vector<16x128xbf16>
    %cst_8 = arith.constant dense<0.000000e+00> : vector<16x256xf32>
    %17 = tpu.matmul %16, %15, %cst_8 {dimension_numbers = #tpu.dot_dimension_numbers<[1], [0], [0], [1], [0, 0, 1, 1], [], []>} : vector<16x128xbf16>, vector<128x256xbf16>, vector<16x256xf32> -> vector<16x256xf32>
    %c0_9 = arith.constant 0 : index
    %c0_10 = arith.constant 0 : index
    %18 = vector.load %arg8[%c0_9, %c0_10] : memref<16x32xf32, #tpu.memory_space<vmem>>, vector<16x32xf32>
    %c0_11 = arith.constant 0 : index
    %c0_12 = arith.constant 0 : index
    %19 = vector.load %arg9[%c0_11, %c0_12] : memref<16x32xf32, #tpu.memory_space<vmem>>, vector<16x32xf32>
    %20 = vector.extract_strided_slice %17 {offsets = [0, 128], sizes = [16, 32], strides = [1, 1]} : vector<16x256xf32> to vector<16x32xf32>
    %21 = vector.extract_strided_slice %17 {offsets = [0, 192], sizes = [16, 32], strides = [1, 1]} : vector<16x256xf32> to vector<16x32xf32>
    %22 = vector.extract_strided_slice %20 {offsets = [0, 0], sizes = [16, 16], strides = [1, 1]} : vector<16x32xf32> to vector<16x16xf32>
    %23 = vector.extract_strided_slice %20 {offsets = [0, 16], sizes = [16, 16], strides = [1, 1]} : vector<16x32xf32> to vector<16x16xf32>
    %cst_13 = arith.constant 0.000000e+00 : f32
    %24 = vector.broadcast %cst_13 : f32 to vector<16x16xf32>
    %25 = arith.subf %24, %23 : vector<16x16xf32>
    %26 = tpu.concatenate %25, %22 in 1 : vector<16x16xf32>, vector<16x16xf32> -> vector<16x32xf32>
    %27 = arith.mulf %20, %18 : vector<16x32xf32>
    %28 = arith.mulf %26, %19 : vector<16x32xf32>
    %29 = arith.addf %27, %28 : vector<16x32xf32>
    %30 = vector.extract_strided_slice %17 {offsets = [0, 160], sizes = [16, 32], strides = [1, 1]} : vector<16x256xf32> to vector<16x32xf32>
    %31 = vector.extract_strided_slice %17 {offsets = [0, 224], sizes = [16, 32], strides = [1, 1]} : vector<16x256xf32> to vector<16x32xf32>
    %32 = vector.extract_strided_slice %30 {offsets = [0, 0], sizes = [16, 16], strides = [1, 1]} : vector<16x32xf32> to vector<16x16xf32>
    %33 = vector.extract_strided_slice %30 {offsets = [0, 16], sizes = [16, 16], strides = [1, 1]} : vector<16x32xf32> to vector<16x16xf32>
    %cst_14 = arith.constant 0.000000e+00 : f32
    %34 = vector.broadcast %cst_14 : f32 to vector<16x16xf32>
    %35 = arith.subf %34, %33 : vector<16x16xf32>
    %36 = tpu.concatenate %35, %32 in 1 : vector<16x16xf32>, vector<16x16xf32> -> vector<16x32xf32>
    %37 = arith.mulf %30, %18 : vector<16x32xf32>
    %38 = arith.mulf %36, %19 : vector<16x32xf32>
    %39 = arith.addf %37, %38 : vector<16x32xf32>
    %40 = tpu.iota {dimensions = array<i32: 0>} : vector<16x16xi32>
    %41 = tpu.iota {dimensions = array<i32: 1>} : vector<16x16xi32>
    %42 = arith.cmpi sle, %41, %40 : vector<16x16xi32>
    %43 = vector.extract_strided_slice %17 {offsets = [0, 0], sizes = [16, 32], strides = [1, 1]} : vector<16x256xf32> to vector<16x32xf32>
    %44 = vector.extract_strided_slice %43 {offsets = [0, 0], sizes = [16, 16], strides = [1, 1]} : vector<16x32xf32> to vector<16x16xf32>
    %45 = vector.extract_strided_slice %43 {offsets = [0, 16], sizes = [16, 16], strides = [1, 1]} : vector<16x32xf32> to vector<16x16xf32>
    %cst_15 = arith.constant 0.000000e+00 : f32
    %46 = vector.broadcast %cst_15 : f32 to vector<16x16xf32>
    %47 = arith.subf %46, %45 : vector<16x16xf32>
    %48 = tpu.concatenate %47, %44 in 1 : vector<16x16xf32>, vector<16x16xf32> -> vector<16x32xf32>
    %49 = arith.mulf %43, %18 : vector<16x32xf32>
    %50 = arith.mulf %48, %19 : vector<16x32xf32>
    %51 = arith.addf %49, %50 : vector<16x32xf32>
    %cst_16 = arith.constant 0.176776692 : f32
    %52 = vector.broadcast %cst_16 : f32 to vector<16x32xf32>
    %53 = arith.mulf %51, %52 : vector<16x32xf32>
    %54 = arith.truncf %53 : vector<16x32xf32> to vector<16x32xbf16>
    %55 = arith.truncf %29 : vector<16x32xf32> to vector<16x32xbf16>
    %cst_17 = arith.constant dense<0.000000e+00> : vector<16x16xf32>
    %56 = tpu.matmul %54, %55, %cst_17 {dimension_numbers = #tpu.dot_dimension_numbers<[1], [1], [0], [0], [0, 0, 1, 0], [], []>} : vector<16x32xbf16>, vector<16x32xbf16>, vector<16x16xf32> -> vector<16x16xf32>
    %cst_18 = arith.constant -1.000000e+30 : f32
    %57 = vector.broadcast %cst_18 : f32 to vector<16x16xf32>
    %58 = arith.select %42, %56, %57 : vector<16x16xi1>, vector<16x16xf32>
    %cst_19 = arith.constant dense<0xFF800000> : vector<16xf32>
    %59 = vector.multi_reduction <maximumf>, %58, %cst_19 [1] : vector<16x16xf32> to vector<16xf32>
    %60 = vector.shape_cast %59 : vector<16xf32> to vector<16x1xf32>
    %61 = vector.broadcast %60 : vector<16x1xf32> to vector<16x16xf32>
    %62 = arith.subf %58, %61 : vector<16x16xf32>
    %63 = math.exp %62 : vector<16x16xf32>
    %cst_20 = arith.constant dense<0.000000e+00> : vector<16xf32>
    %64 = vector.multi_reduction <add>, %63, %cst_20 [1] : vector<16x16xf32> to vector<16xf32>
    %65 = vector.shape_cast %64 : vector<16xf32> to vector<16x1xf32>
    %66 = arith.truncf %63 : vector<16x16xf32> to vector<16x16xbf16>
    %67 = arith.truncf %21 : vector<16x32xf32> to vector<16x32xbf16>
    %cst_21 = arith.constant dense<0.000000e+00> : vector<16x32xf32>
    %68 = tpu.matmul %66, %67, %cst_21 {dimension_numbers = #tpu.dot_dimension_numbers<[1], [0], [0], [1], [0, 0, 1, 1], [], []>} : vector<16x16xbf16>, vector<16x32xbf16>, vector<16x32xf32> -> vector<16x32xf32>
    %69 = tpu.reciprocal %65 {approx = true} : vector<16x1xf32> -> vector<16x1xf32>
    %70 = vector.broadcast %69 : vector<16x1xf32> to vector<16x32xf32>
    %71 = arith.mulf %68, %70 : vector<16x32xf32>
    %72 = vector.extract_strided_slice %17 {offsets = [0, 32], sizes = [16, 32], strides = [1, 1]} : vector<16x256xf32> to vector<16x32xf32>
    %73 = vector.extract_strided_slice %72 {offsets = [0, 0], sizes = [16, 16], strides = [1, 1]} : vector<16x32xf32> to vector<16x16xf32>
    %74 = vector.extract_strided_slice %72 {offsets = [0, 16], sizes = [16, 16], strides = [1, 1]} : vector<16x32xf32> to vector<16x16xf32>
    %cst_22 = arith.constant 0.000000e+00 : f32
    %75 = vector.broadcast %cst_22 : f32 to vector<16x16xf32>
    %76 = arith.subf %75, %74 : vector<16x16xf32>
    %77 = tpu.concatenate %76, %73 in 1 : vector<16x16xf32>, vector<16x16xf32> -> vector<16x32xf32>
    %78 = arith.mulf %72, %18 : vector<16x32xf32>
    %79 = arith.mulf %77, %19 : vector<16x32xf32>
    %80 = arith.addf %78, %79 : vector<16x32xf32>
    %cst_23 = arith.constant 0.176776692 : f32
    %81 = vector.broadcast %cst_23 : f32 to vector<16x32xf32>
    %82 = arith.mulf %80, %81 : vector<16x32xf32>
    %83 = arith.truncf %82 : vector<16x32xf32> to vector<16x32xbf16>
    %84 = arith.truncf %29 : vector<16x32xf32> to vector<16x32xbf16>
    %cst_24 = arith.constant dense<0.000000e+00> : vector<16x16xf32>
    %85 = tpu.matmul %83, %84, %cst_24 {dimension_numbers = #tpu.dot_dimension_numbers<[1], [1], [0], [0], [0, 0, 1, 0], [], []>} : vector<16x32xbf16>, vector<16x32xbf16>, vector<16x16xf32> -> vector<16x16xf32>
    %cst_25 = arith.constant -1.000000e+30 : f32
    %86 = vector.broadcast %cst_25 : f32 to vector<16x16xf32>
    %87 = arith.select %42, %85, %86 : vector<16x16xi1>, vector<16x16xf32>
    %cst_26 = arith.constant dense<0xFF800000> : vector<16xf32>
    %88 = vector.multi_reduction <maximumf>, %87, %cst_26 [1] : vector<16x16xf32> to vector<16xf32>
    %89 = vector.shape_cast %88 : vector<16xf32> to vector<16x1xf32>
    %90 = vector.broadcast %89 : vector<16x1xf32> to vector<16x16xf32>
    %91 = arith.subf %87, %90 : vector<16x16xf32>
    %92 = math.exp %91 : vector<16x16xf32>
    %cst_27 = arith.constant dense<0.000000e+00> : vector<16xf32>
    %93 = vector.multi_reduction <add>, %92, %cst_27 [1] : vector<16x16xf32> to vector<16xf32>
    %94 = vector.shape_cast %93 : vector<16xf32> to vector<16x1xf32>
    %95 = arith.truncf %92 : vector<16x16xf32> to vector<16x16xbf16>
    %96 = arith.truncf %21 : vector<16x32xf32> to vector<16x32xbf16>
    %cst_28 = arith.constant dense<0.000000e+00> : vector<16x32xf32>
    %97 = tpu.matmul %95, %96, %cst_28 {dimension_numbers = #tpu.dot_dimension_numbers<[1], [0], [0], [1], [0, 0, 1, 1], [], []>} : vector<16x16xbf16>, vector<16x32xbf16>, vector<16x32xf32> -> vector<16x32xf32>
    %98 = tpu.reciprocal %94 {approx = true} : vector<16x1xf32> -> vector<16x1xf32>
    %99 = vector.broadcast %98 : vector<16x1xf32> to vector<16x32xf32>
    %100 = arith.mulf %97, %99 : vector<16x32xf32>
    %101 = vector.extract_strided_slice %17 {offsets = [0, 64], sizes = [16, 32], strides = [1, 1]} : vector<16x256xf32> to vector<16x32xf32>
    %102 = vector.extract_strided_slice %101 {offsets = [0, 0], sizes = [16, 16], strides = [1, 1]} : vector<16x32xf32> to vector<16x16xf32>
    %103 = vector.extract_strided_slice %101 {offsets = [0, 16], sizes = [16, 16], strides = [1, 1]} : vector<16x32xf32> to vector<16x16xf32>
    %cst_29 = arith.constant 0.000000e+00 : f32
    %104 = vector.broadcast %cst_29 : f32 to vector<16x16xf32>
    %105 = arith.subf %104, %103 : vector<16x16xf32>
    %106 = tpu.concatenate %105, %102 in 1 : vector<16x16xf32>, vector<16x16xf32> -> vector<16x32xf32>
    %107 = arith.mulf %101, %18 : vector<16x32xf32>
    %108 = arith.mulf %106, %19 : vector<16x32xf32>
    %109 = arith.addf %107, %108 : vector<16x32xf32>
    %cst_30 = arith.constant 0.176776692 : f32
    %110 = vector.broadcast %cst_30 : f32 to vector<16x32xf32>
    %111 = arith.mulf %109, %110 : vector<16x32xf32>
    %112 = arith.truncf %111 : vector<16x32xf32> to vector<16x32xbf16>
    %113 = arith.truncf %39 : vector<16x32xf32> to vector<16x32xbf16>
    %cst_31 = arith.constant dense<0.000000e+00> : vector<16x16xf32>
    %114 = tpu.matmul %112, %113, %cst_31 {dimension_numbers = #tpu.dot_dimension_numbers<[1], [1], [0], [0], [0, 0, 1, 0], [], []>} : vector<16x32xbf16>, vector<16x32xbf16>, vector<16x16xf32> -> vector<16x16xf32>
    %cst_32 = arith.constant -1.000000e+30 : f32
    %115 = vector.broadcast %cst_32 : f32 to vector<16x16xf32>
    %116 = arith.select %42, %114, %115 : vector<16x16xi1>, vector<16x16xf32>
    %cst_33 = arith.constant dense<0xFF800000> : vector<16xf32>
    %117 = vector.multi_reduction <maximumf>, %116, %cst_33 [1] : vector<16x16xf32> to vector<16xf32>
    %118 = vector.shape_cast %117 : vector<16xf32> to vector<16x1xf32>
    %119 = vector.broadcast %118 : vector<16x1xf32> to vector<16x16xf32>
    %120 = arith.subf %116, %119 : vector<16x16xf32>
    %121 = math.exp %120 : vector<16x16xf32>
    %cst_34 = arith.constant dense<0.000000e+00> : vector<16xf32>
    %122 = vector.multi_reduction <add>, %121, %cst_34 [1] : vector<16x16xf32> to vector<16xf32>
    %123 = vector.shape_cast %122 : vector<16xf32> to vector<16x1xf32>
    %124 = arith.truncf %121 : vector<16x16xf32> to vector<16x16xbf16>
    %125 = arith.truncf %31 : vector<16x32xf32> to vector<16x32xbf16>
    %cst_35 = arith.constant dense<0.000000e+00> : vector<16x32xf32>
    %126 = tpu.matmul %124, %125, %cst_35 {dimension_numbers = #tpu.dot_dimension_numbers<[1], [0], [0], [1], [0, 0, 1, 1], [], []>} : vector<16x16xbf16>, vector<16x32xbf16>, vector<16x32xf32> -> vector<16x32xf32>
    %127 = tpu.reciprocal %123 {approx = true} : vector<16x1xf32> -> vector<16x1xf32>
    %128 = vector.broadcast %127 : vector<16x1xf32> to vector<16x32xf32>
    %129 = arith.mulf %126, %128 : vector<16x32xf32>
    %130 = vector.extract_strided_slice %17 {offsets = [0, 96], sizes = [16, 32], strides = [1, 1]} : vector<16x256xf32> to vector<16x32xf32>
    %131 = vector.extract_strided_slice %130 {offsets = [0, 0], sizes = [16, 16], strides = [1, 1]} : vector<16x32xf32> to vector<16x16xf32>
    %132 = vector.extract_strided_slice %130 {offsets = [0, 16], sizes = [16, 16], strides = [1, 1]} : vector<16x32xf32> to vector<16x16xf32>
    %cst_36 = arith.constant 0.000000e+00 : f32
    %133 = vector.broadcast %cst_36 : f32 to vector<16x16xf32>
    %134 = arith.subf %133, %132 : vector<16x16xf32>
    %135 = tpu.concatenate %134, %131 in 1 : vector<16x16xf32>, vector<16x16xf32> -> vector<16x32xf32>
    %136 = arith.mulf %130, %18 : vector<16x32xf32>
    %137 = arith.mulf %135, %19 : vector<16x32xf32>
    %138 = arith.addf %136, %137 : vector<16x32xf32>
    %cst_37 = arith.constant 0.176776692 : f32
    %139 = vector.broadcast %cst_37 : f32 to vector<16x32xf32>
    %140 = arith.mulf %138, %139 : vector<16x32xf32>
    %141 = arith.truncf %140 : vector<16x32xf32> to vector<16x32xbf16>
    %142 = arith.truncf %39 : vector<16x32xf32> to vector<16x32xbf16>
    %cst_38 = arith.constant dense<0.000000e+00> : vector<16x16xf32>
    %143 = tpu.matmul %141, %142, %cst_38 {dimension_numbers = #tpu.dot_dimension_numbers<[1], [1], [0], [0], [0, 0, 1, 0], [], []>} : vector<16x32xbf16>, vector<16x32xbf16>, vector<16x16xf32> -> vector<16x16xf32>
    %cst_39 = arith.constant -1.000000e+30 : f32
    %144 = vector.broadcast %cst_39 : f32 to vector<16x16xf32>
    %145 = arith.select %42, %143, %144 : vector<16x16xi1>, vector<16x16xf32>
    %cst_40 = arith.constant dense<0xFF800000> : vector<16xf32>
    %146 = vector.multi_reduction <maximumf>, %145, %cst_40 [1] : vector<16x16xf32> to vector<16xf32>
    %147 = vector.shape_cast %146 : vector<16xf32> to vector<16x1xf32>
    %148 = vector.broadcast %147 : vector<16x1xf32> to vector<16x16xf32>
    %149 = arith.subf %145, %148 : vector<16x16xf32>
    %150 = math.exp %149 : vector<16x16xf32>
    %cst_41 = arith.constant dense<0.000000e+00> : vector<16xf32>
    %151 = vector.multi_reduction <add>, %150, %cst_41 [1] : vector<16x16xf32> to vector<16xf32>
    %152 = vector.shape_cast %151 : vector<16xf32> to vector<16x1xf32>
    %153 = arith.truncf %150 : vector<16x16xf32> to vector<16x16xbf16>
    %154 = arith.truncf %31 : vector<16x32xf32> to vector<16x32xbf16>
    %cst_42 = arith.constant dense<0.000000e+00> : vector<16x32xf32>
    %155 = tpu.matmul %153, %154, %cst_42 {dimension_numbers = #tpu.dot_dimension_numbers<[1], [0], [0], [1], [0, 0, 1, 1], [], []>} : vector<16x16xbf16>, vector<16x32xbf16>, vector<16x32xf32> -> vector<16x32xf32>
    %156 = tpu.reciprocal %152 {approx = true} : vector<16x1xf32> -> vector<16x1xf32>
    %157 = vector.broadcast %156 : vector<16x1xf32> to vector<16x32xf32>
    %158 = arith.mulf %155, %157 : vector<16x32xf32>
    %159 = tpu.concatenate %71, %100, %129, %158 in 1 : vector<16x32xf32>, vector<16x32xf32>, vector<16x32xf32>, vector<16x32xf32> -> vector<16x128xf32>
    %c0_43 = arith.constant 0 : index
    %c0_44 = arith.constant 0 : index
    %160 = vector.load %arg5[%c0_43, %c0_44] : memref<128x128xbf16, #tpu.memory_space<vmem>>, vector<128x128xbf16>
    %161 = arith.truncf %159 : vector<16x128xf32> to vector<16x128xbf16>
    %cst_45 = arith.constant dense<0.000000e+00> : vector<16x128xf32>
    %162 = tpu.matmul %161, %160, %cst_45 {dimension_numbers = #tpu.dot_dimension_numbers<[1], [0], [0], [1], [0, 0, 1, 1], [], []>} : vector<16x128xbf16>, vector<128x128xbf16>, vector<16x128xf32> -> vector<16x128xf32>
    %163 = arith.addf %1, %162 : vector<16x128xf32>
    %164 = arith.mulf %163, %163 : vector<16x128xf32>
    %cst_46 = arith.constant dense<0.000000e+00> : vector<16xf32>
    %165 = vector.multi_reduction <add>, %164, %cst_46 [1] : vector<16x128xf32> to vector<16xf32>
    %166 = vector.shape_cast %165 : vector<16xf32> to vector<16x1xf32>
    %cst_47 = arith.constant 1.280000e+02 : f32
    %167 = vector.broadcast %cst_47 : f32 to vector<16x1xf32>
    %168 = arith.divf %166, %167 : vector<16x1xf32>
    %cst_48 = arith.constant 9.99999997E-7 : f32
    %169 = vector.broadcast %cst_48 : f32 to vector<16x1xf32>
    %170 = arith.addf %168, %169 : vector<16x1xf32>
    %171 = math.rsqrt %170 : vector<16x1xf32>
    %172 = vector.broadcast %171 : vector<16x1xf32> to vector<16x128xf32>
    %173 = arith.mulf %163, %172 : vector<16x128xf32>
    %c0_49 = arith.constant 0 : index
    %c0_50 = arith.constant 0 : index
    %174 = vector.load %arg3[%c0_49, %c0_50] : memref<1x128xf32, #tpu.memory_space<vmem>>, vector<1x128xf32>
    %175 = vector.broadcast %174 : vector<1x128xf32> to vector<16x128xf32>
    %176 = arith.mulf %173, %175 : vector<16x128xf32>
    %c0_51 = arith.constant 0 : index
    %c0_52 = arith.constant 0 : index
    %177 = vector.load %arg6[%c0_51, %c0_52] : memref<128x512xbf16, #tpu.memory_space<vmem>>, vector<128x512xbf16>
    %178 = arith.truncf %176 : vector<16x128xf32> to vector<16x128xbf16>
    %cst_53 = arith.constant dense<0.000000e+00> : vector<16x512xf32>
    %179 = tpu.matmul %178, %177, %cst_53 {dimension_numbers = #tpu.dot_dimension_numbers<[1], [0], [0], [1], [0, 0, 1, 1], [], []>} : vector<16x128xbf16>, vector<128x512xbf16>, vector<16x512xf32> -> vector<16x512xf32>
    %180 = vector.extract_strided_slice %179 {offsets = [0, 0], sizes = [16, 256], strides = [1, 1]} : vector<16x512xf32> to vector<16x256xf32>
    %181 = vector.extract_strided_slice %179 {offsets = [0, 256], sizes = [16, 256], strides = [1, 1]} : vector<16x512xf32> to vector<16x256xf32>
    %182 = arith.negf %180 : vector<16x256xf32>
    %183 = math.exp %182 : vector<16x256xf32>
    %cst_54 = arith.constant 1.000000e+00 : f32
    %184 = vector.broadcast %cst_54 : f32 to vector<16x256xf32>
    %185 = arith.addf %184, %183 : vector<16x256xf32>
    %186 = arith.divf %184, %185 : vector<16x256xf32>
    %187 = arith.mulf %180, %186 : vector<16x256xf32>
    %188 = arith.mulf %187, %181 : vector<16x256xf32>
    %c0_55 = arith.constant 0 : index
    %c0_56 = arith.constant 0 : index
    %189 = vector.load %arg7[%c0_55, %c0_56] : memref<256x128xbf16, #tpu.memory_space<vmem>>, vector<256x128xbf16>
    %190 = arith.truncf %188 : vector<16x256xf32> to vector<16x256xbf16>
    %cst_57 = arith.constant dense<0.000000e+00> : vector<16x128xf32>
    %191 = tpu.matmul %190, %189, %cst_57 {dimension_numbers = #tpu.dot_dimension_numbers<[1], [0], [0], [1], [0, 0, 1, 1], [], []>} : vector<16x256xbf16>, vector<256x128xbf16>, vector<16x128xf32> -> vector<16x128xf32>
    %192 = arith.addf %163, %191 : vector<16x128xf32>
    %c0_58 = arith.constant 0 : index
    %c0_59 = arith.constant 0 : index
    %c0_60 = arith.constant 0 : index
    %193 = vector.load %arg10[%c0_58, %c0_59, %c0_60] : memref<1x16x128xf32, #tpu.memory_space<vmem>>, vector<1x16x128xf32>
    %194 = vector.shape_cast %193 : vector<1x16x128xf32> to vector<16x128xf32>
    %195 = vector.shape_cast %192 : vector<16x128xf32> to vector<1x16x128xf32>
    tpu.vector_store %arg10[%c0_58, %c0_59, %c0_60], %195 {strides = array<i32>} : memref<1x16x128xf32, #tpu.memory_space<vmem>>, vector<1x16x128xf32>,
    return
  }
  func.func @transform_0(%arg0: i32) -> (i32, i32, i32) {
    %c0_i32 = arith.constant 0 : i32
    %c0_i32_0 = arith.constant 0 : i32
    %c0_i32_1 = arith.constant 0 : i32
    return %arg0, %c0_i32, %c0_i32_0 : i32, i32, i32
  }
  func.func @transform_1(%arg0: i32) -> (i32, i32) {
    %c0_i32 = arith.constant 0 : i32
    %c0_i32_0 = arith.constant 0 : i32
    %c0_i32_1 = arith.constant 0 : i32
    return %c0_i32, %c0_i32_0 : i32, i32
  }
  func.func @transform_2(%arg0: i32) -> (i32, i32) {
    %c0_i32 = arith.constant 0 : i32
    %c0_i32_0 = arith.constant 0 : i32
    %c0_i32_1 = arith.constant 0 : i32
    return %c0_i32, %c0_i32_0 : i32, i32
  }
  func.func @transform_3(%arg0: i32) -> (i32, i32) {
    %c0_i32 = arith.constant 0 : i32
    %c0_i32_0 = arith.constant 0 : i32
    %c0_i32_1 = arith.constant 0 : i32
    return %c0_i32, %c0_i32_0 : i32, i32
  }
  func.func @transform_4(%arg0: i32) -> (i32, i32) {
    %c0_i32 = arith.constant 0 : i32
    %c0_i32_0 = arith.constant 0 : i32
    %c0_i32_1 = arith.constant 0 : i32
    return %c0_i32, %c0_i32_0 : i32, i32
  }
  func.func @transform_5(%arg0: i32) -> (i32, i32) {
    %c0_i32 = arith.constant 0 : i32
    %c0_i32_0 = arith.constant 0 : i32
    %c0_i32_1 = arith.constant 0 : i32
    return %c0_i32, %c0_i32_0 : i32, i32
  }
  func.func @transform_6(%arg0: i32) -> (i32, i32) {
    %c0_i32 = arith.constant 0 : i32
    %c0_i32_0 = arith.constant 0 : i32
    %c0_i32_1 = arith.constant 0 : i32
    return %c0_i32, %c0_i32_0 : i32, i32
  }
  func.func @transform_7(%arg0: i32) -> (i32, i32) {
    %c0_i32 = arith.constant 0 : i32
    %c0_i32_0 = arith.constant 0 : i32
    %c0_i32_1 = arith.constant 0 : i32
    return %c0_i32, %c0_i32_0 : i32, i32
  }
  func.func @transform_8(%arg0: i32) -> (i32, i32) {
    %c0_i32 = arith.constant 0 : i32
    %c0_i32_0 = arith.constant 0 : i32
    %c0_i32_1 = arith.constant 0 : i32
    return %c0_i32, %c0_i32_0 : i32, i32
  }
  func.func @transform_9(%arg0: i32) -> (i32, i32, i32) {
    %c0_i32 = arith.constant 0 : i32
    %c0_i32_0 = arith.constant 0 : i32
    %c0_i32_1 = arith.constant 0 : i32
    return %arg0, %c0_i32, %c0_i32_0 : i32, i32, i32
  }
}

</mosaic_0001>

<llo_original>
// kernel: sub.1
$region0: #{sub.1}
  %s0 = inlined_call_operand.vmem [shape: f32[2,15], index: 0, kind: input, shape index: {}]
  %s1 = inlined_call_operand.vmem [shape: f32[30], index: 1, kind: output, shape index: {}]
  $region1: #{sub.1} parent=0
    #allocation0 [shape = 'u8[4096]{0}', space=vmem, size = 0x1000, scoped, tag = 'scoped mem for output reshape']
    #allocation1 [shape = 'u8[4096]{0}', space=vmem, size = 0x1000, scoped, tag = 'scoped mem for input reshape']
    %s3 = sshll.u32 1, 2
    %s4 = ssub.s32 %s3, 1
    %v5 = vld [vmem:[%s0] sm:%s4]
    %6 = vst [vmem:[#allocation1] sm:%s4] %v5
    %v7 = vld [vmem:[#allocation1] sm:$0x1]
    %vm8 = vcmask 121856
    %9 = vst.msk [vmem:[#allocation0] sm:$0x1] %vm8, %v7
    %s10 = scalar_lea.vmem [#allocation1], 1
    %v11 = vld [vmem:[%s10] sm:$0x1]
    %12 = vrot.lane.b32.xlu0 %v11, 15
    %v13 = vpop.permute.xlu0 %12
    %vm14 = vcmask 244856
    %15 = vst.msk [vmem:[#allocation0] sm:$0x1] %vm14, %v13
    %s17 = sshll.u32 1, 1
    %s18 = ssub.s32 %s17, 1
    %v20 = vld [vmem:[#allocation0] sm:%s18]
    %s21 = sshll.u32 1, 1
    %s22 = ssub.s32 %s21, 1
    %23 = vst [vmem:[%s1] sm:%s22] %v20

// kernel: _lambda_.5
$region0: #{_lambda_.5}
  #allocation0 [shape = 'u32[]', space=smem, size = 0x4, offset = 0x4, fixed_abs, tag = 'smem constant byte address 0x4 - core index']
  #allocation1 [shape = 'u32[144,128]{1,0:T(1,128)}', space=vmem, size = 0x12000, scoped, tag = 'internal scratch']
  %s0 = inlined_call_operand.vmem [shape: f32[2,16,128], index: 0, kind: input, shape index: {}]
  %s1 = inlined_call_operand.vmem [shape: f32[1,128], index: 1, kind: input, shape index: {}]
  %s2 = inlined_call_operand.vmem [shape: bf16[128,256], index: 2, kind: input, shape index: {}]
  %s3 = inlined_call_operand.vmem [shape: f32[2,16,256], index: 3, kind: output, shape index: {}]
  %s4 = sld [smem:[#allocation0]]
  $region45: #{_lambda_.5} parent=0
    _
  %s6 = ssub.s32 1, %s4
  %s7 = scalar_select 0, %s6, %s4
  loop: start=0, step=1, limit=4
  $region2: #{_lambda_.5} parent=0 // loop_pre_header
    _
  $region3: #{_lambda_.5} parent=0 // loop_header
    %s9 = sphi 0, %s13
    %p10 = scmp.ge.s32.totalorder %s9, 4
    %s19 = sphi 0, %s21
    %s22 = sphi 0, %s19
    %s23 = sphi 0, %s22
    %s39 = sphi 0, %s23
    %s43 = sphi 0, %s43
    %s45 = sphi 0, %s43
    %s46 = sphi 0, %s45
    %s60 = sphi 0, %s46
    %s64 = sphi 0, %s64
    %s66 = sphi 0, %s64
    %s67 = sphi 0, %s66
    %s81 = sphi 0, %s67
    %s87 = sphi 0, %s89
    %s90 = sphi 0, %s87
    %s91 = sphi 0, %s90
    %s107 = sphi 0, %s91
  $region4: #{_lambda_.5} parent=0 // loop_header_branch
    %12 = sbr.rel (%p10) target = $region8
  $region5: #{_lambda_.5} parent=0 // loop_body
    %s14 = ssub.s32 %s9, 1
    %s15 = ssub.s32 %s9, 2
    %s16 = sadd.s32 %s9, 1
    %s17 = ssub.s32 %s9, %s16
    %p18 = scmp.eq.s32.totalorder %s17, 0
    %s20 = sadd.s32 %s19, 1
    %s21 = scalar_select %p18, %s19, %s20
    %p24 = pneg %p18
    %p25 = scmp.eq.s32.totalorder %s9, 1
    %p26 = por %p24, %p25
    %p27 = scmp.ne.s32.totalorder %s19, %s22
    %p28 = scmp.eq.s32.totalorder %s9, 0
    %p29 = por %p27, %p28
    %p30 = scmp.ne.s32.totalorder %s19, %s22
    %p31 = scmp.eq.s32.totalorder %s14, 1
    %p32 = por %p30, %p31
    %p33 = scmp.ne.s32.totalorder %s22, %s23
    %p34 = scmp.eq.s32.totalorder %s14, 0
    %p35 = por %p33, %p34
    %p36 = scmp.ne.s32.totalorder %s22, %s23
    %p37 = scmp.eq.s32.totalorder %s15, 1
    %p38 = por %p36, %p37
    %p40 = scmp.ne.s32.totalorder %s23, %s39
    %p41 = scmp.eq.s32.totalorder %s15, 0
    %p42 = por %p40, %p41
    %s44 = sadd.s32 %s43, 1
    %p47 = scmp.eq.s32.totalorder %s9, 1
    %p48 = scmp.ne.s32.totalorder %s43, %s45
    %p49 = scmp.eq.s32.totalorder %s9, 0
    %p50 = por %p48, %p49
    %p51 = scmp.ne.s32.totalorder %s43, %s45
    %p52 = scmp.eq.s32.totalorder %s14, 1
    %p53 = por %p51, %p52
    %p54 = scmp.ne.s32.totalorder %s45, %s46
    %p55 = scmp.eq.s32.totalorder %s14, 0
    %p56 = por %p54, %p55
    %p57 = scmp.ne.s32.totalorder %s45, %s46
    %p58 = scmp.eq.s32.totalorder %s15, 1
    %p59 = por %p57, %p58
    %p61 = scmp.ne.s32.totalorder %s46, %s60
    %p62 = scmp.eq.s32.totalorder %s15, 0
    %p63 = por %p61, %p62
    %s65 = sadd.s32 %s64, 1
    %p68 = scmp.eq.s32.totalorder %s9, 1
    %p69 = scmp.ne.s32.totalorder %s64, %s66
    %p70 = scmp.eq.s32.totalorder %s9, 0
    %p71 = por %p69, %p70
    %p72 = scmp.ne.s32.totalorder %s64, %s66
    %p73 = scmp.eq.s32.totalorder %s14, 1
    %p74 = por %p72, %p73
    %p75 = scmp.ne.s32.totalorder %s66, %s67
    %p76 = scmp.eq.s32.totalorder %s14, 0
    %p77 = por %p75, %p76
    %p78 = scmp.ne.s32.totalorder %s66, %s67
    %p79 = scmp.eq.s32.totalorder %s15, 1
    %p80 = por %p78, %p79
    %p82 = scmp.ne.s32.totalorder %s67, %s81
    %p83 = scmp.eq.s32.totalorder %s15, 0
    %p84 = por %p82, %p83
    %s85 = ssub.s32 %s9, %s16
    %p86 = scmp.eq.s32.totalorder %s85, 0
    %s88 = sadd.s32 %s87, 1
    %s89 = scalar_select %p86, %s87, %s88
    %p92 = pneg %p86
    %p93 = scmp.eq.s32.totalorder %s9, 1
    %p94 = por %p92, %p93
    %p95 = scmp.ne.s32.totalorder %s87, %s90
    %p96 = scmp.eq.s32.totalorder %s9, 0
    %p97 = por %p95, %p96
    %p98 = scmp.ne.s32.totalorder %s87, %s90
    %p99 = scmp.eq.s32.totalorder %s14, 1
    %p100 = por %p98, %p99
    %p101 = scmp.ne.s32.totalorder %s90, %s91
    %p102 = scmp.eq.s32.totalorder %s14, 0
    %p103 = por %p101, %p102
    %p104 = scmp.ne.s32.totalorder %s90, %s91
    %p105 = scmp.eq.s32.totalorder %s15, 1
    %p106 = por %p104, %p105
    %p108 = scmp.ne.s32.totalorder %s91, %s107
    %p109 = scmp.eq.s32.totalorder %s15, 0
    %p110 = por %p108, %p109
    %p111 = scmp.le.s32.totalorder 1, %s9
    %p112 = scmp.lt.s32.totalorder %s9, 3
    %p113 = pnand %p111, %p112
    %p114 = pneg %p113
    // Predicated region
    $region9: #{_lambda_.5} parent=5 // pred_check
      _
    $region10: #{_lambda_.5} parent=5 // pred_check_branch
      %116 = sbr.rel (%p113) target = $region12
    $region11: #{_lambda_.5} parent=5 // pred_region
      %s117 = ssub.s32 %s9, 1
      // Predicated region
      $region13: #{_lambda_.5} parent=11 // pred_check
        %p118 = pneg %p56
      $region14: #{_lambda_.5} parent=11 // pred_check_branch
        %120 = sbr.rel (%p118) target = $region16
      $region15: #{_lambda_.5} parent=11 // pred_region
        _
      $region16: #{_lambda_.5} parent=11 // pred_fallthru
        _
      // Predicated region
      $region17: #{_lambda_.5} parent=11 // pred_check
        %p121 = pneg %p77
      $region18: #{_lambda_.5} parent=11 // pred_check_branch
        %123 = sbr.rel (%p121) target = $region20
      $region19: #{_lambda_.5} parent=11 // pred_region
        _
      $region20: #{_lambda_.5} parent=11 // pred_fallthru
        _
    $region12: #{_lambda_.5} parent=5 // pred_fallthru
      _
    %p124 = scmp.lt.s32.totalorder %s9, 2
    // Predicated region
    $region21: #{_lambda_.5} parent=5 // pred_check
      %p125 = pneg %p124
    $region22: #{_lambda_.5} parent=5 // pred_check_branch
      %127 = sbr.rel (%p125) target = $region24
    $region23: #{_lambda_.5} parent=5 // pred_region
      // Predicated region
      $region25: #{_lambda_.5} parent=23 // pred_check
        %p128 = pneg %p29
      $region26: #{_lambda_.5} parent=23 // pred_check_branch
        %130 = sbr.rel (%p128) target = $region28
      $region27: #{_lambda_.5} parent=23 // pred_region
        %p131 = scmp.lt.s32.totalorder %s9, 1
        %s132 = scalar_select %p131, %s9, 1
        %s133 = smul.addr %s132, 2
        %s134 = smul.addr %s133, 8
        %s135 = scalar_lea.vmem %s0, %s134
      $region28: #{_lambda_.5} parent=23 // pred_fallthru
        _
    $region24: #{_lambda_.5} parent=5 // pred_fallthru
      _
    %p136 = scmp.le.s32.totalorder 1, %s9
    %p137 = scmp.lt.s32.totalorder %s9, 3
    %p138 = pnand %p136, %p137
    %p139 = pneg %p138
    // Predicated region
    $region29: #{_lambda_.5} parent=5 // pred_check
      _
    $region30: #{_lambda_.5} parent=5 // pred_check_branch
      %141 = sbr.rel (%p138) target = $region32
    $region31: #{_lambda_.5} parent=5 // pred_region
      %s142 = ssub.s32 %s9, 1
      %p143 = scmp.lt.s32.totalorder %s14, 1
      %s144 = scalar_select %p143, %s14, 1
      %s145 = smul.addr %s144, 2
      %s146 = smul.addr %s145, 8
      %s147 = scalar_lea.vmem %s0, %s146
      %p148 = pneg %p35
      %p149 = pneg %p32
      %p150 = pneg %p56
      %p151 = pneg %p53
      %p152 = pneg %p77
      %p153 = pneg %p74
      %p154 = pneg %p103
      %p155 = pneg %p100
      %p156 = scmp.lt.s32.totalorder %s14, 1
      %s157 = scalar_select %p156, %s14, 1
      %s158 = smul.addr %s157, 4
      %s159 = smul.addr %s158, 8
      %s160 = scalar_lea.vmem %s3, %s159
      %p161 = scmp.lt.s32.totalorder %s14, 1
      %s162 = scalar_select %p161, %s14, 1
      %s163 = smul.addr %s162, 2
      %s164 = smul.addr %s163, 8
      %s165 = scalar_lea.vmem %s0, %s164
      %p166 = scmp.lt.s32.totalorder %s14, 1
      %s167 = scalar_select %p166, %s14, 1
      %s168 = smul.addr %s167, 4
      %s169 = smul.addr %s168, 8
      %s170 = scalar_lea.vmem %s3, %s169
      %v172 = vld [vmem:[%s165] sm:$0xff]
      %v173 = vld [vmem:[%s165 + $0x8] sm:$0xff]
      %v174 = vmul.f32 %v172, %v172
      %v175 = vmul.f32 %v173, %v173
      %176 = vadd.xlane.f32.xlu0 %v174
      %v177 = vpop.xlane.xlu0 %176
      %178 = vadd.xlane.f32.xlu0 %v175
      %v179 = vpop.xlane.xlu0 %178
      %v180 = vrcp.pop 128.0
      %v181 = vmul.f32 %v177, %v180
      %v182 = vmul.f32 %v179, %v180
      %v183 = vadd.f32 %v181, 1e-06
      %v184 = vadd.f32 %v182, 1e-06
      %v185 = vrsqrt.pop %v183
      %v186 = vrsqrt.pop %v184
      %v187 = vmul.f32 %v172, %v185
      %v188 = vmul.f32 %v173, %v186
      %v189 = vld [vmem:[%s1] sm:$0x1]
      %v191 = vlaneseq
      %v192 = vshrl.u32 %v191, 7
      %v193 = vsub.s32 0, %v192
      %v194 = vrot.slane %v189, %v193
      %v196 = vmul.f32 %v187, %v194
      %v197 = vmul.f32 %v188, %v194
      %v198 = vld [vmem:[%s2] sm:$0xff]
      %v199 = vld [vmem:[%s2 + $0x8] sm:$0xff]
      %v200 = vld [vmem:[%s2 + $0x10] sm:$0xff]
      %v201 = vld [vmem:[%s2 + $0x18] sm:$0xff]
      %v202 = vld [vmem:[%s2 + $0x20] sm:$0xff]
      %v203 = vld [vmem:[%s2 + $0x28] sm:$0xff]
      %v204 = vld [vmem:[%s2 + $0x30] sm:$0xff]
      %v205 = vld [vmem:[%s2 + $0x38] sm:$0xff]
      %v206 = vld [vmem:[%s2 + $0x40] sm:$0xff]
      %v207 = vld [vmem:[%s2 + $0x48] sm:$0xff]
      %v208 = vld [vmem:[%s2 + $0x50] sm:$0xff]
      %v209 = vld [vmem:[%s2 + $0x58] sm:$0xff]
      %v210 = vld [vmem:[%s2 + $0x60] sm:$0xff]
      %v211 = vld [vmem:[%s2 + $0x68] sm:$0xff]
      %v212 = vld [vmem:[%s2 + $0x70] sm:$0xff]
      %v213 = vld [vmem:[%s2 + $0x78] sm:$0xff]
      %v214 = vpack.c.bf16 %v197, %v196
      %v231 = vunpack.c.l.b16 %v198
      %v232 = vunpack.c.h.b16 %v198
      %v233 = vunpack.c.l.b16 %v199
      %v234 = vunpack.c.h.b16 %v199
      %v235 = vunpack.c.l.b16 %v200
      %v236 = vunpack.c.h.b16 %v200
      %v237 = vunpack.c.l.b16 %v201
      %v238 = vunpack.c.h.b16 %v201
      %v239 = vunpack.c.l.b16 %v202
      %v240 = vunpack.c.h.b16 %v202
      %v241 = vunpack.c.l.b16 %v203
      %v242 = vunpack.c.h.b16 %v203
      %v243 = vunpack.c.l.b16 %v204
      %v244 = vunpack.c.h.b16 %v204
      %v245 = vunpack.c.l.b16 %v205
      %v246 = vunpack.c.h.b16 %v205
      %v247 = vunpack.c.l.b16 %v206
      %v248 = vunpack.c.h.b16 %v206
      %v249 = vunpack.c.l.b16 %v207
      %v250 = vunpack.c.h.b16 %v207
      %v251 = vunpack.c.l.b16 %v208
      %v252 = vunpack.c.h.b16 %v208
      %v253 = vunpack.c.l.b16 %v209
      %v254 = vunpack.c.h.b16 %v209
      %v255 = vunpack.c.l.b16 %v210
      %v256 = vunpack.c.h.b16 %v210
      %v257 = vunpack.c.l.b16 %v211
      %v258 = vunpack.c.h.b16 %v211
      %v259 = vunpack.c.l.b16 %v212
      %v260 = vunpack.c.h.b16 %v212
      %v261 = vunpack.c.l.b16 %v213
      %v262 = vunpack.c.h.b16 %v213
      %v263 = vpack.c.b16 %v233, %v231
      %v264 = vpack.c.b16 %v234, %v232
      %v265 = vpack.c.b16 %v237, %v235
      %v266 = vpack.c.b16 %v238, %v236
      %v267 = vpack.c.b16 %v241, %v239
      %v268 = vpack.c.b16 %v242, %v240
      %v269 = vpack.c.b16 %v245, %v243
      %v270 = vpack.c.b16 %v246, %v244
      %v271 = vpack.c.b16 %v249, %v247
      %v272 = vpack.c.b16 %v250, %v248
      %v273 = vpack.c.b16 %v253, %v251
      %v274 = vpack.c.b16 %v254, %v252
      %v275 = vpack.c.b16 %v257, %v255
      %v276 = vpack.c.b16 %v258, %v256
      %v277 = vpack.c.b16 %v261, %v259
      %v278 = vpack.c.b16 %v262, %v260
      %295 = vmatprep.subr.bf16.mxu0 %v278
      %296 = vmatpush1.bf16.msra.mxu0 %v277
      %297 = vmatprep.subr.bf16.mxu0 %v276
      %298 = vmatpush1.bf16.msra.mxu0 %v275
      %299 = vmatprep.subr.bf16.mxu0 %v274
      %300 = vmatpush1.bf16.msra.mxu0 %v273
      %301 = vmatprep.subr.bf16.mxu0 %v272
      %302 = vmatpush1.bf16.msra.mxu0 %v271
      %303 = vmatprep.subr.bf16.mxu0 %v270
      %304 = vmatpush1.bf16.msra.mxu0 %v269
      %305 = vmatprep.subr.bf16.mxu0 %v268
      %306 = vmatpush1.bf16.msra.mxu0 %v267
      %307 = vmatprep.subr.bf16.mxu0 %v266
      %308 = vmatpush1.bf16.msra.mxu0 %v265
      %309 = vmatprep.subr.bf16.mxu0 %v264
      %310 = vmatpush1.bf16.msra.mxu0 %v263
      %311 = vmatprep.subr.bf16.mxu0 0
      %312 = vmatpush2.bf16.msra.mxu0 0
      %313 = vmatprep.subr.bf16.mxu0 0
      %314 = vmatpush2.bf16.msra.mxu0 0
      %315 = vmatprep.subr.bf16.mxu0 0
      %316 = vmatpush2.bf16.msra.mxu0 0
      %317 = vmatprep.subr.bf16.mxu0 0
      %318 = vmatpush2.bf16.msra.mxu0 0
      %319 = vmatprep.subr.bf16.mxu0 0
      %320 = vmatpush2.bf16.msra.mxu0 0
      %321 = vmatprep.subr.bf16.mxu0 0
      %322 = vmatpush2.bf16.msra.mxu0 0
      %323 = vmatprep.subr.bf16.mxu0 0
      %324 = vmatpush2.bf16.msra.mxu0 0
      %325 = vmatprep.subr.bf16.mxu0 0
      %326 = vmatpush2.bf16.msra.mxu0 0
      %327 = vmatprep.mubr.bf16.mxu0 0
      %328 = vmatmul.mubr.bf16.gmra.mxu0 %v214
      %v329 = vpop.f32.mrf.mxu0
      %v330 = vadd.f32 0.0, %v329
      %v331 = vpop.f32.mrf.mxu0
      %v332 = vadd.f32 0.0, %v331
      %v333 = vpop.f32.mrf.mxu0
      %v334 = vadd.f32 0.0, %v333
      %v335 = vpop.f32.mrf.mxu0
      %v336 = vadd.f32 0.0, %v335
      %337 = vdwg.mxu0
      %338 = vst [vmem:[%s170] sm:$0xff] %v330
      %339 = vst [vmem:[%s170 + $0x8] sm:$0xff] %v332
      %340 = vst [vmem:[%s170 + $0x10] sm:$0xff] %v334
      %341 = vst [vmem:[%s170 + $0x18] sm:$0xff] %v336
      %p342 = scmp.lt.s32.totalorder %s14, 1
      %s343 = scalar_select %p342, %s14, 1
      %s344 = smul.addr %s343, 4
      %s345 = smul.addr %s344, 8
      %s346 = scalar_lea.vmem %s3, %s345
      // Predicated region
      $region33: #{_lambda_.5} parent=31 // pred_check
        %p347 = pneg %p100
      $region34: #{_lambda_.5} parent=31 // pred_check_branch
        %349 = sbr.rel (%p347) target = $region36
      $region35: #{_lambda_.5} parent=31 // pred_region
        _
      $region36: #{_lambda_.5} parent=31 // pred_fallthru
        _
    $region32: #{_lambda_.5} parent=5 // pred_fallthru
      _
    %p350 = scmp.le.s32.totalorder 2, %s9
    // Predicated region
    $region37: #{_lambda_.5} parent=5 // pred_check
      %p351 = pneg %p350
    $region38: #{_lambda_.5} parent=5 // pred_check_branch
      %353 = sbr.rel (%p351) target = $region40
    $region39: #{_lambda_.5} parent=5 // pred_region
      %s354 = ssub.s32 %s9, 2
      // Predicated region
      $region41: #{_lambda_.5} parent=39 // pred_check
        %p355 = pneg %p106
      $region42: #{_lambda_.5} parent=39 // pred_check_branch
        %357 = sbr.rel (%p355) target = $region44
      $region43: #{_lambda_.5} parent=39 // pred_region
        %p358 = scmp.lt.s32.totalorder %s15, 1
        %s359 = scalar_select %p358, %s15, 1
        %s360 = smul.addr %s359, 4
        %s361 = smul.addr %s360, 8
        %s362 = scalar_lea.vmem %s3, %s361
      $region44: #{_lambda_.5} parent=39 // pred_fallthru
        _
    $region40: #{_lambda_.5} parent=5 // pred_fallthru
      _
  $region6: #{_lambda_.5} parent=0 // loop_footer
    %s13 = sadd.s32 1, %s9
  $region7: #{_lambda_.5} parent=0 // loop_footer_branch
    %8 = sbr.rel target = $region3
  $region8: #{_lambda_.5} parent=0 // loop_exit
    _

// kernel: _lambda_.4
$region0: #{_lambda_.4}
  #allocation0 [shape = 'u32[]', space=smem, size = 0x4, offset = 0x4, fixed_abs, tag = 'smem constant byte address 0x4 - core index']
  #allocation1 [shape = 'u32[144,128]{1,0:T(1,128)}', space=vmem, size = 0x12000, scoped, tag = 'internal scratch']
  %s0 = inlined_call_operand.vmem [shape: f32[2,16,128], index: 0, kind: input, shape index: {}]
  %s1 = inlined_call_operand.vmem [shape: f32[1,128], index: 1, kind: input, shape index: {}, may-alias: {1,2}]
  %s2 = inlined_call_operand.vmem [shape: f32[1,128], index: 2, kind: input, shape index: {}, may-alias: {1,2}]
  %s3 = inlined_call_operand.vmem [shape: bf16[128,256], index: 3, kind: input, shape index: {}]
  %s4 = inlined_call_operand.vmem [shape: bf16[128,128], index: 4, kind: input, shape index: {}]
  %s5 = inlined_call_operand.vmem [shape: bf16[128,512], index: 5, kind: input, shape index: {}]
  %s6 = inlined_call_operand.vmem [shape: bf16[256,128], index: 6, kind: input, shape index: {}]
  %s7 = inlined_call_operand.vmem [shape: f32[16,32], index: 7, kind: input, shape index: {}]
  %s8 = inlined_call_operand.vmem [shape: f32[16,32], index: 8, kind: input, shape index: {}]
  %s9 = inlined_call_operand.vmem [shape: f32[2,16,128], index: 9, kind: output, shape index: {}]
  %s10 = sld [smem:[#allocation0]]
  $region69: #{_lambda_.4} parent=0
    _
  %s12 = ssub.s32 1, %s10
  %s13 = scalar_select 0, %s12, %s10
  loop: start=0, step=1, limit=4
  $region2: #{_lambda_.4} parent=0 // loop_pre_header
    _
  $region3: #{_lambda_.4} parent=0 // loop_header
    %s15 = sphi 0, %s19
    %p16 = scmp.ge.s32.totalorder %s15, 4
    %s25 = sphi 0, %s27
    %s28 = sphi 0, %s25
    %s29 = sphi 0, %s28
    %s45 = sphi 0, %s29
    %s49 = sphi 0, %s49
    %s51 = sphi 0, %s49
    %s52 = sphi 0, %s51
    %s66 = sphi 0, %s52
    %s70 = sphi 0, %s70
    %s72 = sphi 0, %s70
    %s73 = sphi 0, %s72
    %s87 = sphi 0, %s73
    %s91 = sphi 0, %s91
    %s93 = sphi 0, %s91
    %s94 = sphi 0, %s93
    %s108 = sphi 0, %s94
    %s112 = sphi 0, %s112
    %s114 = sphi 0, %s112
    %s115 = sphi 0, %s114
    %s129 = sphi 0, %s115
    %s133 = sphi 0, %s133
    %s135 = sphi 0, %s133
    %s136 = sphi 0, %s135
    %s150 = sphi 0, %s136
    %s154 = sphi 0, %s154
    %s156 = sphi 0, %s154
    %s157 = sphi 0, %s156
    %s171 = sphi 0, %s157
    %s175 = sphi 0, %s175
    %s177 = sphi 0, %s175
    %s178 = sphi 0, %s177
    %s192 = sphi 0, %s178
    %s196 = sphi 0, %s196
    %s198 = sphi 0, %s196
    %s199 = sphi 0, %s198
    %s213 = sphi 0, %s199
    %s219 = sphi 0, %s221
    %s222 = sphi 0, %s219
    %s223 = sphi 0, %s222
    %s239 = sphi 0, %s223
  $region4: #{_lambda_.4} parent=0 // loop_header_branch
    %18 = sbr.rel (%p16) target = $region8
  $region5: #{_lambda_.4} parent=0 // loop_body
    %s20 = ssub.s32 %s15, 1
    %s21 = ssub.s32 %s15, 2
    %s22 = sadd.s32 %s15, 1
    %s23 = ssub.s32 %s15, %s22
    %p24 = scmp.eq.s32.totalorder %s23, 0
    %s26 = sadd.s32 %s25, 1
    %s27 = scalar_select %p24, %s25, %s26
    %p30 = pneg %p24
    %p31 = scmp.eq.s32.totalorder %s15, 1
    %p32 = por %p30, %p31
    %p33 = scmp.ne.s32.totalorder %s25, %s28
    %p34 = scmp.eq.s32.totalorder %s15, 0
    %p35 = por %p33, %p34
    %p36 = scmp.ne.s32.totalorder %s25, %s28
    %p37 = scmp.eq.s32.totalorder %s20, 1
    %p38 = por %p36, %p37
    %p39 = scmp.ne.s32.totalorder %s28, %s29
    %p40 = scmp.eq.s32.totalorder %s20, 0
    %p41 = por %p39, %p40
    %p42 = scmp.ne.s32.totalorder %s28, %s29
    %p43 = scmp.eq.s32.totalorder %s21, 1
    %p44 = por %p42, %p43
    %p46 = scmp.ne.s32.totalorder %s29, %s45
    %p47 = scmp.eq.s32.totalorder %s21, 0
    %p48 = por %p46, %p47
    %s50 = sadd.s32 %s49, 1
    %p53 = scmp.eq.s32.totalorder %s15, 1
    %p54 = scmp.ne.s32.totalorder %s49, %s51
    %p55 = scmp.eq.s32.totalorder %s15, 0
    %p56 = por %p54, %p55
    %p57 = scmp.ne.s32.totalorder %s49, %s51
    %p58 = scmp.eq.s32.totalorder %s20, 1
    %p59 = por %p57, %p58
    %p60 = scmp.ne.s32.totalorder %s51, %s52
    %p61 = scmp.eq.s32.totalorder %s20, 0
    %p62 = por %p60, %p61
    %p63 = scmp.ne.s32.totalorder %s51, %s52
    %p64 = scmp.eq.s32.totalorder %s21, 1
    %p65 = por %p63, %p64
    %p67 = scmp.ne.s32.totalorder %s52, %s66
    %p68 = scmp.eq.s32.totalorder %s21, 0
    %p69 = por %p67, %p68
    %s71 = sadd.s32 %s70, 1
    %p74 = scmp.eq.s32.totalorder %s15, 1
    %p75 = scmp.ne.s32.totalorder %s70, %s72
    %p76 = scmp.eq.s32.totalorder %s15, 0
    %p77 = por %p75, %p76
    %p78 = scmp.ne.s32.totalorder %s70, %s72
    %p79 = scmp.eq.s32.totalorder %s20, 1
    %p80 = por %p78, %p79
    %p81 = scmp.ne.s32.totalorder %s72, %s73
    %p82 = scmp.eq.s32.totalorder %s20, 0
    %p83 = por %p81, %p82
    %p84 = scmp.ne.s32.totalorder %s72, %s73
    %p85 = scmp.eq.s32.totalorder %s21, 1
    %p86 = por %p84, %p85
    %p88 = scmp.ne.s32.totalorder %s73, %s87
    %p89 = scmp.eq.s32.totalorder %s21, 0
    %p90 = por %p88, %p89
    %s92 = sadd.s32 %s91, 1
    %p95 = scmp.eq.s32.totalorder %s15, 1
    %p96 = scmp.ne.s32.totalorder %s91, %s93
    %p97 = scmp.eq.s32.totalorder %s15, 0
    %p98 = por %p96, %p97
    %p99 = scmp.ne.s32.totalorder %s91, %s93
    %p100 = scmp.eq.s32.totalorder %s20, 1
    %p101 = por %p99, %p100
    %p102 = scmp.ne.s32.totalorder %s93, %s94
    %p103 = scmp.eq.s32.totalorder %s20, 0
    %p104 = por %p102, %p103
    %p105 = scmp.ne.s32.totalorder %s93, %s94
    %p106 = scmp.eq.s32.totalorder %s21, 1
    %p107 = por %p105, %p106
    %p109 = scmp.ne.s32.totalorder %s94, %s108
    %p110 = scmp.eq.s32.totalorder %s21, 0
    %p111 = por %p109, %p110
    %s113 = sadd.s32 %s112, 1
    %p116 = scmp.eq.s32.totalorder %s15, 1
    %p117 = scmp.ne.s32.totalorder %s112, %s114
    %p118 = scmp.eq.s32.totalorder %s15, 0
    %p119 = por %p117, %p118
    %p120 = scmp.ne.s32.totalorder %s112, %s114
    %p121 = scmp.eq.s32.totalorder %s20, 1
    %p122 = por %p120, %p121
    %p123 = scmp.ne.s32.totalorder %s114, %s115
    %p124 = scmp.eq.s32.totalorder %s20, 0
    %p125 = por %p123, %p124
    %p126 = scmp.ne.s32.totalorder %s114, %s115
    %p127 = scmp.eq.s32.totalorder %s21, 1
    %p128 = por %p126, %p127
    %p130 = scmp.ne.s32.totalorder %s115, %s129
    %p131 = scmp.eq.s32.totalorder %s21, 0
    %p132 = por %p130, %p131
    %s134 = sadd.s32 %s133, 1
    %p137 = scmp.eq.s32.totalorder %s15, 1
    %p138 = scmp.ne.s32.totalorder %s133, %s135
    %p139 = scmp.eq.s32.totalorder %s15, 0
    %p140 = por %p138, %p139
    %p141 = scmp.ne.s32.totalorder %s133, %s135
    %p142 = scmp.eq.s32.totalorder %s20, 1
    %p143 = por %p141, %p142
    %p144 = scmp.ne.s32.totalorder %s135, %s136
    %p145 = scmp.eq.s32.totalorder %s20, 0
    %p146 = por %p144, %p145
    %p147 = scmp.ne.s32.totalorder %s135, %s136
    %p148 = scmp.eq.s32.totalorder %s21, 1
    %p149 = por %p147, %p148
    %p151 = scmp.ne.s32.totalorder %s136, %s150
    %p152 = scmp.eq.s32.totalorder %s21, 0
    %p153 = por %p151, %p152
    %s155 = sadd.s32 %s154, 1
    %p158 = scmp.eq.s32.totalorder %s15, 1
    %p159 = scmp.ne.s32.totalorder %s154, %s156
    %p160 = scmp.eq.s32.totalorder %s15, 0
    %p161 = por %p159, %p160
    %p162 = scmp.ne.s32.totalorder %s154, %s156
    %p163 = scmp.eq.s32.totalorder %s20, 1
    %p164 = por %p162, %p163
    %p165 = scmp.ne.s32.totalorder %s156, %s157
    %p166 = scmp.eq.s32.totalorder %s20, 0
    %p167 = por %p165, %p166
    %p168 = scmp.ne.s32.totalorder %s156, %s157
    %p169 = scmp.eq.s32.totalorder %s21, 1
    %p170 = por %p168, %p169
    %p172 = scmp.ne.s32.totalorder %s157, %s171
    %p173 = scmp.eq.s32.totalorder %s21, 0
    %p174 = por %p172, %p173
    %s176 = sadd.s32 %s175, 1
    %p179 = scmp.eq.s32.totalorder %s15, 1
    %p180 = scmp.ne.s32.totalorder %s175, %s177
    %p181 = scmp.eq.s32.totalorder %s15, 0
    %p182 = por %p180, %p181
    %p183 = scmp.ne.s32.totalorder %s175, %s177
    %p184 = scmp.eq.s32.totalorder %s20, 1
    %p185 = por %p183, %p184
    %p186 = scmp.ne.s32.totalorder %s177, %s178
    %p187 = scmp.eq.s32.totalorder %s20, 0
    %p188 = por %p186, %p187
    %p189 = scmp.ne.s32.totalorder %s177, %s178
    %p190 = scmp.eq.s32.totalorder %s21, 1
    %p191 = por %p189, %p190
    %p193 = scmp.ne.s32.totalorder %s178, %s192
    %p194 = scmp.eq.s32.totalorder %s21, 0
    %p195 = por %p193, %p194
    %s197 = sadd.s32 %s196, 1
    %p200 = scmp.eq.s32.totalorder %s15, 1
    %p201 = scmp.ne.s32.totalorder %s196, %s198
    %p202 = scmp.eq.s32.totalorder %s15, 0
    %p203 = por %p201, %p202
    %p204 = scmp.ne.s32.totalorder %s196, %s198
    %p205 = scmp.eq.s32.totalorder %s20, 1
    %p206 = por %p204, %p205
    %p207 = scmp.ne.s32.totalorder %s198, %s199
    %p208 = scmp.eq.s32.totalorder %s20, 0
    %p209 = por %p207, %p208
    %p210 = scmp.ne.s32.totalorder %s198, %s199
    %p211 = scmp.eq.s32.totalorder %s21, 1
    %p212 = por %p210, %p211
    %p214 = scmp.ne.s32.totalorder %s199, %s213
    %p215 = scmp.eq.s32.totalorder %s21, 0
    %p216 = por %p214, %p215
    %s217 = ssub.s32 %s15, %s22
    %p218 = scmp.eq.s32.totalorder %s217, 0
    %s220 = sadd.s32 %s219, 1
    %s221 = scalar_select %p218, %s219, %s220
    %p224 = pneg %p218
    %p225 = scmp.eq.s32.totalorder %s15, 1
    %p226 = por %p224, %p225
    %p227 = scmp.ne.s32.totalorder %s219, %s222
    %p228 = scmp.eq.s32.totalorder %s15, 0
    %p229 = por %p227, %p228
    %p230 = scmp.ne.s32.totalorder %s219, %s222
    %p231 = scmp.eq.s32.totalorder %s20, 1
    %p232 = por %p230, %p231
    %p233 = scmp.ne.s32.totalorder %s222, %s223
    %p234 = scmp.eq.s32.totalorder %s20, 0
    %p235 = por %p233, %p234
    %p236 = scmp.ne.s32.totalorder %s222, %s223
    %p237 = scmp.eq.s32.totalorder %s21, 1
    %p238 = por %p236, %p237
    %p240 = scmp.ne.s32.totalorder %s223, %s239
    %p241 = scmp.eq.s32.totalorder %s21, 0
    %p242 = por %p240, %p241
    %p243 = scmp.le.s32.totalorder 1, %s15
    %p244 = scmp.lt.s32.totalorder %s15, 3
    %p245 = pnand %p243, %p244
    %p246 = pneg %p245
    // Predicated region
    $region9: #{_lambda_.4} parent=5 // pred_check
      _
    $region10: #{_lambda_.4} parent=5 // pred_check_branch
      %248 = sbr.rel (%p245) target = $region12
    $region11: #{_lambda_.4} parent=5 // pred_region
      %s249 = ssub.s32 %s15, 1
      // Predicated region
      $region13: #{_lambda_.4} parent=11 // pred_check
        %p250 = pneg %p62
      $region14: #{_lambda_.4} parent=11 // pred_check_branch
        %252 = sbr.rel (%p250) target = $region16
      $region15: #{_lambda_.4} parent=11 // pred_region
        _
      $region16: #{_lambda_.4} parent=11 // pred_fallthru
        _
      // Predicated region
      $region17: #{_lambda_.4} parent=11 // pred_check
        %p253 = pneg %p83
      $region18: #{_lambda_.4} parent=11 // pred_check_branch
        %255 = sbr.rel (%p253) target = $region20
      $region19: #{_lambda_.4} parent=11 // pred_region
        _
      $region20: #{_lambda_.4} parent=11 // pred_fallthru
        _
      // Predicated region
      $region21: #{_lambda_.4} parent=11 // pred_check
        %p256 = pneg %p104
      $region22: #{_lambda_.4} parent=11 // pred_check_branch
        %258 = sbr.rel (%p256) target = $region24
      $region23: #{_lambda_.4} parent=11 // pred_region
        _
      $region24: #{_lambda_.4} parent=11 // pred_fallthru
        _
      // Predicated region
      $region25: #{_lambda_.4} parent=11 // pred_check
        %p259 = pneg %p125
      $region26: #{_lambda_.4} parent=11 // pred_check_branch
        %261 = sbr.rel (%p259) target = $region28
      $region27: #{_lambda_.4} parent=11 // pred_region
        _
      $region28: #{_lambda_.4} parent=11 // pred_fallthru
        _
      // Predicated region
      $region29: #{_lambda_.4} parent=11 // pred_check
        %p262 = pneg %p146
      $region30: #{_lambda_.4} parent=11 // pred_check_branch
        %264 = sbr.rel (%p262) target = $region32
      $region31: #{_lambda_.4} parent=11 // pred_region
        _
      $region32: #{_lambda_.4} parent=11 // pred_fallthru
        _
      // Predicated region
      $region33: #{_lambda_.4} parent=11 // pred_check
        %p265 = pneg %p167
      $region34: #{_lambda_.4} parent=11 // pred_check_branch
        %267 = sbr.rel (%p265) target = $region36
      $region35: #{_lambda_.4} parent=11 // pred_region
        _
      $region36: #{_lambda_.4} parent=11 // pred_fallthru
        _
      // Predicated region
      $region37: #{_lambda_.4} parent=11 // pred_check
        %p268 = pneg %p188
      $region38: #{_lambda_.4} parent=11 // pred_check_branch
        %270 = sbr.rel (%p268) target = $region40
      $region39: #{_lambda_.4} parent=11 // pred_region
        _
      $region40: #{_lambda_.4} parent=11 // pred_fallthru
        _
      // Predicated region
      $region41: #{_lambda_.4} parent=11 // pred_check
        %p271 = pneg %p209
      $region42: #{_lambda_.4} parent=11 // pred_check_branch
        %273 = sbr.rel (%p271) target = $region44
      $region43: #{_lambda_.4} parent=11 // pred_region
        _
      $region44: #{_lambda_.4} parent=11 // pred_fallthru
        _
    $region12: #{_lambda_.4} parent=5 // pred_fallthru
      _
    %p274 = scmp.lt.s32.totalorder %s15, 2
    // Predicated region
    $region45: #{_lambda_.4} parent=5 // pred_check
      %p275 = pneg %p274
    $region46: #{_lambda_.4} parent=5 // pred_check_branch
      %277 = sbr.rel (%p275) target = $region48
    $region47: #{_lambda_.4} parent=5 // pred_region
      // Predicated region
      $region49: #{_lambda_.4} parent=47 // pred_check
        %p278 = pneg %p35
      $region50: #{_lambda_.4} parent=47 // pred_check_branch
        %280 = sbr.rel (%p278) target = $region52
      $region51: #{_lambda_.4} parent=47 // pred_region
        %p281 = scmp.lt.s32.totalorder %s15, 1
        %s282 = scalar_select %p281, %s15, 1
        %s283 = smul.addr %s282, 2
        %s284 = smul.addr %s283, 8
        %s285 = scalar_lea.vmem %s0, %s284
      $region52: #{_lambda_.4} parent=47 // pred_fallthru
        _
    $region48: #{_lambda_.4} parent=5 // pred_fallthru
      _
    %p286 = scmp.le.s32.totalorder 1, %s15
    %p287 = scmp.lt.s32.totalorder %s15, 3
    %p288 = pnand %p286, %p287
    %p289 = pneg %p288
    // Predicated region
    $region53: #{_lambda_.4} parent=5 // pred_check
      _
    $region54: #{_lambda_.4} parent=5 // pred_check_branch
      %291 = sbr.rel (%p288) target = $region56
    $region55: #{_lambda_.4} parent=5 // pred_region
      %s292 = ssub.s32 %s15, 1
      %p293 = scmp.lt.s32.totalorder %s20, 1
      %s294 = scalar_select %p293, %s20, 1
      %s295 = smul.addr %s294, 2
      %s296 = smul.addr %s295, 8
      %s297 = scalar_lea.vmem %s0, %s296
      %p298 = pneg %p41
      %p299 = pneg %p38
      %p300 = pneg %p62
      %p301 = pneg %p59
      %p302 = pneg %p83
      %p303 = pneg %p80
      %p304 = pneg %p104
      %p305 = pneg %p101
      %p306 = pneg %p125
      %p307 = pneg %p122
      %p308 = pneg %p146
      %p309 = pneg %p143
      %p310 = pneg %p167
      %p311 = pneg %p164
      %p312 = pneg %p188
      %p313 = pneg %p185
      %p314 = pneg %p209
      %p315 = pneg %p206
      %p316 = pneg %p235
      %p317 = pneg %p232
      %p318 = scmp.lt.s32.totalorder %s20, 1
      %s319 = scalar_select %p318, %s20, 1
      %s320 = smul.addr %s319, 2
      %s321 = smul.addr %s320, 8
      %s322 = scalar_lea.vmem %s9, %s321
      %p323 = scmp.lt.s32.totalorder %s20, 1
      %s324 = scalar_select %p323, %s20, 1
      %s325 = smul.addr %s324, 2
      %s326 = smul.addr %s325, 8
      %s327 = scalar_lea.vmem %s0, %s326
      %p328 = scmp.lt.s32.totalorder %s20, 1
      %s329 = scalar_select %p328, %s20, 1
      %s330 = smul.addr %s329, 2
      %s331 = smul.addr %s330, 8
      %s332 = scalar_lea.vmem %s9, %s331
      %v334 = vld [vmem:[%s327] sm:$0xff]
      %v335 = vld [vmem:[%s327 + $0x8] sm:$0xff]
      %v336 = vmul.f32 %v334, %v334
      %v337 = vmul.f32 %v335, %v335
      %338 = vadd.xlane.f32.xlu0 %v336
      %v339 = vpop.xlane.xlu0 %338
      %340 = vadd.xlane.f32.xlu0 %v337
      %v341 = vpop.xlane.xlu0 %340
      %v342 = vrcp.pop 128.0
      %v343 = vmul.f32 %v339, %v342
      %v344 = vmul.f32 %v341, %v342
      %v345 = vadd.f32 %v343, 1e-06
      %v346 = vadd.f32 %v344, 1e-06
      %v347 = vrsqrt.pop %v345
      %v348 = vrsqrt.pop %v346
      %v349 = vmul.f32 %v334, %v347
      %v350 = vmul.f32 %v335, %v348
      %v351 = vld [vmem:[%s1] sm:$0x1]
      %v353 = vlaneseq
      %v354 = vshrl.u32 %v353, 7
      %v355 = vsub.s32 0, %v354
      %v356 = vrot.slane %v351, %v355
      %v358 = vmul.f32 %v349, %v356
      %v359 = vmul.f32 %v350, %v356
      %v360 = vld [vmem:[%s3] sm:$0xff]
      %v361 = vld [vmem:[%s3 + $0x8] sm:$0xff]
      %v362 = vld [vmem:[%s3 + $0x10] sm:$0xff]
      %v363 = vld [vmem:[%s3 + $0x18] sm:$0xff]
      %v364 = vld [vmem:[%s3 + $0x20] sm:$0xff]
      %v365 = vld [vmem:[%s3 + $0x28] sm:$0xff]
      %v366 = vld [vmem:[%s3 + $0x30] sm:$0xff]
      %v367 = vld [vmem:[%s3 + $0x38] sm:$0xff]
      %v368 = vld [vmem:[%s3 + $0x40] sm:$0xff]
      %v369 = vld [vmem:[%s3 + $0x48] sm:$0xff]
      %v370 = vld [vmem:[%s3 + $0x50] sm:$0xff]
      %v371 = vld [vmem:[%s3 + $0x58] sm:$0xff]
      %v372 = vld [vmem:[%s3 + $0x60] sm:$0xff]
      %v373 = vld [vmem:[%s3 + $0x68] sm:$0xff]
      %v374 = vld [vmem:[%s3 + $0x70] sm:$0xff]
      %v375 = vld [vmem:[%s3 + $0x78] sm:$0xff]
      %v376 = vpack.c.bf16 %v359, %v358
      %v393 = vunpack.c.l.b16 %v360
      %v394 = vunpack.c.h.b16 %v360
      %v395 = vunpack.c.l.b16 %v361
      %v396 = vunpack.c.h.b16 %v361
      %v397 = vunpack.c.l.b16 %v362
      %v398 = vunpack.c.h.b16 %v362
      %v399 = vunpack.c.l.b16 %v363
      %v400 = vunpack.c.h.b16 %v363
      %v401 = vunpack.c.l.b16 %v364
      %v402 = vunpack.c.h.b16 %v364
      %v403 = vunpack.c.l.b16 %v365
      %v404 = vunpack.c.h.b16 %v365
      %v405 = vunpack.c.l.b16 %v366
      %v406 = vunpack.c.h.b16 %v366
      %v407 = vunpack.c.l.b16 %v367
      %v408 = vunpack.c.h.b16 %v367
      %v409 = vunpack.c.l.b16 %v368
      %v410 = vunpack.c.h.b16 %v368
      %v411 = vunpack.c.l.b16 %v369
      %v412 = vunpack.c.h.b16 %v369
      %v413 = vunpack.c.l.b16 %v370
      %v414 = vunpack.c.h.b16 %v370
      %v415 = vunpack.c.l.b16 %v371
      %v416 = vunpack.c.h.b16 %v371
      %v417 = vunpack.c.l.b16 %v372
      %v418 = vunpack.c.h.b16 %v372
      %v419 = vunpack.c.l.b16 %v373
      %v420 = vunpack.c.h.b16 %v373
      %v421 = vunpack.c.l.b16 %v374
      %v422 = vunpack.c.h.b16 %v374
      %v423 = vunpack.c.l.b16 %v375
      %v424 = vunpack.c.h.b16 %v375
      %v425 = vpack.c.b16 %v395, %v393
      %v426 = vpack.c.b16 %v396, %v394
      %v427 = vpack.c.b16 %v399, %v397
      %v428 = vpack.c.b16 %v400, %v398
      %v429 = vpack.c.b16 %v403, %v401
      %v430 = vpack.c.b16 %v404, %v402
      %v431 = vpack.c.b16 %v407, %v405
      %v432 = vpack.c.b16 %v408, %v406
      %v433 = vpack.c.b16 %v411, %v409
      %v434 = vpack.c.b16 %v412, %v410
      %v435 = vpack.c.b16 %v415, %v413
      %v436 = vpack.c.b16 %v416, %v414
      %v437 = vpack.c.b16 %v419, %v417
      %v438 = vpack.c.b16 %v420, %v418
      %v439 = vpack.c.b16 %v423, %v421
      %v440 = vpack.c.b16 %v424, %v422
      %457 = vmatprep.subr.bf16.mxu0 %v440
      %458 = vmatpush1.bf16.msra.mxu0 %v439
      %459 = vmatprep.subr.bf16.mxu0 %v438
      %460 = vmatpush1.bf16.msra.mxu0 %v437
      %461 = vmatprep.subr.bf16.mxu0 %v436
      %462 = vmatpush1.bf16.msra.mxu0 %v435
      %463 = vmatprep.subr.bf16.mxu0 %v434
      %464 = vmatpush1.bf16.msra.mxu0 %v433
      %465 = vmatprep.subr.bf16.mxu0 %v432
      %466 = vmatpush1.bf16.msra.mxu0 %v431
      %467 = vmatprep.subr.bf16.mxu0 %v430
      %468 = vmatpush1.bf16.msra.mxu0 %v429
      %469 = vmatprep.subr.bf16.mxu0 %v428
      %470 = vmatpush1.bf16.msra.mxu0 %v427
      %471 = vmatprep.subr.bf16.mxu0 %v426
      %472 = vmatpush1.bf16.msra.mxu0 %v425
      %473 = vmatprep.subr.bf16.mxu0 0
      %474 = vmatpush2.bf16.msra.mxu0 0
      %475 = vmatprep.subr.bf16.mxu0 0
      %476 = vmatpush2.bf16.msra.mxu0 0
      %477 = vmatprep.subr.bf16.mxu0 0
      %478 = vmatpush2.bf16.msra.mxu0 0
      %479 = vmatprep.subr.bf16.mxu0 0
      %480 = vmatpush2.bf16.msra.mxu0 0
      %481 = vmatprep.subr.bf16.mxu0 0
      %482 = vmatpush2.bf16.msra.mxu0 0
      %483 = vmatprep.subr.bf16.mxu0 0
      %484 = vmatpush2.bf16.msra.mxu0 0
      %485 = vmatprep.subr.bf16.mxu0 0
      %486 = vmatpush2.bf16.msra.mxu0 0
      %487 = vmatprep.subr.bf16.mxu0 0
      %488 = vmatpush2.bf16.msra.mxu0 0
      %489 = vmatprep.mubr.bf16.mxu0 0
      %490 = vmatmul.mubr.bf16.gmra.mxu0 %v376
      %v491 = vpop.f32.mrf.mxu0
      %v492 = vadd.f32 0.0, %v491
      %v493 = vpop.f32.mrf.mxu0
      %v494 = vadd.f32 0.0, %v493
      %v495 = vpop.f32.mrf.mxu0
      %v496 = vadd.f32 0.0, %v495
      %v497 = vpop.f32.mrf.mxu0
      %v498 = vadd.f32 0.0, %v497
      %499 = vdwg.mxu0
      %v500 = vld [vmem:[%s7] sm:$0xff]
      %v501 = vld [vmem:[%s7 + $0x8] sm:$0xff]
      %v502 = vld [vmem:[%s8] sm:$0xff]
      %v503 = vld [vmem:[%s8 + $0x8] sm:$0xff]
      %v504 = vsub.f32 0.0, %v494
      %v505 = vsub.f32 0.0, %v498
      %508 = vrot.lane.b32.xlu0 %v504, 112
      %v509 = vpop.permute.xlu0 %508
      %510 = vrot.lane.b32.xlu0 %v505, 112
      %v511 = vpop.permute.xlu0 %510
      %516 = vrot.lane.b32.xlu0 %v494, 16
      %v517 = vpop.permute.xlu0 %516
      %518 = vrot.lane.b32.xlu0 %v498, 16
      %v519 = vpop.permute.xlu0 %518
      %vm522 = vcmask 130048
      %v523 = vsel %vm522, %v509, %v517
      %v524 = vsel %vm522, %v511, %v519
      %v525 = vmul.f32 %v494, %v500
      %v526 = vmul.f32 %v498, %v501
      %v527 = vmul.f32 %v523, %v502
      %v528 = vmul.f32 %v524, %v503
      %v529 = vadd.f32 %v525, %v527
      %v530 = vadd.f32 %v526, %v528
      %531 = vrot.lane.b32.xlu0 %v504, 80
      %v532 = vpop.permute.xlu0 %531
      %533 = vrot.lane.b32.xlu0 %v505, 80
      %v534 = vpop.permute.xlu0 %533
      %537 = vrot.lane.b32.xlu0 %v494, 112
      %v538 = vpop.permute.xlu0 %537
      %539 = vrot.lane.b32.xlu0 %v498, 112
      %v540 = vpop.permute.xlu0 %539
      %v543 = vsel %vm522, %v532, %v538
      %v544 = vsel %vm522, %v534, %v540
      %547 = vrot.lane.b32.xlu0 %v500, 32
      %v548 = vpop.permute.xlu0 %547
      %549 = vrot.lane.b32.xlu0 %v501, 32
      %v550 = vpop.permute.xlu0 %549
      %v553 = vmul.f32 %v494, %v548
      %v554 = vmul.f32 %v498, %v550
      %v555 = vmul.f32 %v543, %v502
      %v556 = vmul.f32 %v544, %v503
      %559 = vrot.lane.b32.xlu0 %v555, 32
      %v560 = vpop.permute.xlu0 %559
      %561 = vrot.lane.b32.xlu0 %v556, 32
      %v562 = vpop.permute.xlu0 %561
      %v565 = vadd.f32 %v553, %v560
      %v566 = vadd.f32 %v554, %v562
      %v567 = vlaneseq
      %v568 = vshrl.u32 %v567, 7
      %v569 = vadd.s32 %v568, 8
      %v570 = vlaneseq
      %v571 = vand.u32 %v570, 127
      %vm572 = vcmp.le.s32.totalorder %v571, %v568
      %vm573 = vcmp.le.s32.totalorder %v571, %v569
      %v574 = vsub.f32 0.0, %v492
      %v575 = vsub.f32 0.0, %v496
      %578 = vrot.lane.b32.xlu0 %v574, 112
      %v579 = vpop.permute.xlu0 %578
      %580 = vrot.lane.b32.xlu0 %v575, 112
      %v581 = vpop.permute.xlu0 %580
      %586 = vrot.lane.b32.xlu0 %v492, 16
      %v587 = vpop.permute.xlu0 %586
      %588 = vrot.lane.b32.xlu0 %v496, 16
      %v589 = vpop.permute.xlu0 %588
      %v592 = vsel %vm522, %v579, %v587
      %v593 = vsel %vm522, %v581, %v589
      %v594 = vmul.f32 %v492, %v500
      %v595 = vmul.f32 %v496, %v501
      %v596 = vmul.f32 %v592, %v502
      %v597 = vmul.f32 %v593, %v503
      %v598 = vadd.f32 %v594, %v596
      %v599 = vadd.f32 %v595, %v597
      %v600 = vmul.f32 %v598, 0.17677669
      %v601 = vmul.f32 %v599, 0.17677669
      %v602 = vpack.c.bf16 %v601, %v600
      %v603 = vpack.c.bf16 %v530, %v529
      %vm604 = vcmask 261120
      %v606 = vsel %vm604, %v602, 0
      %v609 = vsel %vm604, %v603, 0
      %611 = vmatprep.subr.bf16.mxu0 0
      %612 = vmatpush1.bf16.xpose.msra.mxu0 0
      %613 = vmatprep.subr.bf16.mxu0 0
      %614 = vmatpush1.bf16.xpose.msra.mxu0 0
      %615 = vmatprep.subr.bf16.mxu0 0
      %616 = vmatpush1.bf16.xpose.msra.mxu0 0
      %617 = vmatprep.subr.bf16.mxu0 0
      %618 = vmatpush1.bf16.xpose.msra.mxu0 0
      %619 = vmatprep.subr.bf16.mxu0 0
      %620 = vmatpush1.bf16.xpose.msra.mxu0 0
      %621 = vmatprep.subr.bf16.mxu0 0
      %622 = vmatpush1.bf16.xpose.msra.mxu0 0
      %623 = vmatprep.subr.bf16.mxu0 0
      %624 = vmatpush1.bf16.xpose.msra.mxu0 0
      %625 = vmatprep.subr.bf16.mxu0 0
      %626 = vmatpush1.bf16.xpose.msra.mxu0 %v609
      %627 = vmatprep.subr.bf16.mxu0 0
      %628 = vmatpush2.bf16.xpose.msra.mxu0 0
      %629 = vmatprep.subr.bf16.mxu0 0
      %630 = vmatpush2.bf16.xpose.msra.mxu0 0
      %631 = vmatprep.subr.bf16.mxu0 0
      %632 = vmatpush2.bf16.xpose.msra.mxu0 0
      %633 = vmatprep.subr.bf16.mxu0 0
      %634 = vmatpush2.bf16.xpose.msra.mxu0 0
      %635 = vmatprep.subr.bf16.mxu0 0
      %636 = vmatpush2.bf16.xpose.msra.mxu0 0
      %637 = vmatprep.subr.bf16.mxu0 0
      %638 = vmatpush2.bf16.xpose.msra.mxu0 0
      %639 = vmatprep.subr.bf16.mxu0 0
      %640 = vmatpush2.bf16.xpose.msra.mxu0 0
      %641 = vmatprep.subr.bf16.mxu0 0
      %642 = vmatpush2.bf16.xpose.msra.mxu0 0
      %643 = vmatprep.mubr.bf16.mxu0 0
      %644 = vmatmul.mubr.bf16.gmra.mxu0 %v606
      %v645 = vpop.f32.mrf.mxu0
      %v646 = vadd.f32 0.0, %v645
      %v647 = vpop.f32.mrf.mxu0
      %v648 = vpop.f32.mrf.mxu0
      %v649 = vadd.f32 0.0, %v648
      %v650 = vpop.f32.mrf.mxu0
      %651 = vdwg.mxu0
      %v652 = vsel %vm572, %v646, -1e+30
      %v653 = vsel %vm573, %v649, -1e+30
      %v654 = vsel %vm522, %v652, -inf
      %655 = vmax.xlane.f32.xlu0 %v654
      %v656 = vpop.xlane.xlu0 %655
      %v657 = vsel %vm522, %v653, -inf
      %658 = vmax.xlane.f32.xlu0 %v657
      %v659 = vpop.xlane.xlu0 %658
      %v660 = vsub.f32 %v652, %v656
      %v661 = vsub.f32 %v653, %v659
      %v662 = vmul.f32 %v660, 1.442695
      %v663 = vpow.pop %v662
      %v664 = vmul.f32 %v661, 1.442695
      %v665 = vpow.pop %v664
      %v666 = vsel %vm522, %v663, 0.0
      %667 = vadd.xlane.f32.xlu0 %v666
      %v668 = vpop.xlane.xlu0 %667
      %v669 = vsel %vm522, %v665, 0.0
      %670 = vadd.xlane.f32.xlu0 %v669
      %v671 = vpop.xlane.xlu0 %670
      %v672 = vpack.c.bf16 %v665, %v663
      %v673 = vpack.c.bf16 %v498, %v494
      %675 = vrot.lane.b32.xlu0 %v673, 64
      %v676 = vpop.permute.xlu0 %675
      %v679 = vsel %vm522, %v672, 0
      %681 = vmatprep.subr.bf16.mxu0 0
      %682 = vmatpush1.bf16.msra.mxu0 0
      %683 = vmatprep.subr.bf16.mxu0 0
      %684 = vmatpush1.bf16.msra.mxu0 0
      %685 = vmatprep.subr.bf16.mxu0 0
      %686 = vmatpush1.bf16.msra.mxu0 0
      %687 = vmatprep.subr.bf16.mxu0 0
      %688 = vmatpush1.bf16.msra.mxu0 0
      %689 = vmatprep.subr.bf16.mxu0 0
      %690 = vmatpush1.bf16.msra.mxu0 0
      %691 = vmatprep.subr.bf16.mxu0 0
      %692 = vmatpush1.bf16.msra.mxu0 0
      %693 = vmatprep.subr.bf16.mxu0 0
      %694 = vmatpush1.bf16.msra.mxu0 0
      %695 = vmatprep.subr.bf16.mxu0 0
      %696 = vmatpush1.bf16.msra.mxu0 %v676
      %697 = vmatprep.subr.bf16.mxu0 0
      %698 = vmatpush2.bf16.msra.mxu0 0
      %699 = vmatprep.subr.bf16.mxu0 0
      %700 = vmatpush2.bf16.msra.mxu0 0
      %701 = vmatprep.subr.bf16.mxu0 0
      %702 = vmatpush2.bf16.msra.mxu0 0
      %703 = vmatprep.subr.bf16.mxu0 0
      %704 = vmatpush2.bf16.msra.mxu0 0
      %705 = vmatprep.subr.bf16.mxu0 0
      %706 = vmatpush2.bf16.msra.mxu0 0
      %707 = vmatprep.subr.bf16.mxu0 0
      %708 = vmatpush2.bf16.msra.mxu0 0
      %709 = vmatprep.subr.bf16.mxu0 0
      %710 = vmatpush2.bf16.msra.mxu0 0
      %711 = vmatprep.subr.bf16.mxu0 0
      %712 = vmatpush2.bf16.msra.mxu0 0
      %713 = vmatprep.mubr.bf16.mxu0 0
      %714 = vmatmul.mubr.bf16.gmra.mxu0 %v679
      %v715 = vpop.f32.mrf.mxu0
      %v716 = vadd.f32 0.0, %v715
      %v717 = vpop.f32.mrf.mxu0
      %v718 = vpop.f32.mrf.mxu0
      %v719 = vadd.f32 0.0, %v718
      %v720 = vpop.f32.mrf.mxu0
      %721 = vdwg.mxu0
      %v722 = vrcp.pop %v668
      %v723 = vrcp.pop %v671
      %v724 = vmul.f32 %v716, %v722
      %v725 = vmul.f32 %v719, %v723
      %726 = vrot.lane.b32.xlu0 %v574, 80
      %v727 = vpop.permute.xlu0 %726
      %728 = vrot.lane.b32.xlu0 %v575, 80
      %v729 = vpop.permute.xlu0 %728
      %732 = vrot.lane.b32.xlu0 %v492, 112
      %v733 = vpop.permute.xlu0 %732
      %734 = vrot.lane.b32.xlu0 %v496, 112
      %v735 = vpop.permute.xlu0 %734
      %v738 = vsel %vm522, %v727, %v733
      %v739 = vsel %vm522, %v729, %v735
      %v740 = vmul.f32 %v492, %v548
      %v741 = vmul.f32 %v496, %v550
      %v742 = vmul.f32 %v738, %v502
      %v743 = vmul.f32 %v739, %v503
      %746 = vrot.lane.b32.xlu0 %v742, 32
      %v747 = vpop.permute.xlu0 %746
      %748 = vrot.lane.b32.xlu0 %v743, 32
      %v749 = vpop.permute.xlu0 %748
      %v752 = vadd.f32 %v740, %v747
      %v753 = vadd.f32 %v741, %v749
      %v754 = vmul.f32 %v752, 0.17677669
      %v755 = vmul.f32 %v753, 0.17677669
      %v756 = vpack.c.bf16 %v755, %v754
      %758 = vrot.lane.b32.xlu0 %v756, 96
      %v759 = vpop.permute.xlu0 %758
      %v761 = vsel %vm604, %v759, 0
      %763 = vmatprep.subr.bf16.mxu0 0
      %764 = vmatpush1.bf16.xpose.msra.mxu0 0
      %765 = vmatprep.subr.bf16.mxu0 0
      %766 = vmatpush1.bf16.xpose.msra.mxu0 0
      %767 = vmatprep.subr.bf16.mxu0 0
      %768 = vmatpush1.bf16.xpose.msra.mxu0 0
      %769 = vmatprep.subr.bf16.mxu0 0
      %770 = vmatpush1.bf16.xpose.msra.mxu0 0
      %771 = vmatprep.subr.bf16.mxu0 0
      %772 = vmatpush1.bf16.xpose.msra.mxu0 0
      %773 = vmatprep.subr.bf16.mxu0 0
      %774 = vmatpush1.bf16.xpose.msra.mxu0 0
      %775 = vmatprep.subr.bf16.mxu0 0
      %776 = vmatpush1.bf16.xpose.msra.mxu0 0
      %777 = vmatprep.subr.bf16.mxu0 0
      %778 = vmatpush1.bf16.xpose.msra.mxu0 %v609
      %779 = vmatprep.subr.bf16.mxu0 0
      %780 = vmatpush2.bf16.xpose.msra.mxu0 0
      %781 = vmatprep.subr.bf16.mxu0 0
      %782 = vmatpush2.bf16.xpose.msra.mxu0 0
      %783 = vmatprep.subr.bf16.mxu0 0
      %784 = vmatpush2.bf16.xpose.msra.mxu0 0
      %785 = vmatprep.subr.bf16.mxu0 0
      %786 = vmatpush2.bf16.xpose.msra.mxu0 0
      %787 = vmatprep.subr.bf16.mxu0 0
      %788 = vmatpush2.bf16.xpose.msra.mxu0 0
      %789 = vmatprep.subr.bf16.mxu0 0
      %790 = vmatpush2.bf16.xpose.msra.mxu0 0
      %791 = vmatprep.subr.bf16.mxu0 0
      %792 = vmatpush2.bf16.xpose.msra.mxu0 0
      %793 = vmatprep.subr.bf16.mxu0 0
      %794 = vmatpush2.bf16.xpose.msra.mxu0 0
      %795 = vmatprep.mubr.bf16.mxu0 0
      %796 = vmatmul.mubr.bf16.gmra.mxu0 %v761
      %v797 = vpop.f32.mrf.mxu0
      %v798 = vadd.f32 0.0, %v797
      %v799 = vpop.f32.mrf.mxu0
      %v800 = vpop.f32.mrf.mxu0
      %v801 = vadd.f32 0.0, %v800
      %v802 = vpop.f32.mrf.mxu0
      %803 = vdwg.mxu0
      %v804 = vsel %vm572, %v798, -1e+30
      %v805 = vsel %vm573, %v801, -1e+30
      %v806 = vsel %vm522, %v804, -inf
      %807 = vmax.xlane.f32.xlu0 %v806
      %v808 = vpop.xlane.xlu0 %807
      %v809 = vsel %vm522, %v805, -inf
      %810 = vmax.xlane.f32.xlu0 %v809
      %v811 = vpop.xlane.xlu0 %810
      %v812 = vsub.f32 %v804, %v808
      %v813 = vsub.f32 %v805, %v811
      %v814 = vmul.f32 %v812, 1.442695
      %v815 = vpow.pop %v814
      %v816 = vmul.f32 %v813, 1.442695
      %v817 = vpow.pop %v816
      %v818 = vsel %vm522, %v815, 0.0
      %819 = vadd.xlane.f32.xlu0 %v818
      %v820 = vpop.xlane.xlu0 %819
      %v821 = vsel %vm522, %v817, 0.0
      %822 = vadd.xlane.f32.xlu0 %v821
      %v823 = vpop.xlane.xlu0 %822
      %v824 = vpack.c.bf16 %v817, %v815
      %v826 = vsel %vm522, %v824, 0
      %828 = vmatprep.subr.bf16.mxu0 0
      %829 = vmatpush1.bf16.msra.mxu0 0
      %830 = vmatprep.subr.bf16.mxu0 0
      %831 = vmatpush1.bf16.msra.mxu0 0
      %832 = vmatprep.subr.bf16.mxu0 0
      %833 = vmatpush1.bf16.msra.mxu0 0
      %834 = vmatprep.subr.bf16.mxu0 0
      %835 = vmatpush1.bf16.msra.mxu0 0
      %836 = vmatprep.subr.bf16.mxu0 0
      %837 = vmatpush1.bf16.msra.mxu0 0
      %838 = vmatprep.subr.bf16.mxu0 0
      %839 = vmatpush1.bf16.msra.mxu0 0
      %840 = vmatprep.subr.bf16.mxu0 0
      %841 = vmatpush1.bf16.msra.mxu0 0
      %842 = vmatprep.subr.bf16.mxu0 0
      %843 = vmatpush1.bf16.msra.mxu0 %v676
      %844 = vmatprep.subr.bf16.mxu0 0
      %845 = vmatpush2.bf16.msra.mxu0 0
      %846 = vmatprep.subr.bf16.mxu0 0
      %847 = vmatpush2.bf16.msra.mxu0 0
      %848 = vmatprep.subr.bf16.mxu0 0
      %849 = vmatpush2.bf16.msra.mxu0 0
      %850 = vmatprep.subr.bf16.mxu0 0
      %851 = vmatpush2.bf16.msra.mxu0 0
      %852 = vmatprep.subr.bf16.mxu0 0
      %853 = vmatpush2.bf16.msra.mxu0 0
      %854 = vmatprep.subr.bf16.mxu0 0
      %855 = vmatpush2.bf16.msra.mxu0 0
      %856 = vmatprep.subr.bf16.mxu0 0
      %857 = vmatpush2.bf16.msra.mxu0 0
      %858 = vmatprep.subr.bf16.mxu0 0
      %859 = vmatpush2.bf16.msra.mxu0 0
      %860 = vmatprep.mubr.bf16.mxu0 0
      %861 = vmatmul.mubr.bf16.gmra.mxu0 %v826
      %v862 = vpop.f32.mrf.mxu0
      %v863 = vadd.f32 0.0, %v862
      %v864 = vpop.f32.mrf.mxu0
      %v865 = vpop.f32.mrf.mxu0
      %v866 = vadd.f32 0.0, %v865
      %v867 = vpop.f32.mrf.mxu0
      %868 = vdwg.mxu0
      %v869 = vrcp.pop %v820
      %v870 = vrcp.pop %v823
      %v871 = vmul.f32 %v863, %v869
      %v872 = vmul.f32 %v866, %v870
      %873 = vrot.lane.b32.xlu0 %v574, 48
      %v874 = vpop.permute.xlu0 %873
      %875 = vrot.lane.b32.xlu0 %v575, 48
      %v876 = vpop.permute.xlu0 %875
      %879 = vrot.lane.b32.xlu0 %v492, 80
      %v880 = vpop.permute.xlu0 %879
      %881 = vrot.lane.b32.xlu0 %v496, 80
      %v882 = vpop.permute.xlu0 %881
      %v885 = vsel %vm522, %v874, %v880
      %v886 = vsel %vm522, %v876, %v882
      %887 = vrot.lane.b32.xlu0 %v500, 64
      %v888 = vpop.permute.xlu0 %887
      %889 = vrot.lane.b32.xlu0 %v501, 64
      %v890 = vpop.permute.xlu0 %889
      %v893 = vmul.f32 %v492, %v888
      %v894 = vmul.f32 %v496, %v890
      %v895 = vmul.f32 %v885, %v502
      %v896 = vmul.f32 %v886, %v503
      %899 = vrot.lane.b32.xlu0 %v895, 64
      %v900 = vpop.permute.xlu0 %899
      %901 = vrot.lane.b32.xlu0 %v896, 64
      %v902 = vpop.permute.xlu0 %901
      %v905 = vadd.f32 %v893, %v900
      %v906 = vadd.f32 %v894, %v902
      %v907 = vmul.f32 %v905, 0.17677669
      %v908 = vmul.f32 %v906, 0.17677669
      %v909 = vpack.c.bf16 %v908, %v907
      %v910 = vpack.c.bf16 %v566, %v565
      %912 = vrot.lane.b32.xlu0 %v909, 64
      %v913 = vpop.permute.xlu0 %912
      %915 = vrot.lane.b32.xlu0 %v910, 96
      %v916 = vpop.permute.xlu0 %915
      %v918 = vsel %vm604, %v913, 0
      %v921 = vsel %vm604, %v916, 0
      %923 = vmatprep.subr.bf16.mxu0 0
      %924 = vmatpush1.bf16.xpose.msra.mxu0 0
      %925 = vmatprep.subr.bf16.mxu0 0
      %926 = vmatpush1.bf16.xpose.msra.mxu0 0
      %927 = vmatprep.subr.bf16.mxu0 0
      %928 = vmatpush1.bf16.xpose.msra.mxu0 0
      %929 = vmatprep.subr.bf16.mxu0 0
      %930 = vmatpush1.bf16.xpose.msra.mxu0 0
      %931 = vmatprep.subr.bf16.mxu0 0
      %932 = vmatpush1.bf16.xpose.msra.mxu0 0
      %933 = vmatprep.subr.bf16.mxu0 0
      %934 = vmatpush1.bf16.xpose.msra.mxu0 0
      %935 = vmatprep.subr.bf16.mxu0 0
      %936 = vmatpush1.bf16.xpose.msra.mxu0 0
      %937 = vmatprep.subr.bf16.mxu0 0
      %938 = vmatpush1.bf16.xpose.msra.mxu0 %v921
      %939 = vmatprep.subr.bf16.mxu0 0
      %940 = vmatpush2.bf16.xpose.msra.mxu0 0
      %941 = vmatprep.subr.bf16.mxu0 0
      %942 = vmatpush2.bf16.xpose.msra.mxu0 0
      %943 = vmatprep.subr.bf16.mxu0 0
      %944 = vmatpush2.bf16.xpose.msra.mxu0 0
      %945 = vmatprep.subr.bf16.mxu0 0
      %946 = vmatpush2.bf16.xpose.msra.mxu0 0
      %947 = vmatprep.subr.bf16.mxu0 0
      %948 = vmatpush2.bf16.xpose.msra.mxu0 0
      %949 = vmatprep.subr.bf16.mxu0 0
      %950 = vmatpush2.bf16.xpose.msra.mxu0 0
      %951 = vmatprep.subr.bf16.mxu0 0
      %952 = vmatpush2.bf16.xpose.msra.mxu0 0
      %953 = vmatprep.subr.bf16.mxu0 0
      %954 = vmatpush2.bf16.xpose.msra.mxu0 0
      %955 = vmatprep.mubr.bf16.mxu0 0
      %956 = vmatmul.mubr.bf16.gmra.mxu0 %v918
      %v957 = vpop.f32.mrf.mxu0
      %v958 = vadd.f32 0.0, %v957
      %v959 = vpop.f32.mrf.mxu0
      %v960 = vpop.f32.mrf.mxu0
      %v961 = vadd.f32 0.0, %v960
      %v962 = vpop.f32.mrf.mxu0
      %963 = vdwg.mxu0
      %v964 = vsel %vm572, %v958, -1e+30
      %v965 = vsel %vm573, %v961, -1e+30
      %v966 = vsel %vm522, %v964, -inf
      %967 = vmax.xlane.f32.xlu0 %v966
      %v968 = vpop.xlane.xlu0 %967
      %v969 = vsel %vm522, %v965, -inf
      %970 = vmax.xlane.f32.xlu0 %v969
      %v971 = vpop.xlane.xlu0 %970
      %v972 = vsub.f32 %v964, %v968
      %v973 = vsub.f32 %v965, %v971
      %v974 = vmul.f32 %v972, 1.442695
      %v975 = vpow.pop %v974
      %v976 = vmul.f32 %v973, 1.442695
      %v977 = vpow.pop %v976
      %v978 = vsel %vm522, %v975, 0.0
      %979 = vadd.xlane.f32.xlu0 %v978
      %v980 = vpop.xlane.xlu0 %979
      %v981 = vsel %vm522, %v977, 0.0
      %982 = vadd.xlane.f32.xlu0 %v981
      %v983 = vpop.xlane.xlu0 %982
      %v984 = vpack.c.bf16 %v977, %v975
      %985 = vrot.lane.b32.xlu0 %v673, 32
      %v986 = vpop.permute.xlu0 %985
      %v989 = vsel %vm522, %v984, 0
      %991 = vmatprep.subr.bf16.mxu0 0
      %992 = vmatpush1.bf16.msra.mxu0 0
      %993 = vmatprep.subr.bf16.mxu0 0
      %994 = vmatpush1.bf16.msra.mxu0 0
      %995 = vmatprep.subr.bf16.mxu0 0
      %996 = vmatpush1.bf16.msra.mxu0 0
      %997 = vmatprep.subr.bf16.mxu0 0
      %998 = vmatpush1.bf16.msra.mxu0 0
      %999 = vmatprep.subr.bf16.mxu0 0
      %1000 = vmatpush1.bf16.msra.mxu0 0
      %1001 = vmatprep.subr.bf16.mxu0 0
      %1002 = vmatpush1.bf16.msra.mxu0 0
      %1003 = vmatprep.subr.bf16.mxu0 0
      %1004 = vmatpush1.bf16.msra.mxu0 0
      %1005 = vmatprep.subr.bf16.mxu0 0
      %1006 = vmatpush1.bf16.msra.mxu0 %v986
      %1007 = vmatprep.subr.bf16.mxu0 0
      %1008 = vmatpush2.bf16.msra.mxu0 0
      %1009 = vmatprep.subr.bf16.mxu0 0
      %1010 = vmatpush2.bf16.msra.mxu0 0
      %1011 = vmatprep.subr.bf16.mxu0 0
      %1012 = vmatpush2.bf16.msra.mxu0 0
      %1013 = vmatprep.subr.bf16.mxu0 0
      %1014 = vmatpush2.bf16.msra.mxu0 0
      %1015 = vmatprep.subr.bf16.mxu0 0
      %1016 = vmatpush2.bf16.msra.mxu0 0
      %1017 = vmatprep.subr.bf16.mxu0 0
      %1018 = vmatpush2.bf16.msra.mxu0 0
      %1019 = vmatprep.subr.bf16.mxu0 0
      %1020 = vmatpush2.bf16.msra.mxu0 0
      %1021 = vmatprep.subr.bf16.mxu0 0
      %1022 = vmatpush2.bf16.msra.mxu0 0
      %1023 = vmatprep.mubr.bf16.mxu0 0
      %1024 = vmatmul.mubr.bf16.gmra.mxu0 %v989
      %v1025 = vpop.f32.mrf.mxu0
      %v1026 = vadd.f32 0.0, %v1025
      %v1027 = vpop.f32.mrf.mxu0
      %v1028 = vpop.f32.mrf.mxu0
      %v1029 = vadd.f32 0.0, %v1028
      %v1030 = vpop.f32.mrf.mxu0
      %1031 = vdwg.mxu0
      %v1032 = vrcp.pop %v980
      %v1033 = vrcp.pop %v983
      %v1034 = vmul.f32 %v1026, %v1032
      %v1035 = vmul.f32 %v1029, %v1033
      %1036 = vrot.lane.b32.xlu0 %v574, 16
      %v1037 = vpop.permute.xlu0 %1036
      %1038 = vrot.lane.b32.xlu0 %v575, 16
      %v1039 = vpop.permute.xlu0 %1038
      %1042 = vrot.lane.b32.xlu0 %v492, 48
      %v1043 = vpop.permute.xlu0 %1042
      %1044 = vrot.lane.b32.xlu0 %v496, 48
      %v1045 = vpop.permute.xlu0 %1044
      %v1048 = vsel %vm522, %v1037, %v1043
      %v1049 = vsel %vm522, %v1039, %v1045
      %1050 = vrot.lane.b32.xlu0 %v500, 96
      %v1051 = vpop.permute.xlu0 %1050
      %1052 = vrot.lane.b32.xlu0 %v501, 96
      %v1053 = vpop.permute.xlu0 %1052
      %v1056 = vmul.f32 %v492, %v1051
      %v1057 = vmul.f32 %v496, %v1053
      %v1058 = vmul.f32 %v1048, %v502
      %v1059 = vmul.f32 %v1049, %v503
      %1062 = vrot.lane.b32.xlu0 %v1058, 96
      %v1063 = vpop.permute.xlu0 %1062
      %1064 = vrot.lane.b32.xlu0 %v1059, 96
      %v1065 = vpop.permute.xlu0 %1064
      %v1068 = vadd.f32 %v1056, %v1063
      %v1069 = vadd.f32 %v1057, %v1065
      %v1070 = vmul.f32 %v1068, 0.17677669
      %v1071 = vmul.f32 %v1069, 0.17677669
      %v1072 = vpack.c.bf16 %v1071, %v1070
      %1074 = vrot.lane.b32.xlu0 %v1072, 32
      %v1075 = vpop.permute.xlu0 %1074
      %v1077 = vsel %vm604, %v1075, 0
      %1079 = vmatprep.subr.bf16.mxu0 0
      %1080 = vmatpush1.bf16.xpose.msra.mxu0 0
      %1081 = vmatprep.subr.bf16.mxu0 0
      %1082 = vmatpush1.bf16.xpose.msra.mxu0 0
      %1083 = vmatprep.subr.bf16.mxu0 0
      %1084 = vmatpush1.bf16.xpose.msra.mxu0 0
      %1085 = vmatprep.subr.bf16.mxu0 0
      %1086 = vmatpush1.bf16.xpose.msra.mxu0 0
      %1087 = vmatprep.subr.bf16.mxu0 0
      %1088 = vmatpush1.bf16.xpose.msra.mxu0 0
      %1089 = vmatprep.subr.bf16.mxu0 0
      %1090 = vmatpush1.bf16.xpose.msra.mxu0 0
      %1091 = vmatprep.subr.bf16.mxu0 0
      %1092 = vmatpush1.bf16.xpose.msra.mxu0 0
      %1093 = vmatprep.subr.bf16.mxu0 0
      %1094 = vmatpush1.bf16.xpose.msra.mxu0 %v921
      %1095 = vmatprep.subr.bf16.mxu0 0
      %1096 = vmatpush2.bf16.xpose.msra.mxu0 0
      %1097 = vmatprep.subr.bf16.mxu0 0
      %1098 = vmatpush2.bf16.xpose.msra.mxu0 0
      %1099 = vmatprep.subr.bf16.mxu0 0
      %1100 = vmatpush2.bf16.xpose.msra.mxu0 0
      %1101 = vmatprep.subr.bf16.mxu0 0
      %1102 = vmatpush2.bf16.xpose.msra.mxu0 0
      %1103 = vmatprep.subr.bf16.mxu0 0
      %1104 = vmatpush2.bf16.xpose.msra.mxu0 0
      %1105 = vmatprep.subr.bf16.mxu0 0
      %1106 = vmatpush2.bf16.xpose.msra.mxu0 0
      %1107 = vmatprep.subr.bf16.mxu0 0
      %1108 = vmatpush2.bf16.xpose.msra.mxu0 0
      %1109 = vmatprep.subr.bf16.mxu0 0
      %1110 = vmatpush2.bf16.xpose.msra.mxu0 0
      %1111 = vmatprep.mubr.bf16.mxu0 0
      %1112 = vmatmul.mubr.bf16.gmra.mxu0 %v1077
      %v1113 = vpop.f32.mrf.mxu0
      %v1114 = vadd.f32 0.0, %v1113
      %v1115 = vpop.f32.mrf.mxu0
      %v1116 = vpop.f32.mrf.mxu0
      %v1117 = vadd.f32 0.0, %v1116
      %v1118 = vpop.f32.mrf.mxu0
      %1119 = vdwg.mxu0
      %v1120 = vsel %vm572, %v1114, -1e+30
      %v1121 = vsel %vm573, %v1117, -1e+30
      %v1122 = vsel %vm522, %v1120, -inf
      %1123 = vmax.xlane.f32.xlu0 %v1122
      %v1124 = vpop.xlane.xlu0 %1123
      %v1125 = vsel %vm522, %v1121, -inf
      %1126 = vmax.xlane.f32.xlu0 %v1125
      %v1127 = vpop.xlane.xlu0 %1126
      %v1128 = vsub.f32 %v1120, %v1124
      %v1129 = vsub.f32 %v1121, %v1127
      %v1130 = vmul.f32 %v1128, 1.442695
      %v1131 = vpow.pop %v1130
      %v1132 = vmul.f32 %v1129, 1.442695
      %v1133 = vpow.pop %v1132
      %v1134 = vsel %vm522, %v1131, 0.0
      %1135 = vadd.xlane.f32.xlu0 %v1134
      %v1136 = vpop.xlane.xlu0 %1135
      %v1137 = vsel %vm522, %v1133, 0.0
      %1138 = vadd.xlane.f32.xlu0 %v1137
      %v1139 = vpop.xlane.xlu0 %1138
      %v1140 = vpack.c.bf16 %v1133, %v1131
      %v1142 = vsel %vm522, %v1140, 0
      %1144 = vmatprep.subr.bf16.mxu0 0
      %1145 = vmatpush1.bf16.msra.mxu0 0
      %1146 = vmatprep.subr.bf16.mxu0 0
      %1147 = vmatpush1.bf16.msra.mxu0 0
      %1148 = vmatprep.subr.bf16.mxu0 0
      %1149 = vmatpush1.bf16.msra.mxu0 0
      %1150 = vmatprep.subr.bf16.mxu0 0
      %1151 = vmatpush1.bf16.msra.mxu0 0
      %1152 = vmatprep.subr.bf16.mxu0 0
      %1153 = vmatpush1.bf16.msra.mxu0 0
      %1154 = vmatprep.subr.bf16.mxu0 0
      %1155 = vmatpush1.bf16.msra.mxu0 0
      %1156 = vmatprep.subr.bf16.mxu0 0
      %1157 = vmatpush1.bf16.msra.mxu0 0
      %1158 = vmatprep.subr.bf16.mxu0 0
      %1159 = vmatpush1.bf16.msra.mxu0 %v986
      %1160 = vmatprep.subr.bf16.mxu0 0
      %1161 = vmatpush2.bf16.msra.mxu0 0
      %1162 = vmatprep.subr.bf16.mxu0 0
      %1163 = vmatpush2.bf16.msra.mxu0 0
      %1164 = vmatprep.subr.bf16.mxu0 0
      %1165 = vmatpush2.bf16.msra.mxu0 0
      %1166 = vmatprep.subr.bf16.mxu0 0
      %1167 = vmatpush2.bf16.msra.mxu0 0
      %1168 = vmatprep.subr.bf16.mxu0 0
      %1169 = vmatpush2.bf16.msra.mxu0 0
      %1170 = vmatprep.subr.bf16.mxu0 0
      %1171 = vmatpush2.bf16.msra.mxu0 0
      %1172 = vmatprep.subr.bf16.mxu0 0
      %1173 = vmatpush2.bf16.msra.mxu0 0
      %1174 = vmatprep.subr.bf16.mxu0 0
      %1175 = vmatpush2.bf16.msra.mxu0 0
      %1176 = vmatprep.mubr.bf16.mxu0 0
      %1177 = vmatmul.mubr.bf16.gmra.mxu0 %v1142
      %v1178 = vpop.f32.mrf.mxu0
      %v1179 = vadd.f32 0.0, %v1178
      %v1180 = vpop.f32.mrf.mxu0
      %v1181 = vpop.f32.mrf.mxu0
      %v1182 = vadd.f32 0.0, %v1181
      %v1183 = vpop.f32.mrf.mxu0
      %1184 = vdwg.mxu0
      %v1185 = vrcp.pop %v1136
      %v1186 = vrcp.pop %v1139
      %v1187 = vmul.f32 %v1179, %v1185
      %v1188 = vmul.f32 %v1182, %v1186
      %1191 = vrot.lane.b32.xlu0 %v871, 32
      %v1192 = vpop.permute.xlu0 %1191
      %1193 = vrot.lane.b32.xlu0 %v872, 32
      %v1194 = vpop.permute.xlu0 %1193
      %1199 = vrot.lane.b32.xlu0 %v1034, 64
      %v1200 = vpop.permute.xlu0 %1199
      %1201 = vrot.lane.b32.xlu0 %v1035, 64
      %v1202 = vpop.permute.xlu0 %1201
      %1207 = vrot.lane.b32.xlu0 %v1187, 96
      %v1208 = vpop.permute.xlu0 %1207
      %1209 = vrot.lane.b32.xlu0 %v1188, 96
      %v1210 = vpop.permute.xlu0 %1209
      %v1213 = vsel %vm604, %v724, %v1192
      %v1214 = vsel %vm604, %v725, %v1194
      %vm1215 = vcmask 523264
      %v1216 = vsel %vm1215, %v1213, %v1200
      %v1217 = vsel %vm1215, %v1214, %v1202
      %vm1218 = vcmask 785408
      %v1219 = vsel %vm1218, %v1216, %v1208
      %v1220 = vsel %vm1218, %v1217, %v1210
      %v1221 = vld [vmem:[%s4] sm:$0xf]
      %v1222 = vld [vmem:[%s4 + $0x4] sm:$0xf]
      %v1223 = vld [vmem:[%s4 + $0x8] sm:$0xf]
      %v1224 = vld [vmem:[%s4 + $0xc] sm:$0xf]
      %v1225 = vld [vmem:[%s4 + $0x10] sm:$0xf]
      %v1226 = vld [vmem:[%s4 + $0x14] sm:$0xf]
      %v1227 = vld [vmem:[%s4 + $0x18] sm:$0xf]
      %v1228 = vld [vmem:[%s4 + $0x1c] sm:$0xf]
      %v1229 = vld [vmem:[%s4 + $0x20] sm:$0xf]
      %v1230 = vld [vmem:[%s4 + $0x24] sm:$0xf]
      %v1231 = vld [vmem:[%s4 + $0x28] sm:$0xf]
      %v1232 = vld [vmem:[%s4 + $0x2c] sm:$0xf]
      %v1233 = vld [vmem:[%s4 + $0x30] sm:$0xf]
      %v1234 = vld [vmem:[%s4 + $0x34] sm:$0xf]
      %v1235 = vld [vmem:[%s4 + $0x38] sm:$0xf]
      %v1236 = vld [vmem:[%s4 + $0x3c] sm:$0xf]
      %v1237 = vpack.c.bf16 %v1220, %v1219
      %v1254 = vunpack.c.l.b16 %v1221
      %v1255 = vunpack.c.l.b16 %v1222
      %v1256 = vunpack.c.l.b16 %v1223
      %v1257 = vunpack.c.l.b16 %v1224
      %v1258 = vunpack.c.l.b16 %v1225
      %v1259 = vunpack.c.l.b16 %v1226
      %v1260 = vunpack.c.l.b16 %v1227
      %v1261 = vunpack.c.l.b16 %v1228
      %v1262 = vunpack.c.l.b16 %v1229
      %v1263 = vunpack.c.l.b16 %v1230
      %v1264 = vunpack.c.l.b16 %v1231
      %v1265 = vunpack.c.l.b16 %v1232
      %v1266 = vunpack.c.l.b16 %v1233
      %v1267 = vunpack.c.l.b16 %v1234
      %v1268 = vunpack.c.l.b16 %v1235
      %v1269 = vunpack.c.l.b16 %v1236
      %v1270 = vpack.c.b16 %v1255, %v1254
      %v1271 = vpack.c.b16 %v1257, %v1256
      %v1272 = vpack.c.b16 %v1259, %v1258
      %v1273 = vpack.c.b16 %v1261, %v1260
      %v1274 = vpack.c.b16 %v1263, %v1262
      %v1275 = vpack.c.b16 %v1265, %v1264
      %v1276 = vpack.c.b16 %v1267, %v1266
      %v1277 = vpack.c.b16 %v1269, %v1268
      %1286 = vmatprep.subr.bf16.mxu0 0
      %1287 = vmatpush1.bf16.msra.mxu0 %v1277
      %1288 = vmatprep.subr.bf16.mxu0 0
      %1289 = vmatpush1.bf16.msra.mxu0 %v1276
      %1290 = vmatprep.subr.bf16.mxu0 0
      %1291 = vmatpush1.bf16.msra.mxu0 %v1275
      %1292 = vmatprep.subr.bf16.mxu0 0
      %1293 = vmatpush1.bf16.msra.mxu0 %v1274
      %1294 = vmatprep.subr.bf16.mxu0 0
      %1295 = vmatpush1.bf16.msra.mxu0 %v1273
      %1296 = vmatprep.subr.bf16.mxu0 0
      %1297 = vmatpush1.bf16.msra.mxu0 %v1272
      %1298 = vmatprep.subr.bf16.mxu0 0
      %1299 = vmatpush1.bf16.msra.mxu0 %v1271
      %1300 = vmatprep.subr.bf16.mxu0 0
      %1301 = vmatpush1.bf16.msra.mxu0 %v1270
      %1302 = vmatprep.subr.bf16.mxu0 0
      %1303 = vmatpush2.bf16.msra.mxu0 0
      %1304 = vmatprep.subr.bf16.mxu0 0
      %1305 = vmatpush2.bf16.msra.mxu0 0
      %1306 = vmatprep.subr.bf16.mxu0 0
      %1307 = vmatpush2.bf16.msra.mxu0 0
      %1308 = vmatprep.subr.bf16.mxu0 0
      %1309 = vmatpush2.bf16.msra.mxu0 0
      %1310 = vmatprep.subr.bf16.mxu0 0
      %1311 = vmatpush2.bf16.msra.mxu0 0
      %1312 = vmatprep.subr.bf16.mxu0 0
      %1313 = vmatpush2.bf16.msra.mxu0 0
      %1314 = vmatprep.subr.bf16.mxu0 0
      %1315 = vmatpush2.bf16.msra.mxu0 0
      %1316 = vmatprep.subr.bf16.mxu0 0
      %1317 = vmatpush2.bf16.msra.mxu0 0
      %1318 = vmatprep.mubr.bf16.mxu0 0
      %1319 = vmatmul.mubr.bf16.gmra.mxu0 %v1237
      %v1320 = vpop.f32.mrf.mxu0
      %v1321 = vadd.f32 0.0, %v1320
      %v1322 = vpop.f32.mrf.mxu0
      %v1323 = vpop.f32.mrf.mxu0
      %v1324 = vadd.f32 0.0, %v1323
      %v1325 = vpop.f32.mrf.mxu0
      %1326 = vdwg.mxu0
      %v1327 = vadd.f32 %v334, %v1321
      %v1328 = vadd.f32 %v335, %v1324
      %v1329 = vmul.f32 %v1327, %v1327
      %v1330 = vmul.f32 %v1328, %v1328
      %1331 = vadd.xlane.f32.xlu0 %v1329
      %v1332 = vpop.xlane.xlu0 %1331
      %1333 = vadd.xlane.f32.xlu0 %v1330
      %v1334 = vpop.xlane.xlu0 %1333
      %v1335 = vmul.f32 %v1332, %v342
      %v1336 = vmul.f32 %v1334, %v342
      %v1337 = vadd.f32 %v1335, 1e-06
      %v1338 = vadd.f32 %v1336, 1e-06
      %v1339 = vrsqrt.pop %v1337
      %v1340 = vrsqrt.pop %v1338
      %v1341 = vmul.f32 %v1327, %v1339
      %v1342 = vmul.f32 %v1328, %v1340
      %v1343 = vld [vmem:[%s2] sm:$0x1]
      %v1345 = vlaneseq
      %v1346 = vshrl.u32 %v1345, 7
      %v1347 = vsub.s32 0, %v1346
      %v1348 = vrot.slane %v1343, %v1347
      %v1350 = vmul.f32 %v1341, %v1348
      %v1351 = vmul.f32 %v1342, %v1348
      %v1352 = vld [vmem:[%s5] sm:$0xff]
      %v1353 = vld [vmem:[%s5 + $0x8] sm:$0xff]
      %v1354 = vld [vmem:[%s5 + $0x10] sm:$0xff]
      %v1355 = vld [vmem:[%s5 + $0x18] sm:$0xff]
      %v1356 = vld [vmem:[%s5 + $0x20] sm:$0xff]
      %v1357 = vld [vmem:[%s5 + $0x28] sm:$0xff]
      %v1358 = vld [vmem:[%s5 + $0x30] sm:$0xff]
      %v1359 = vld [vmem:[%s5 + $0x38] sm:$0xff]
      %v1360 = vld [vmem:[%s5 + $0x40] sm:$0xff]
      %v1361 = vld [vmem:[%s5 + $0x48] sm:$0xff]
      %v1362 = vld [vmem:[%s5 + $0x50] sm:$0xff]
      %v1363 = vld [vmem:[%s5 + $0x58] sm:$0xff]
      %v1364 = vld [vmem:[%s5 + $0x60] sm:$0xff]
      %v1365 = vld [vmem:[%s5 + $0x68] sm:$0xff]
      %v1366 = vld [vmem:[%s5 + $0x70] sm:$0xff]
      %v1367 = vld [vmem:[%s5 + $0x78] sm:$0xff]
      %v1368 = vld [vmem:[%s5 + $0x80] sm:$0xff]
      %v1369 = vld [vmem:[%s5 + $0x88] sm:$0xff]
      %v1370 = vld [vmem:[%s5 + $0x90] sm:$0xff]
      %v1371 = vld [vmem:[%s5 + $0x98] sm:$0xff]
      %v1372 = vld [vmem:[%s5 + $0xa0] sm:$0xff]
      %v1373 = vld [vmem:[%s5 + $0xa8] sm:$0xff]
      %v1374 = vld [vmem:[%s5 + $0xb0] sm:$0xff]
      %v1375 = vld [vmem:[%s5 + $0xb8] sm:$0xff]
      %v1376 = vld [vmem:[%s5 + $0xc0] sm:$0xff]
      %v1377 = vld [vmem:[%s5 + $0xc8] sm:$0xff]
      %v1378 = vld [vmem:[%s5 + $0xd0] sm:$0xff]
      %v1379 = vld [vmem:[%s5 + $0xd8] sm:$0xff]
      %v1380 = vld [vmem:[%s5 + $0xe0] sm:$0xff]
      %v1381 = vld [vmem:[%s5 + $0xe8] sm:$0xff]
      %v1382 = vld [vmem:[%s5 + $0xf0] sm:$0xff]
      %v1383 = vld [vmem:[%s5 + $0xf8] sm:$0xff]
      %v1384 = vpack.c.bf16 %v1351, %v1350
      %v1417 = vunpack.c.l.b16 %v1352
      %v1418 = vunpack.c.h.b16 %v1352
      %v1419 = vunpack.c.l.b16 %v1353
      %v1420 = vunpack.c.h.b16 %v1353
      %v1421 = vunpack.c.l.b16 %v1354
      %v1422 = vunpack.c.h.b16 %v1354
      %v1423 = vunpack.c.l.b16 %v1355
      %v1424 = vunpack.c.h.b16 %v1355
      %v1425 = vunpack.c.l.b16 %v1356
      %v1426 = vunpack.c.h.b16 %v1356
      %v1427 = vunpack.c.l.b16 %v1357
      %v1428 = vunpack.c.h.b16 %v1357
      %v1429 = vunpack.c.l.b16 %v1358
      %v1430 = vunpack.c.h.b16 %v1358
      %v1431 = vunpack.c.l.b16 %v1359
      %v1432 = vunpack.c.h.b16 %v1359
      %v1433 = vunpack.c.l.b16 %v1360
      %v1434 = vunpack.c.h.b16 %v1360
      %v1435 = vunpack.c.l.b16 %v1361
      %v1436 = vunpack.c.h.b16 %v1361
      %v1437 = vunpack.c.l.b16 %v1362
      %v1438 = vunpack.c.h.b16 %v1362
      %v1439 = vunpack.c.l.b16 %v1363
      %v1440 = vunpack.c.h.b16 %v1363
      %v1441 = vunpack.c.l.b16 %v1364
      %v1442 = vunpack.c.h.b16 %v1364
      %v1443 = vunpack.c.l.b16 %v1365
      %v1444 = vunpack.c.h.b16 %v1365
      %v1445 = vunpack.c.l.b16 %v1366
      %v1446 = vunpack.c.h.b16 %v1366
      %v1447 = vunpack.c.l.b16 %v1367
      %v1448 = vunpack.c.h.b16 %v1367
      %v1449 = vunpack.c.l.b16 %v1368
      %v1450 = vunpack.c.h.b16 %v1368
      %v1451 = vunpack.c.l.b16 %v1369
      %v1452 = vunpack.c.h.b16 %v1369
      %v1453 = vunpack.c.l.b16 %v1370
      %v1454 = vunpack.c.h.b16 %v1370
      %v1455 = vunpack.c.l.b16 %v1371
      %v1456 = vunpack.c.h.b16 %v1371
      %v1457 = vunpack.c.l.b16 %v1372
      %v1458 = vunpack.c.h.b16 %v1372
      %v1459 = vunpack.c.l.b16 %v1373
      %v1460 = vunpack.c.h.b16 %v1373
      %v1461 = vunpack.c.l.b16 %v1374
      %v1462 = vunpack.c.h.b16 %v1374
      %v1463 = vunpack.c.l.b16 %v1375
      %v1464 = vunpack.c.h.b16 %v1375
      %v1465 = vunpack.c.l.b16 %v1376
      %v1466 = vunpack.c.h.b16 %v1376
      %v1467 = vunpack.c.l.b16 %v1377
      %v1468 = vunpack.c.h.b16 %v1377
      %v1469 = vunpack.c.l.b16 %v1378
      %v1470 = vunpack.c.h.b16 %v1378
      %v1471 = vunpack.c.l.b16 %v1379
      %v1472 = vunpack.c.h.b16 %v1379
      %v1473 = vunpack.c.l.b16 %v1380
      %v1474 = vunpack.c.h.b16 %v1380
      %v1475 = vunpack.c.l.b16 %v1381
      %v1476 = vunpack.c.h.b16 %v1381
      %v1477 = vunpack.c.l.b16 %v1382
      %v1478 = vunpack.c.h.b16 %v1382
      %v1479 = vunpack.c.l.b16 %v1383
      %v1480 = vunpack.c.h.b16 %v1383
      %v1481 = vpack.c.b16 %v1421, %v1417
      %v1482 = vpack.c.b16 %v1422, %v1418
      %v1483 = vpack.c.b16 %v1423, %v1419
      %v1484 = vpack.c.b16 %v1424, %v1420
      %v1485 = vpack.c.b16 %v1429, %v1425
      %v1486 = vpack.c.b16 %v1430, %v1426
      %v1487 = vpack.c.b16 %v1431, %v1427
      %v1488 = vpack.c.b16 %v1432, %v1428
      %v1489 = vpack.c.b16 %v1437, %v1433
      %v1490 = vpack.c.b16 %v1438, %v1434
      %v1491 = vpack.c.b16 %v1439, %v1435
      %v1492 = vpack.c.b16 %v1440, %v1436
      %v1493 = vpack.c.b16 %v1445, %v1441
      %v1494 = vpack.c.b16 %v1446, %v1442
      %v1495 = vpack.c.b16 %v1447, %v1443
      %v1496 = vpack.c.b16 %v1448, %v1444
      %v1497 = vpack.c.b16 %v1453, %v1449
      %v1498 = vpack.c.b16 %v1454, %v1450
      %v1499 = vpack.c.b16 %v1455, %v1451
      %v1500 = vpack.c.b16 %v1456, %v1452
      %v1501 = vpack.c.b16 %v1461, %v1457
      %v1502 = vpack.c.b16 %v1462, %v1458
      %v1503 = vpack.c.b16 %v1463, %v1459
      %v1504 = vpack.c.b16 %v1464, %v1460
      %v1505 = vpack.c.b16 %v1469, %v1465
      %v1506 = vpack.c.b16 %v1470, %v1466
      %v1507 = vpack.c.b16 %v1471, %v1467
      %v1508 = vpack.c.b16 %v1472, %v1468
      %v1509 = vpack.c.b16 %v1477, %v1473
      %v1510 = vpack.c.b16 %v1478, %v1474
      %v1511 = vpack.c.b16 %v1479, %v1475
      %v1512 = vpack.c.b16 %v1480, %v1476
      %1545 = vmatprep.subr.bf16.mxu0 %v1510
      %1546 = vmatpush1.bf16.msra.mxu0 %v1509
      %1547 = vmatprep.subr.bf16.mxu0 %v1506
      %1548 = vmatpush1.bf16.msra.mxu0 %v1505
      %1549 = vmatprep.subr.bf16.mxu0 %v1502
      %1550 = vmatpush1.bf16.msra.mxu0 %v1501
      %1551 = vmatprep.subr.bf16.mxu0 %v1498
      %1552 = vmatpush1.bf16.msra.mxu0 %v1497
      %1553 = vmatprep.subr.bf16.mxu0 %v1494
      %1554 = vmatpush1.bf16.msra.mxu0 %v1493
      %1555 = vmatprep.subr.bf16.mxu0 %v1490
      %1556 = vmatpush1.bf16.msra.mxu0 %v1489
      %1557 = vmatprep.subr.bf16.mxu0 %v1486
      %1558 = vmatpush1.bf16.msra.mxu0 %v1485
      %1559 = vmatprep.subr.bf16.mxu0 %v1482
      %1560 = vmatpush1.bf16.msra.mxu0 %v1481
      %1561 = vmatprep.subr.bf16.mxu0 0
      %1562 = vmatpush2.bf16.msra.mxu0 0
      %1563 = vmatprep.subr.bf16.mxu0 0
      %1564 = vmatpush2.bf16.msra.mxu0 0
      %1565 = vmatprep.subr.bf16.mxu0 0
      %1566 = vmatpush2.bf16.msra.mxu0 0
      %1567 = vmatprep.subr.bf16.mxu0 0
      %1568 = vmatpush2.bf16.msra.mxu0 0
      %1569 = vmatprep.subr.bf16.mxu0 0
      %1570 = vmatpush2.bf16.msra.mxu0 0
      %1571 = vmatprep.subr.bf16.mxu0 0
      %1572 = vmatpush2.bf16.msra.mxu0 0
      %1573 = vmatprep.subr.bf16.mxu0 0
      %1574 = vmatpush2.bf16.msra.mxu0 0
      %1575 = vmatprep.subr.bf16.mxu0 0
      %1576 = vmatpush2.bf16.msra.mxu0 0
      %1577 = vmatprep.mubr.bf16.mxu0 0
      %1578 = vmatmul.mubr.bf16.gmra.mxu0 %v1384
      %v1579 = vpop.f32.mrf.mxu0
      %v1580 = vadd.f32 0.0, %v1579
      %v1581 = vpop.f32.mrf.mxu0
      %v1582 = vadd.f32 0.0, %v1581
      %v1583 = vpop.f32.mrf.mxu0
      %v1584 = vadd.f32 0.0, %v1583
      %v1585 = vpop.f32.mrf.mxu0
      %v1586 = vadd.f32 0.0, %v1585
      %1587 = vdwg.mxu0
      %1588 = vmatprep.subr.bf16.mxu0 %v1512
      %1589 = vmatpush1.bf16.msra.mxu0 %v1511
      %1590 = vmatprep.subr.bf16.mxu0 %v1508
      %1591 = vmatpush1.bf16.msra.mxu0 %v1507
      %1592 = vmatprep.subr.bf16.mxu0 %v1504
      %1593 = vmatpush1.bf16.msra.mxu0 %v1503
      %1594 = vmatprep.subr.bf16.mxu0 %v1500
      %1595 = vmatpush1.bf16.msra.mxu0 %v1499
      %1596 = vmatprep.subr.bf16.mxu0 %v1496
      %1597 = vmatpush1.bf16.msra.mxu0 %v1495
      %1598 = vmatprep.subr.bf16.mxu0 %v1492
      %1599 = vmatpush1.bf16.msra.mxu0 %v1491
      %1600 = vmatprep.subr.bf16.mxu0 %v1488
      %1601 = vmatpush1.bf16.msra.mxu0 %v1487
      %1602 = vmatprep.subr.bf16.mxu0 %v1484
      %1603 = vmatpush1.bf16.msra.mxu0 %v1483
      %1604 = vmatprep.subr.bf16.mxu0 0
      %1605 = vmatpush2.bf16.msra.mxu0 0
      %1606 = vmatprep.subr.bf16.mxu0 0
      %1607 = vmatpush2.bf16.msra.mxu0 0
      %1608 = vmatprep.subr.bf16.mxu0 0
      %1609 = vmatpush2.bf16.msra.mxu0 0
      %1610 = vmatprep.subr.bf16.mxu0 0
      %1611 = vmatpush2.bf16.msra.mxu0 0
      %1612 = vmatprep.subr.bf16.mxu0 0
      %1613 = vmatpush2.bf16.msra.mxu0 0
      %1614 = vmatprep.subr.bf16.mxu0 0
      %1615 = vmatpush2.bf16.msra.mxu0 0
      %1616 = vmatprep.subr.bf16.mxu0 0
      %1617 = vmatpush2.bf16.msra.mxu0 0
      %1618 = vmatprep.subr.bf16.mxu0 0
      %1619 = vmatpush2.bf16.msra.mxu0 0
      %1620 = vmatprep.mubr.bf16.mxu0 0
      %1621 = vmatmul.mubr.bf16.gmra.mxu0 %v1384
      %v1622 = vpop.f32.mrf.mxu0
      %v1623 = vadd.f32 0.0, %v1622
      %v1624 = vpop.f32.mrf.mxu0
      %v1625 = vadd.f32 0.0, %v1624
      %v1626 = vpop.f32.mrf.mxu0
      %v1627 = vadd.f32 0.0, %v1626
      %v1628 = vpop.f32.mrf.mxu0
      %v1629 = vadd.f32 0.0, %v1628
      %1630 = vdwg.mxu0
      %v1631 = vxor.u32 %v1580, 2147483648
      %v1632 = vxor.u32 %v1582, 2147483648
      %v1633 = vxor.u32 %v1584, 2147483648
      %v1634 = vxor.u32 %v1586, 2147483648
      %v1635 = vmul.f32 %v1631, 1.442695
      %v1636 = vpow.pop %v1635
      %v1637 = vmul.f32 %v1632, 1.442695
      %v1638 = vpow.pop %v1637
      %v1639 = vmul.f32 %v1633, 1.442695
      %v1640 = vpow.pop %v1639
      %v1641 = vmul.f32 %v1634, 1.442695
      %v1642 = vpow.pop %v1641
      %v1643 = vadd.f32 %v1636, 1.0
      %v1644 = vadd.f32 %v1638, 1.0
      %v1645 = vadd.f32 %v1640, 1.0
      %v1646 = vadd.f32 %v1642, 1.0
      %v1647 = vrcp.pop %v1643
      %v1648 = vmul.f32 1.0, %v1647
      %v1649 = vrcp.pop %v1644
      %v1650 = vmul.f32 1.0, %v1649
      %v1651 = vrcp.pop %v1645
      %v1652 = vmul.f32 1.0, %v1651
      %v1653 = vrcp.pop %v1646
      %v1654 = vmul.f32 1.0, %v1653
      %v1655 = vmul.f32 %v1580, %v1648
      %v1656 = vmul.f32 %v1582, %v1650
      %v1657 = vmul.f32 %v1584, %v1652
      %v1658 = vmul.f32 %v1586, %v1654
      %v1659 = vmul.f32 %v1655, %v1623
      %v1660 = vmul.f32 %v1656, %v1625
      %v1661 = vmul.f32 %v1657, %v1627
      %v1662 = vmul.f32 %v1658, %v1629
      %v1663 = vld [vmem:[%s6] sm:$0xf]
      %v1664 = vld [vmem:[%s6 + $0x4] sm:$0xf]
      %v1665 = vld [vmem:[%s6 + $0x8] sm:$0xf]
      %v1666 = vld [vmem:[%s6 + $0xc] sm:$0xf]
      %v1667 = vld [vmem:[%s6 + $0x10] sm:$0xf]
      %v1668 = vld [vmem:[%s6 + $0x14] sm:$0xf]
      %v1669 = vld [vmem:[%s6 + $0x18] sm:$0xf]
      %v1670 = vld [vmem:[%s6 + $0x1c] sm:$0xf]
      %v1671 = vld [vmem:[%s6 + $0x20] sm:$0xf]
      %v1672 = vld [vmem:[%s6 + $0x24] sm:$0xf]
      %v1673 = vld [vmem:[%s6 + $0x28] sm:$0xf]
      %v1674 = vld [vmem:[%s6 + $0x2c] sm:$0xf]
      %v1675 = vld [vmem:[%s6 + $0x30] sm:$0xf]
      %v1676 = vld [vmem:[%s6 + $0x34] sm:$0xf]
      %v1677 = vld [vmem:[%s6 + $0x38] sm:$0xf]
      %v1678 = vld [vmem:[%s6 + $0x3c] sm:$0xf]
      %v1679 = vld [vmem:[%s6 + $0x40] sm:$0xf]
      %v1680 = vld [vmem:[%s6 + $0x44] sm:$0xf]
      %v1681 = vld [vmem:[%s6 + $0x48] sm:$0xf]
      %v1682 = vld [vmem:[%s6 + $0x4c] sm:$0xf]
      %v1683 = vld [vmem:[%s6 + $0x50] sm:$0xf]
      %v1684 = vld [vmem:[%s6 + $0x54] sm:$0xf]
      %v1685 = vld [vmem:[%s6 + $0x58] sm:$0xf]
      %v1686 = vld [vmem:[%s6 + $0x5c] sm:$0xf]
      %v1687 = vld [vmem:[%s6 + $0x60] sm:$0xf]
      %v1688 = vld [vmem:[%s6 + $0x64] sm:$0xf]
      %v1689 = vld [vmem:[%s6 + $0x68] sm:$0xf]
      %v1690 = vld [vmem:[%s6 + $0x6c] sm:$0xf]
      %v1691 = vld [vmem:[%s6 + $0x70] sm:$0xf]
      %v1692 = vld [vmem:[%s6 + $0x74] sm:$0xf]
      %v1693 = vld [vmem:[%s6 + $0x78] sm:$0xf]
      %v1694 = vld [vmem:[%s6 + $0x7c] sm:$0xf]
      %v1695 = vpack.c.bf16 %v1661, %v1659
      %v1696 = vpack.c.bf16 %v1662, %v1660
      %v1729 = vunpack.c.l.b16 %v1663
      %v1730 = vunpack.c.l.b16 %v1664
      %v1731 = vunpack.c.l.b16 %v1665
      %v1732 = vunpack.c.l.b16 %v1666
      %v1733 = vunpack.c.l.b16 %v1667
      %v1734 = vunpack.c.l.b16 %v1668
      %v1735 = vunpack.c.l.b16 %v1669
      %v1736 = vunpack.c.l.b16 %v1670
      %v1737 = vunpack.c.l.b16 %v1671
      %v1738 = vunpack.c.l.b16 %v1672
      %v1739 = vunpack.c.l.b16 %v1673
      %v1740 = vunpack.c.l.b16 %v1674
      %v1741 = vunpack.c.l.b16 %v1675
      %v1742 = vunpack.c.l.b16 %v1676
      %v1743 = vunpack.c.l.b16 %v1677
      %v1744 = vunpack.c.l.b16 %v1678
      %v1745 = vunpack.c.l.b16 %v1679
      %v1746 = vunpack.c.l.b16 %v1680
      %v1747 = vunpack.c.l.b16 %v1681
      %v1748 = vunpack.c.l.b16 %v1682
      %v1749 = vunpack.c.l.b16 %v1683
      %v1750 = vunpack.c.l.b16 %v1684
      %v1751 = vunpack.c.l.b16 %v1685
      %v1752 = vunpack.c.l.b16 %v1686
      %v1753 = vunpack.c.l.b16 %v1687
      %v1754 = vunpack.c.l.b16 %v1688
      %v1755 = vunpack.c.l.b16 %v1689
      %v1756 = vunpack.c.l.b16 %v1690
      %v1757 = vunpack.c.l.b16 %v1691
      %v1758 = vunpack.c.l.b16 %v1692
      %v1759 = vunpack.c.l.b16 %v1693
      %v1760 = vunpack.c.l.b16 %v1694
      %v1761 = vpack.c.b16 %v1730, %v1729
      %v1762 = vpack.c.b16 %v1732, %v1731
      %v1763 = vpack.c.b16 %v1734, %v1733
      %v1764 = vpack.c.b16 %v1736, %v1735
      %v1765 = vpack.c.b16 %v1738, %v1737
      %v1766 = vpack.c.b16 %v1740, %v1739
      %v1767 = vpack.c.b16 %v1742, %v1741
      %v1768 = vpack.c.b16 %v1744, %v1743
      %v1769 = vpack.c.b16 %v1746, %v1745
      %v1770 = vpack.c.b16 %v1748, %v1747
      %v1771 = vpack.c.b16 %v1750, %v1749
      %v1772 = vpack.c.b16 %v1752, %v1751
      %v1773 = vpack.c.b16 %v1754, %v1753
      %v1774 = vpack.c.b16 %v1756, %v1755
      %v1775 = vpack.c.b16 %v1758, %v1757
      %v1776 = vpack.c.b16 %v1760, %v1759
      %1793 = vmatprep.subr.bf16.mxu0 0
      %1794 = vmatpush1.bf16.msra.mxu0 %v1768
      %1795 = vmatprep.subr.bf16.mxu0 0
      %1796 = vmatpush1.bf16.msra.mxu0 %v1767
      %1797 = vmatprep.subr.bf16.mxu0 0
      %1798 = vmatpush1.bf16.msra.mxu0 %v1766
      %1799 = vmatprep.subr.bf16.mxu0 0
      %1800 = vmatpush1.bf16.msra.mxu0 %v1765
      %1801 = vmatprep.subr.bf16.mxu0 0
      %1802 = vmatpush1.bf16.msra.mxu0 %v1764
      %1803 = vmatprep.subr.bf16.mxu0 0
      %1804 = vmatpush1.bf16.msra.mxu0 %v1763
      %1805 = vmatprep.subr.bf16.mxu0 0
      %1806 = vmatpush1.bf16.msra.mxu0 %v1762
      %1807 = vmatprep.subr.bf16.mxu0 0
      %1808 = vmatpush1.bf16.msra.mxu0 %v1761
      %1809 = vmatprep.subr.bf16.mxu0 0
      %1810 = vmatpush2.bf16.msra.mxu0 %v1776
      %1811 = vmatprep.subr.bf16.mxu0 0
      %1812 = vmatpush2.bf16.msra.mxu0 %v1775
      %1813 = vmatprep.subr.bf16.mxu0 0
      %1814 = vmatpush2.bf16.msra.mxu0 %v1774
      %1815 = vmatprep.subr.bf16.mxu0 0
      %1816 = vmatpush2.bf16.msra.mxu0 %v1773
      %1817 = vmatprep.subr.bf16.mxu0 0
      %1818 = vmatpush2.bf16.msra.mxu0 %v1772
      %1819 = vmatprep.subr.bf16.mxu0 0
      %1820 = vmatpush2.bf16.msra.mxu0 %v1771
      %1821 = vmatprep.subr.bf16.mxu0 0
      %1822 = vmatpush2.bf16.msra.mxu0 %v1770
      %1823 = vmatprep.subr.bf16.mxu0 0
      %1824 = vmatpush2.bf16.msra.mxu0 %v1769
      %1825 = vmatprep.mubr.bf16.mxu0 %v1696
      %1826 = vmatmul.mubr.bf16.gmra.mxu0 %v1695
      %v1827 = vpop.f32.mrf.mxu0
      %v1828 = vadd.f32 0.0, %v1827
      %v1829 = vpop.f32.mrf.mxu0
      %v1830 = vpop.f32.mrf.mxu0
      %v1831 = vadd.f32 0.0, %v1830
      %v1832 = vpop.f32.mrf.mxu0
      %1833 = vdwg.mxu0
      %v1834 = vadd.f32 %v1327, %v1828
      %v1835 = vadd.f32 %v1328, %v1831
      %1836 = vst [vmem:[%s332] sm:$0xff] %v1834
      %1837 = vst [vmem:[%s332 + $0x8] sm:$0xff] %v1835
      %p1838 = scmp.lt.s32.totalorder %s20, 1
      %s1839 = scalar_select %p1838, %s20, 1
      %s1840 = smul.addr %s1839, 2
      %s1841 = smul.addr %s1840, 8
      %s1842 = scalar_lea.vmem %s9, %s1841
      // Predicated region
      $region57: #{_lambda_.4} parent=55 // pred_check
        %p1843 = pneg %p232
      $region58: #{_lambda_.4} parent=55 // pred_check_branch
        %1845 = sbr.rel (%p1843) target = $region60
      $region59: #{_lambda_.4} parent=55 // pred_region
        _
      $region60: #{_lambda_.4} parent=55 // pred_fallthru
        _
    $region56: #{_lambda_.4} parent=5 // pred_fallthru
      _
    %p1846 = scmp.le.s32.totalorder 2, %s15
    // Predicated region
    $region61: #{_lambda_.4} parent=5 // pred_check
      %p1847 = pneg %p1846
    $region62: #{_lambda_.4} parent=5 // pred_check_branch
      %1849 = sbr.rel (%p1847) target = $region64
    $region63: #{_lambda_.4} parent=5 // pred_region
      %s1850 = ssub.s32 %s15, 2
      // Predicated region
      $region65: #{_lambda_.4} parent=63 // pred_check
        %p1851 = pneg %p238
      $region66: #{_lambda_.4} parent=63 // pred_check_branch
        %1853 = sbr.rel (%p1851) target = $region68
      $region67: #{_lambda_.4} parent=63 // pred_region
        %p1854 = scmp.lt.s32.totalorder %s21, 1
        %s1855 = scalar_select %p1854, %s21, 1
        %s1856 = smul.addr %s1855, 2
        %s1857 = smul.addr %s1856, 8
        %s1858 = scalar_lea.vmem %s9, %s1857
      $region68: #{_lambda_.4} parent=63 // pred_fallthru
        _
    $region64: #{_lambda_.4} parent=5 // pred_fallthru
      _
  $region6: #{_lambda_.4} parent=0 // loop_footer
    %s19 = sadd.s32 1, %s15
  $region7: #{_lambda_.4} parent=0 // loop_footer_branch
    %14 = sbr.rel target = $region3
  $region8: #{_lambda_.4} parent=0 // loop_exit
    _

// kernel: _lambda_.3
$region0: #{_lambda_.3}
  #allocation0 [shape = 'u32[]', space=smem, size = 0x4, offset = 0x4, fixed_abs, tag = 'smem constant byte address 0x4 - core index']
  #allocation1 [shape = 'u32[144,128]{1,0:T(1,128)}', space=vmem, size = 0x12000, scoped, tag = 'internal scratch']
  %s0 = inlined_call_operand.vmem [shape: f32[2,16,128], index: 0, kind: input, shape index: {}]
  %s1 = inlined_call_operand.vmem [shape: f32[1,128], index: 1, kind: input, shape index: {}, may-alias: {1,2}]
  %s2 = inlined_call_operand.vmem [shape: f32[1,128], index: 2, kind: input, shape index: {}, may-alias: {1,2}]
  %s3 = inlined_call_operand.hbm [shape: bf16[128,256], index: 3, kind: input, shape index: {}]
  %s4 = inlined_call_operand.vmem [shape: bf16[128,128], index: 4, kind: input, shape index: {}]
  %s5 = inlined_call_operand.vmem [shape: bf16[128,512], index: 5, kind: input, shape index: {}]
  %s6 = inlined_call_operand.vmem [shape: bf16[256,128], index: 6, kind: input, shape index: {}]
  %s7 = inlined_call_operand.vmem [shape: f32[16,32], index: 7, kind: input, shape index: {}]
  %s8 = inlined_call_operand.vmem [shape: f32[16,32], index: 8, kind: input, shape index: {}]
  %s9 = inlined_call_operand.vmem [shape: f32[2,16,128], index: 9, kind: output, shape index: {}]
  %s10 = sld [smem:[#allocation0]]
  $region73: #{_lambda_.3} parent=0
    _
  %s12 = ssub.s32 1, %s10
  %s13 = scalar_select 0, %s12, %s10
  $region1: #{_lambda_.3} parent=0
    #allocation2 [shape = 'u8[65536]{0}', space=vmem, size = 0x10000, scoped, tag = 'input window, operand 3, single buffered']
    #allocation3 [shape = 's32[2]{0}', space=sflag, size = 0x8, scoped, tag = 'scoped memory for _lambda_.3']
    %14 = vsyncpa [#allocation3], 0
    loop: start=0, step=1, limit=4
    $region2: #{_lambda_.3} parent=1 // loop_pre_header
      _
    $region3: #{_lambda_.3} parent=1 // loop_header
      %s16 = sphi 0, %s20
      %p17 = scmp.ge.s32.totalorder %s16, 4
      %s26 = sphi 0, %s28
      %s29 = sphi 0, %s26
      %s30 = sphi 0, %s29
      %s46 = sphi 0, %s30
      %s50 = sphi 0, %s50
      %s52 = sphi 0, %s50
      %s53 = sphi 0, %s52
      %s67 = sphi 0, %s53
      %s71 = sphi 0, %s71
      %s73 = sphi 0, %s71
      %s74 = sphi 0, %s73
      %s88 = sphi 0, %s74
      %s92 = sphi 0, %s92
      %s94 = sphi 0, %s92
      %s95 = sphi 0, %s94
      %s109 = sphi 0, %s95
      %s113 = sphi 0, %s113
      %s115 = sphi 0, %s113
      %s116 = sphi 0, %s115
      %s130 = sphi 0, %s116
      %s134 = sphi 0, %s134
      %s136 = sphi 0, %s134
      %s137 = sphi 0, %s136
      %s151 = sphi 0, %s137
      %s155 = sphi 0, %s155
      %s157 = sphi 0, %s155
      %s158 = sphi 0, %s157
      %s172 = sphi 0, %s158
      %s176 = sphi 0, %s176
      %s178 = sphi 0, %s176
      %s179 = sphi 0, %s178
      %s193 = sphi 0, %s179
      %s197 = sphi 0, %s197
      %s199 = sphi 0, %s197
      %s200 = sphi 0, %s199
      %s214 = sphi 0, %s200
      %s220 = sphi 0, %s222
      %s223 = sphi 0, %s220
      %s224 = sphi 0, %s223
      %s240 = sphi 0, %s224
    $region4: #{_lambda_.3} parent=1 // loop_header_branch
      %19 = sbr.rel (%p17) target = $region8
    $region5: #{_lambda_.3} parent=1 // loop_body
      %s21 = ssub.s32 %s16, 1
      %s22 = ssub.s32 %s16, 2
      %s23 = sadd.s32 %s16, 1
      %s24 = ssub.s32 %s16, %s23
      %p25 = scmp.eq.s32.totalorder %s24, 0
      %s27 = sadd.s32 %s26, 1
      %s28 = scalar_select %p25, %s26, %s27
      %p31 = pneg %p25
      %p32 = scmp.eq.s32.totalorder %s16, 1
      %p33 = por %p31, %p32
      %p34 = scmp.ne.s32.totalorder %s26, %s29
      %p35 = scmp.eq.s32.totalorder %s16, 0
      %p36 = por %p34, %p35
      %p37 = scmp.ne.s32.totalorder %s26, %s29
      %p38 = scmp.eq.s32.totalorder %s21, 1
      %p39 = por %p37, %p38
      %p40 = scmp.ne.s32.totalorder %s29, %s30
      %p41 = scmp.eq.s32.totalorder %s21, 0
      %p42 = por %p40, %p41
      %p43 = scmp.ne.s32.totalorder %s29, %s30
      %p44 = scmp.eq.s32.totalorder %s22, 1
      %p45 = por %p43, %p44
      %p47 = scmp.ne.s32.totalorder %s30, %s46
      %p48 = scmp.eq.s32.totalorder %s22, 0
      %p49 = por %p47, %p48
      %s51 = sadd.s32 %s50, 1
      %p54 = scmp.eq.s32.totalorder %s16, 1
      %p55 = scmp.ne.s32.totalorder %s50, %s52
      %p56 = scmp.eq.s32.totalorder %s16, 0
      %p57 = por %p55, %p56
      %p58 = scmp.ne.s32.totalorder %s50, %s52
      %p59 = scmp.eq.s32.totalorder %s21, 1
      %p60 = por %p58, %p59
      %p61 = scmp.ne.s32.totalorder %s52, %s53
      %p62 = scmp.eq.s32.totalorder %s21, 0
      %p63 = por %p61, %p62
      %p64 = scmp.ne.s32.totalorder %s52, %s53
      %p65 = scmp.eq.s32.totalorder %s22, 1
      %p66 = por %p64, %p65
      %p68 = scmp.ne.s32.totalorder %s53, %s67
      %p69 = scmp.eq.s32.totalorder %s22, 0
      %p70 = por %p68, %p69
      %s72 = sadd.s32 %s71, 1
      %p75 = scmp.eq.s32.totalorder %s16, 1
      %p76 = scmp.ne.s32.totalorder %s71, %s73
      %p77 = scmp.eq.s32.totalorder %s16, 0
      %p78 = por %p76, %p77
      %p79 = scmp.ne.s32.totalorder %s71, %s73
      %p80 = scmp.eq.s32.totalorder %s21, 1
      %p81 = por %p79, %p80
      %p82 = scmp.ne.s32.totalorder %s73, %s74
      %p83 = scmp.eq.s32.totalorder %s21, 0
      %p84 = por %p82, %p83
      %p85 = scmp.ne.s32.totalorder %s73, %s74
      %p86 = scmp.eq.s32.totalorder %s22, 1
      %p87 = por %p85, %p86
      %p89 = scmp.ne.s32.totalorder %s74, %s88
      %p90 = scmp.eq.s32.totalorder %s22, 0
      %p91 = por %p89, %p90
      %s93 = sadd.s32 %s92, 1
      %p96 = scmp.eq.s32.totalorder %s16, 1
      %p97 = scmp.ne.s32.totalorder %s92, %s94
      %p98 = scmp.eq.s32.totalorder %s16, 0
      %p99 = por %p97, %p98
      %p100 = scmp.ne.s32.totalorder %s92, %s94
      %p101 = scmp.eq.s32.totalorder %s21, 1
      %p102 = por %p100, %p101
      %p103 = scmp.ne.s32.totalorder %s94, %s95
      %p104 = scmp.eq.s32.totalorder %s21, 0
      %p105 = por %p103, %p104
      %p106 = scmp.ne.s32.totalorder %s94, %s95
      %p107 = scmp.eq.s32.totalorder %s22, 1
      %p108 = por %p106, %p107
      %p110 = scmp.ne.s32.totalorder %s95, %s109
      %p111 = scmp.eq.s32.totalorder %s22, 0
      %p112 = por %p110, %p111
      %s114 = sadd.s32 %s113, 1
      %p117 = scmp.eq.s32.totalorder %s16, 1
      %p118 = scmp.ne.s32.totalorder %s113, %s115
      %p119 = scmp.eq.s32.totalorder %s16, 0
      %p120 = por %p118, %p119
      %p121 = scmp.ne.s32.totalorder %s113, %s115
      %p122 = scmp.eq.s32.totalorder %s21, 1
      %p123 = por %p121, %p122
      %p124 = scmp.ne.s32.totalorder %s115, %s116
      %p125 = scmp.eq.s32.totalorder %s21, 0
      %p126 = por %p124, %p125
      %p127 = scmp.ne.s32.totalorder %s115, %s116
      %p128 = scmp.eq.s32.totalorder %s22, 1
      %p129 = por %p127, %p128
      %p131 = scmp.ne.s32.totalorder %s116, %s130
      %p132 = scmp.eq.s32.totalorder %s22, 0
      %p133 = por %p131, %p132
      %s135 = sadd.s32 %s134, 1
      %p138 = scmp.eq.s32.totalorder %s16, 1
      %p139 = scmp.ne.s32.totalorder %s134, %s136
      %p140 = scmp.eq.s32.totalorder %s16, 0
      %p141 = por %p139, %p140
      %p142 = scmp.ne.s32.totalorder %s134, %s136
      %p143 = scmp.eq.s32.totalorder %s21, 1
      %p144 = por %p142, %p143
      %p145 = scmp.ne.s32.totalorder %s136, %s137
      %p146 = scmp.eq.s32.totalorder %s21, 0
      %p147 = por %p145, %p146
      %p148 = scmp.ne.s32.totalorder %s136, %s137
      %p149 = scmp.eq.s32.totalorder %s22, 1
      %p150 = por %p148, %p149
      %p152 = scmp.ne.s32.totalorder %s137, %s151
      %p153 = scmp.eq.s32.totalorder %s22, 0
      %p154 = por %p152, %p153
      %s156 = sadd.s32 %s155, 1
      %p159 = scmp.eq.s32.totalorder %s16, 1
      %p160 = scmp.ne.s32.totalorder %s155, %s157
      %p161 = scmp.eq.s32.totalorder %s16, 0
      %p162 = por %p160, %p161
      %p163 = scmp.ne.s32.totalorder %s155, %s157
      %p164 = scmp.eq.s32.totalorder %s21, 1
      %p165 = por %p163, %p164
      %p166 = scmp.ne.s32.totalorder %s157, %s158
      %p167 = scmp.eq.s32.totalorder %s21, 0
      %p168 = por %p166, %p167
      %p169 = scmp.ne.s32.totalorder %s157, %s158
      %p170 = scmp.eq.s32.totalorder %s22, 1
      %p171 = por %p169, %p170
      %p173 = scmp.ne.s32.totalorder %s158, %s172
      %p174 = scmp.eq.s32.totalorder %s22, 0
      %p175 = por %p173, %p174
      %s177 = sadd.s32 %s176, 1
      %p180 = scmp.eq.s32.totalorder %s16, 1
      %p181 = scmp.ne.s32.totalorder %s176, %s178
      %p182 = scmp.eq.s32.totalorder %s16, 0
      %p183 = por %p181, %p182
      %p184 = scmp.ne.s32.totalorder %s176, %s178
      %p185 = scmp.eq.s32.totalorder %s21, 1
      %p186 = por %p184, %p185
      %p187 = scmp.ne.s32.totalorder %s178, %s179
      %p188 = scmp.eq.s32.totalorder %s21, 0
      %p189 = por %p187, %p188
      %p190 = scmp.ne.s32.totalorder %s178, %s179
      %p191 = scmp.eq.s32.totalorder %s22, 1
      %p192 = por %p190, %p191
      %p194 = scmp.ne.s32.totalorder %s179, %s193
      %p195 = scmp.eq.s32.totalorder %s22, 0
      %p196 = por %p194, %p195
      %s198 = sadd.s32 %s197, 1
      %p201 = scmp.eq.s32.totalorder %s16, 1
      %p202 = scmp.ne.s32.totalorder %s197, %s199
      %p203 = scmp.eq.s32.totalorder %s16, 0
      %p204 = por %p202, %p203
      %p205 = scmp.ne.s32.totalorder %s197, %s199
      %p206 = scmp.eq.s32.totalorder %s21, 1
      %p207 = por %p205, %p206
      %p208 = scmp.ne.s32.totalorder %s199, %s200
      %p209 = scmp.eq.s32.totalorder %s21, 0
      %p210 = por %p208, %p209
      %p211 = scmp.ne.s32.totalorder %s199, %s200
      %p212 = scmp.eq.s32.totalorder %s22, 1
      %p213 = por %p211, %p212
      %p215 = scmp.ne.s32.totalorder %s200, %s214
      %p216 = scmp.eq.s32.totalorder %s22, 0
      %p217 = por %p215, %p216
      %s218 = ssub.s32 %s16, %s23
      %p219 = scmp.eq.s32.totalorder %s218, 0
      %s221 = sadd.s32 %s220, 1
      %s222 = scalar_select %p219, %s220, %s221
      %p225 = pneg %p219
      %p226 = scmp.eq.s32.totalorder %s16, 1
      %p227 = por %p225, %p226
      %p228 = scmp.ne.s32.totalorder %s220, %s223
      %p229 = scmp.eq.s32.totalorder %s16, 0
      %p230 = por %p228, %p229
      %p231 = scmp.ne.s32.totalorder %s220, %s223
      %p232 = scmp.eq.s32.totalorder %s21, 1
      %p233 = por %p231, %p232
      %p234 = scmp.ne.s32.totalorder %s223, %s224
      %p235 = scmp.eq.s32.totalorder %s21, 0
      %p236 = por %p234, %p235
      %p237 = scmp.ne.s32.totalorder %s223, %s224
      %p238 = scmp.eq.s32.totalorder %s22, 1
      %p239 = por %p237, %p238
      %p241 = scmp.ne.s32.totalorder %s224, %s240
      %p242 = scmp.eq.s32.totalorder %s22, 0
      %p243 = por %p241, %p242
      %p244 = scmp.le.s32.totalorder 1, %s16
      %p245 = scmp.lt.s32.totalorder %s16, 3
      %p246 = pnand %p244, %p245
      %p247 = pneg %p246
      // Predicated region
      $region9: #{_lambda_.3} parent=5 // pred_check
        _
      $region10: #{_lambda_.3} parent=5 // pred_check_branch
        %249 = sbr.rel (%p246) target = $region12
      $region11: #{_lambda_.3} parent=5 // pred_region
        %s250 = ssub.s32 %s16, 1
        // Predicated region
        $region13: #{_lambda_.3} parent=11 // pred_check
          %p251 = pneg %p63
        $region14: #{_lambda_.3} parent=11 // pred_check_branch
          %253 = sbr.rel (%p251) target = $region16
        $region15: #{_lambda_.3} parent=11 // pred_region
          _
        $region16: #{_lambda_.3} parent=11 // pred_fallthru
          _
        // Predicated region
        $region17: #{_lambda_.3} parent=11 // pred_check
          %p254 = pneg %p84
        $region18: #{_lambda_.3} parent=11 // pred_check_branch
          %256 = sbr.rel (%p254) target = $region20
        $region19: #{_lambda_.3} parent=11 // pred_region
          _
        $region20: #{_lambda_.3} parent=11 // pred_fallthru
          _
        // Predicated region
        $region21: #{_lambda_.3} parent=11 // pred_check
          %p257 = pneg %p105
        $region22: #{_lambda_.3} parent=11 // pred_check_branch
          %259 = sbr.rel (%p257) target = $region24
        $region23: #{_lambda_.3} parent=11 // pred_region
          %s261 = ssub.s32 2048, 2048
          %262 = vsyncadd [#allocation3], %s261
          %s263 = sshll.u32 [#allocation2], 4
          %s264 = int_to_ptr.vmem [resolvable:$true] %s263
          %269 = dma.hbm_to_vmem [thread:$0]  %s3, 2048, %s264, [#allocation3], 128, 128, 8
        $region24: #{_lambda_.3} parent=11 // pred_fallthru
          _
        // Predicated region
        $region25: #{_lambda_.3} parent=11 // pred_check
          %p270 = pneg %p126
        $region26: #{_lambda_.3} parent=11 // pred_check_branch
          %272 = sbr.rel (%p270) target = $region28
        $region27: #{_lambda_.3} parent=11 // pred_region
          _
        $region28: #{_lambda_.3} parent=11 // pred_fallthru
          _
        // Predicated region
        $region29: #{_lambda_.3} parent=11 // pred_check
          %p273 = pneg %p147
        $region30: #{_lambda_.3} parent=11 // pred_check_branch
          %275 = sbr.rel (%p273) target = $region32
        $region31: #{_lambda_.3} parent=11 // pred_region
          _
        $region32: #{_lambda_.3} parent=11 // pred_fallthru
          _
        // Predicated region
        $region33: #{_lambda_.3} parent=11 // pred_check
          %p276 = pneg %p168
        $region34: #{_lambda_.3} parent=11 // pred_check_branch
          %278 = sbr.rel (%p276) target = $region36
        $region35: #{_lambda_.3} parent=11 // pred_region
          _
        $region36: #{_lambda_.3} parent=11 // pred_fallthru
          _
        // Predicated region
        $region37: #{_lambda_.3} parent=11 // pred_check
          %p279 = pneg %p189
        $region38: #{_lambda_.3} parent=11 // pred_check_branch
          %281 = sbr.rel (%p279) target = $region40
        $region39: #{_lambda_.3} parent=11 // pred_region
          _
        $region40: #{_lambda_.3} parent=11 // pred_fallthru
          _
        // Predicated region
        $region41: #{_lambda_.3} parent=11 // pred_check
          %p282 = pneg %p210
        $region42: #{_lambda_.3} parent=11 // pred_check_branch
          %284 = sbr.rel (%p282) target = $region44
        $region43: #{_lambda_.3} parent=11 // pred_region
          _
        $region44: #{_lambda_.3} parent=11 // pred_fallthru
          _
      $region12: #{_lambda_.3} parent=5 // pred_fallthru
        _
      %p285 = scmp.lt.s32.totalorder %s16, 2
      // Predicated region
      $region45: #{_lambda_.3} parent=5 // pred_check
        %p286 = pneg %p285
      $region46: #{_lambda_.3} parent=5 // pred_check_branch
        %288 = sbr.rel (%p286) target = $region48
      $region47: #{_lambda_.3} parent=5 // pred_region
        // Predicated region
        $region49: #{_lambda_.3} parent=47 // pred_check
          %p289 = pneg %p36
        $region50: #{_lambda_.3} parent=47 // pred_check_branch
          %291 = sbr.rel (%p289) target = $region52
        $region51: #{_lambda_.3} parent=47 // pred_region
          %p292 = scmp.lt.s32.totalorder %s16, 1
          %s293 = scalar_select %p292, %s16, 1
          %s294 = smul.addr %s293, 2
          %s295 = smul.addr %s294, 8
          %s296 = scalar_lea.vmem %s0, %s295
        $region52: #{_lambda_.3} parent=47 // pred_fallthru
          _
      $region48: #{_lambda_.3} parent=5 // pred_fallthru
        _
      %p297 = scmp.le.s32.totalorder 1, %s16
      %p298 = scmp.lt.s32.totalorder %s16, 3
      %p299 = pnand %p297, %p298
      %p300 = pneg %p299
      // Predicated region
      $region53: #{_lambda_.3} parent=5 // pred_check
        _
      $region54: #{_lambda_.3} parent=5 // pred_check_branch
        %302 = sbr.rel (%p299) target = $region56
      $region55: #{_lambda_.3} parent=5 // pred_region
        %s303 = ssub.s32 %s16, 1
        // Predicated region
        $region57: #{_lambda_.3} parent=55 // pred_check
          %p304 = pneg %p105
        $region58: #{_lambda_.3} parent=55 // pred_check_branch
          %306 = sbr.rel (%p304) target = $region60
        $region59: #{_lambda_.3} parent=55 // pred_region
          %307 = dma.done [#allocation3], 2048
        $region60: #{_lambda_.3} parent=55 // pred_fallthru
          _
        %p308 = scmp.lt.s32.totalorder %s21, 1
        %s309 = scalar_select %p308, %s21, 1
        %s310 = smul.addr %s309, 2
        %s311 = smul.addr %s310, 8
        %s312 = scalar_lea.vmem %s0, %s311
        %p313 = pneg %p42
        %p314 = pneg %p39
        %p315 = pneg %p63
        %p316 = pneg %p60
        %p317 = pneg %p84
        %p318 = pneg %p81
        %p319 = pneg %p105
        %p320 = pneg %p102
        %p321 = pneg %p126
        %p322 = pneg %p123
        %p323 = pneg %p147
        %p324 = pneg %p144
        %p325 = pneg %p168
        %p326 = pneg %p165
        %p327 = pneg %p189
        %p328 = pneg %p186
        %p329 = pneg %p210
        %p330 = pneg %p207
        %p331 = pneg %p236
        %p332 = pneg %p233
        %p333 = scmp.lt.s32.totalorder %s21, 1
        %s334 = scalar_select %p333, %s21, 1
        %s335 = smul.addr %s334, 2
        %s336 = smul.addr %s335, 8
        %s337 = scalar_lea.vmem %s9, %s336
        %p338 = scmp.lt.s32.totalorder %s21, 1
        %s339 = scalar_select %p338, %s21, 1
        %s340 = smul.addr %s339, 2
        %s341 = smul.addr %s340, 8
        %s342 = scalar_lea.vmem %s0, %s341
        %p343 = scmp.lt.s32.totalorder %s21, 1
        %s344 = scalar_select %p343, %s21, 1
        %s345 = smul.addr %s344, 2
        %s346 = smul.addr %s345, 8
        %s347 = scalar_lea.vmem %s9, %s346
        %v349 = vld [vmem:[%s342] sm:$0xff]
        %v350 = vld [vmem:[%s342 + $0x8] sm:$0xff]
        %v351 = vmul.f32 %v349, %v349
        %v352 = vmul.f32 %v350, %v350
        %353 = vadd.xlane.f32.xlu0 %v351
        %v354 = vpop.xlane.xlu0 %353
        %355 = vadd.xlane.f32.xlu0 %v352
        %v356 = vpop.xlane.xlu0 %355
        %v357 = vrcp.pop 128.0
        %v358 = vmul.f32 %v354, %v357
        %v359 = vmul.f32 %v356, %v357
        %v360 = vadd.f32 %v358, 1e-06
        %v361 = vadd.f32 %v359, 1e-06
        %v362 = vrsqrt.pop %v360
        %v363 = vrsqrt.pop %v361
        %v364 = vmul.f32 %v349, %v362
        %v365 = vmul.f32 %v350, %v363
        %v366 = vld [vmem:[%s1] sm:$0x1]
        %v368 = vlaneseq
        %v369 = vshrl.u32 %v368, 7
        %v370 = vsub.s32 0, %v369
        %v371 = vrot.slane %v366, %v370
        %v373 = vmul.f32 %v364, %v371
        %v374 = vmul.f32 %v365, %v371
        %v375 = vld [vmem:[#allocation2] sm:$0xff]
        %v376 = vld [vmem:[#allocation2 + $0x8] sm:$0xff]
        %v377 = vld [vmem:[#allocation2 + $0x10] sm:$0xff]
        %v378 = vld [vmem:[#allocation2 + $0x18] sm:$0xff]
        %v379 = vld [vmem:[#allocation2 + $0x20] sm:$0xff]
        %v380 = vld [vmem:[#allocation2 + $0x28] sm:$0xff]
        %v381 = vld [vmem:[#allocation2 + $0x30] sm:$0xff]
        %v382 = vld [vmem:[#allocation2 + $0x38] sm:$0xff]
        %v383 = vld [vmem:[#allocation2 + $0x40] sm:$0xff]
        %v384 = vld [vmem:[#allocation2 + $0x48] sm:$0xff]
        %v385 = vld [vmem:[#allocation2 + $0x50] sm:$0xff]
        %v386 = vld [vmem:[#allocation2 + $0x58] sm:$0xff]
        %v387 = vld [vmem:[#allocation2 + $0x60] sm:$0xff]
        %v388 = vld [vmem:[#allocation2 + $0x68] sm:$0xff]
        %v389 = vld [vmem:[#allocation2 + $0x70] sm:$0xff]
        %v390 = vld [vmem:[#allocation2 + $0x78] sm:$0xff]
        %v391 = vpack.c.bf16 %v374, %v373
        %v408 = vunpack.c.l.b16 %v375
        %v409 = vunpack.c.h.b16 %v375
        %v410 = vunpack.c.l.b16 %v376
        %v411 = vunpack.c.h.b16 %v376
        %v412 = vunpack.c.l.b16 %v377
        %v413 = vunpack.c.h.b16 %v377
        %v414 = vunpack.c.l.b16 %v378
        %v415 = vunpack.c.h.b16 %v378
        %v416 = vunpack.c.l.b16 %v379
        %v417 = vunpack.c.h.b16 %v379
        %v418 = vunpack.c.l.b16 %v380
        %v419 = vunpack.c.h.b16 %v380
        %v420 = vunpack.c.l.b16 %v381
        %v421 = vunpack.c.h.b16 %v381
        %v422 = vunpack.c.l.b16 %v382
        %v423 = vunpack.c.h.b16 %v382
        %v424 = vunpack.c.l.b16 %v383
        %v425 = vunpack.c.h.b16 %v383
        %v426 = vunpack.c.l.b16 %v384
        %v427 = vunpack.c.h.b16 %v384
        %v428 = vunpack.c.l.b16 %v385
        %v429 = vunpack.c.h.b16 %v385
        %v430 = vunpack.c.l.b16 %v386
        %v431 = vunpack.c.h.b16 %v386
        %v432 = vunpack.c.l.b16 %v387
        %v433 = vunpack.c.h.b16 %v387
        %v434 = vunpack.c.l.b16 %v388
        %v435 = vunpack.c.h.b16 %v388
        %v436 = vunpack.c.l.b16 %v389
        %v437 = vunpack.c.h.b16 %v389
        %v438 = vunpack.c.l.b16 %v390
        %v439 = vunpack.c.h.b16 %v390
        %v440 = vpack.c.b16 %v410, %v408
        %v441 = vpack.c.b16 %v411, %v409
        %v442 = vpack.c.b16 %v414, %v412
        %v443 = vpack.c.b16 %v415, %v413
        %v444 = vpack.c.b16 %v418, %v416
        %v445 = vpack.c.b16 %v419, %v417
        %v446 = vpack.c.b16 %v422, %v420
        %v447 = vpack.c.b16 %v423, %v421
        %v448 = vpack.c.b16 %v426, %v424
        %v449 = vpack.c.b16 %v427, %v425
        %v450 = vpack.c.b16 %v430, %v428
        %v451 = vpack.c.b16 %v431, %v429
        %v452 = vpack.c.b16 %v434, %v432
        %v453 = vpack.c.b16 %v435, %v433
        %v454 = vpack.c.b16 %v438, %v436
        %v455 = vpack.c.b16 %v439, %v437
        %472 = vmatprep.subr.bf16.mxu0 %v455
        %473 = vmatpush1.bf16.msra.mxu0 %v454
        %474 = vmatprep.subr.bf16.mxu0 %v453
        %475 = vmatpush1.bf16.msra.mxu0 %v452
        %476 = vmatprep.subr.bf16.mxu0 %v451
        %477 = vmatpush1.bf16.msra.mxu0 %v450
        %478 = vmatprep.subr.bf16.mxu0 %v449
        %479 = vmatpush1.bf16.msra.mxu0 %v448
        %480 = vmatprep.subr.bf16.mxu0 %v447
        %481 = vmatpush1.bf16.msra.mxu0 %v446
        %482 = vmatprep.subr.bf16.mxu0 %v445
        %483 = vmatpush1.bf16.msra.mxu0 %v444
        %484 = vmatprep.subr.bf16.mxu0 %v443
        %485 = vmatpush1.bf16.msra.mxu0 %v442
        %486 = vmatprep.subr.bf16.mxu0 %v441
        %487 = vmatpush1.bf16.msra.mxu0 %v440
        %488 = vmatprep.subr.bf16.mxu0 0
        %489 = vmatpush2.bf16.msra.mxu0 0
        %490 = vmatprep.subr.bf16.mxu0 0
        %491 = vmatpush2.bf16.msra.mxu0 0
        %492 = vmatprep.subr.bf16.mxu0 0
        %493 = vmatpush2.bf16.msra.mxu0 0
        %494 = vmatprep.subr.bf16.mxu0 0
        %495 = vmatpush2.bf16.msra.mxu0 0
        %496 = vmatprep.subr.bf16.mxu0 0
        %497 = vmatpush2.bf16.msra.mxu0 0
        %498 = vmatprep.subr.bf16.mxu0 0
        %499 = vmatpush2.bf16.msra.mxu0 0
        %500 = vmatprep.subr.bf16.mxu0 0
        %501 = vmatpush2.bf16.msra.mxu0 0
        %502 = vmatprep.subr.bf16.mxu0 0
        %503 = vmatpush2.bf16.msra.mxu0 0
        %504 = vmatprep.mubr.bf16.mxu0 0
        %505 = vmatmul.mubr.bf16.gmra.mxu0 %v391
        %v506 = vpop.f32.mrf.mxu0
        %v507 = vadd.f32 0.0, %v506
        %v508 = vpop.f32.mrf.mxu0
        %v509 = vadd.f32 0.0, %v508
        %v510 = vpop.f32.mrf.mxu0
        %v511 = vadd.f32 0.0, %v510
        %v512 = vpop.f32.mrf.mxu0
        %v513 = vadd.f32 0.0, %v512
        %514 = vdwg.mxu0
        %v515 = vld [vmem:[%s7] sm:$0xff]
        %v516 = vld [vmem:[%s7 + $0x8] sm:$0xff]
        %v517 = vld [vmem:[%s8] sm:$0xff]
        %v518 = vld [vmem:[%s8 + $0x8] sm:$0xff]
        %v519 = vsub.f32 0.0, %v509
        %v520 = vsub.f32 0.0, %v513
        %523 = vrot.lane.b32.xlu0 %v519, 112
        %v524 = vpop.permute.xlu0 %523
        %525 = vrot.lane.b32.xlu0 %v520, 112
        %v526 = vpop.permute.xlu0 %525
        %531 = vrot.lane.b32.xlu0 %v509, 16
        %v532 = vpop.permute.xlu0 %531
        %533 = vrot.lane.b32.xlu0 %v513, 16
        %v534 = vpop.permute.xlu0 %533
        %vm537 = vcmask 130048
        %v538 = vsel %vm537, %v524, %v532
        %v539 = vsel %vm537, %v526, %v534
        %v540 = vmul.f32 %v509, %v515
        %v541 = vmul.f32 %v513, %v516
        %v542 = vmul.f32 %v538, %v517
        %v543 = vmul.f32 %v539, %v518
        %v544 = vadd.f32 %v540, %v542
        %v545 = vadd.f32 %v541, %v543
        %546 = vrot.lane.b32.xlu0 %v519, 80
        %v547 = vpop.permute.xlu0 %546
        %548 = vrot.lane.b32.xlu0 %v520, 80
        %v549 = vpop.permute.xlu0 %548
        %552 = vrot.lane.b32.xlu0 %v509, 112
        %v553 = vpop.permute.xlu0 %552
        %554 = vrot.lane.b32.xlu0 %v513, 112
        %v555 = vpop.permute.xlu0 %554
        %v558 = vsel %vm537, %v547, %v553
        %v559 = vsel %vm537, %v549, %v555
        %562 = vrot.lane.b32.xlu0 %v515, 32
        %v563 = vpop.permute.xlu0 %562
        %564 = vrot.lane.b32.xlu0 %v516, 32
        %v565 = vpop.permute.xlu0 %564
        %v568 = vmul.f32 %v509, %v563
        %v569 = vmul.f32 %v513, %v565
        %v570 = vmul.f32 %v558, %v517
        %v571 = vmul.f32 %v559, %v518
        %574 = vrot.lane.b32.xlu0 %v570, 32
        %v575 = vpop.permute.xlu0 %574
        %576 = vrot.lane.b32.xlu0 %v571, 32
        %v577 = vpop.permute.xlu0 %576
        %v580 = vadd.f32 %v568, %v575
        %v581 = vadd.f32 %v569, %v577
        %v582 = vlaneseq
        %v583 = vshrl.u32 %v582, 7
        %v584 = vadd.s32 %v583, 8
        %v585 = vlaneseq
        %v586 = vand.u32 %v585, 127
        %vm587 = vcmp.le.s32.totalorder %v586, %v583
        %vm588 = vcmp.le.s32.totalorder %v586, %v584
        %v589 = vsub.f32 0.0, %v507
        %v590 = vsub.f32 0.0, %v511
        %593 = vrot.lane.b32.xlu0 %v589, 112
        %v594 = vpop.permute.xlu0 %593
        %595 = vrot.lane.b32.xlu0 %v590, 112
        %v596 = vpop.permute.xlu0 %595
        %601 = vrot.lane.b32.xlu0 %v507, 16
        %v602 = vpop.permute.xlu0 %601
        %603 = vrot.lane.b32.xlu0 %v511, 16
        %v604 = vpop.permute.xlu0 %603
        %v607 = vsel %vm537, %v594, %v602
        %v608 = vsel %vm537, %v596, %v604
        %v609 = vmul.f32 %v507, %v515
        %v610 = vmul.f32 %v511, %v516
        %v611 = vmul.f32 %v607, %v517
        %v612 = vmul.f32 %v608, %v518
        %v613 = vadd.f32 %v609, %v611
        %v614 = vadd.f32 %v610, %v612
        %v615 = vmul.f32 %v613, 0.17677669
        %v616 = vmul.f32 %v614, 0.17677669
        %v617 = vpack.c.bf16 %v616, %v615
        %v618 = vpack.c.bf16 %v545, %v544
        %vm619 = vcmask 261120
        %v621 = vsel %vm619, %v617, 0
        %v624 = vsel %vm619, %v618, 0
        %626 = vmatprep.subr.bf16.mxu0 0
        %627 = vmatpush1.bf16.xpose.msra.mxu0 0
        %628 = vmatprep.subr.bf16.mxu0 0
        %629 = vmatpush1.bf16.xpose.msra.mxu0 0
        %630 = vmatprep.subr.bf16.mxu0 0
        %631 = vmatpush1.bf16.xpose.msra.mxu0 0
        %632 = vmatprep.subr.bf16.mxu0 0
        %633 = vmatpush1.bf16.xpose.msra.mxu0 0
        %634 = vmatprep.subr.bf16.mxu0 0
        %635 = vmatpush1.bf16.xpose.msra.mxu0 0
        %636 = vmatprep.subr.bf16.mxu0 0
        %637 = vmatpush1.bf16.xpose.msra.mxu0 0
        %638 = vmatprep.subr.bf16.mxu0 0
        %639 = vmatpush1.bf16.xpose.msra.mxu0 0
        %640 = vmatprep.subr.bf16.mxu0 0
        %641 = vmatpush1.bf16.xpose.msra.mxu0 %v624
        %642 = vmatprep.subr.bf16.mxu0 0
        %643 = vmatpush2.bf16.xpose.msra.mxu0 0
        %644 = vmatprep.subr.bf16.mxu0 0
        %645 = vmatpush2.bf16.xpose.msra.mxu0 0
        %646 = vmatprep.subr.bf16.mxu0 0
        %647 = vmatpush2.bf16.xpose.msra.mxu0 0
        %648 = vmatprep.subr.bf16.mxu0 0
        %649 = vmatpush2.bf16.xpose.msra.mxu0 0
        %650 = vmatprep.subr.bf16.mxu0 0
        %651 = vmatpush2.bf16.xpose.msra.mxu0 0
        %652 = vmatprep.subr.bf16.mxu0 0
        %653 = vmatpush2.bf16.xpose.msra.mxu0 0
        %654 = vmatprep.subr.bf16.mxu0 0
        %655 = vmatpush2.bf16.xpose.msra.mxu0 0
        %656 = vmatprep.subr.bf16.mxu0 0
        %657 = vmatpush2.bf16.xpose.msra.mxu0 0
        %658 = vmatprep.mubr.bf16.mxu0 0
        %659 = vmatmul.mubr.bf16.gmra.mxu0 %v621
        %v660 = vpop.f32.mrf.mxu0
        %v661 = vadd.f32 0.0, %v660
        %v662 = vpop.f32.mrf.mxu0
        %v663 = vpop.f32.mrf.mxu0
        %v664 = vadd.f32 0.0, %v663
        %v665 = vpop.f32.mrf.mxu0
        %666 = vdwg.mxu0
        %v667 = vsel %vm587, %v661, -1e+30
        %v668 = vsel %vm588, %v664, -1e+30
        %v669 = vsel %vm537, %v667, -inf
        %670 = vmax.xlane.f32.xlu0 %v669
        %v671 = vpop.xlane.xlu0 %670
        %v672 = vsel %vm537, %v668, -inf
        %673 = vmax.xlane.f32.xlu0 %v672
        %v674 = vpop.xlane.xlu0 %673
        %v675 = vsub.f32 %v667, %v671
        %v676 = vsub.f32 %v668, %v674
        %v677 = vmul.f32 %v675, 1.442695
        %v678 = vpow.pop %v677
        %v679 = vmul.f32 %v676, 1.442695
        %v680 = vpow.pop %v679
        %v681 = vsel %vm537, %v678, 0.0
        %682 = vadd.xlane.f32.xlu0 %v681
        %v683 = vpop.xlane.xlu0 %682
        %v684 = vsel %vm537, %v680, 0.0
        %685 = vadd.xlane.f32.xlu0 %v684
        %v686 = vpop.xlane.xlu0 %685
        %v687 = vpack.c.bf16 %v680, %v678
        %v688 = vpack.c.bf16 %v513, %v509
        %690 = vrot.lane.b32.xlu0 %v688, 64
        %v691 = vpop.permute.xlu0 %690
        %v694 = vsel %vm537, %v687, 0
        %696 = vmatprep.subr.bf16.mxu0 0
        %697 = vmatpush1.bf16.msra.mxu0 0
        %698 = vmatprep.subr.bf16.mxu0 0
        %699 = vmatpush1.bf16.msra.mxu0 0
        %700 = vmatprep.subr.bf16.mxu0 0
        %701 = vmatpush1.bf16.msra.mxu0 0
        %702 = vmatprep.subr.bf16.mxu0 0
        %703 = vmatpush1.bf16.msra.mxu0 0
        %704 = vmatprep.subr.bf16.mxu0 0
        %705 = vmatpush1.bf16.msra.mxu0 0
        %706 = vmatprep.subr.bf16.mxu0 0
        %707 = vmatpush1.bf16.msra.mxu0 0
        %708 = vmatprep.subr.bf16.mxu0 0
        %709 = vmatpush1.bf16.msra.mxu0 0
        %710 = vmatprep.subr.bf16.mxu0 0
        %711 = vmatpush1.bf16.msra.mxu0 %v691
        %712 = vmatprep.subr.bf16.mxu0 0
        %713 = vmatpush2.bf16.msra.mxu0 0
        %714 = vmatprep.subr.bf16.mxu0 0
        %715 = vmatpush2.bf16.msra.mxu0 0
        %716 = vmatprep.subr.bf16.mxu0 0
        %717 = vmatpush2.bf16.msra.mxu0 0
        %718 = vmatprep.subr.bf16.mxu0 0
        %719 = vmatpush2.bf16.msra.mxu0 0
        %720 = vmatprep.subr.bf16.mxu0 0
        %721 = vmatpush2.bf16.msra.mxu0 0
        %722 = vmatprep.subr.bf16.mxu0 0
        %723 = vmatpush2.bf16.msra.mxu0 0
        %724 = vmatprep.subr.bf16.mxu0 0
        %725 = vmatpush2.bf16.msra.mxu0 0
        %726 = vmatprep.subr.bf16.mxu0 0
        %727 = vmatpush2.bf16.msra.mxu0 0
        %728 = vmatprep.mubr.bf16.mxu0 0
        %729 = vmatmul.mubr.bf16.gmra.mxu0 %v694
        %v730 = vpop.f32.mrf.mxu0
        %v731 = vadd.f32 0.0, %v730
        %v732 = vpop.f32.mrf.mxu0
        %v733 = vpop.f32.mrf.mxu0
        %v734 = vadd.f32 0.0, %v733
        %v735 = vpop.f32.mrf.mxu0
        %736 = vdwg.mxu0
        %v737 = vrcp.pop %v683
        %v738 = vrcp.pop %v686
        %v739 = vmul.f32 %v731, %v737
        %v740 = vmul.f32 %v734, %v738
        %741 = vrot.lane.b32.xlu0 %v589, 80
        %v742 = vpop.permute.xlu0 %741
        %743 = vrot.lane.b32.xlu0 %v590, 80
        %v744 = vpop.permute.xlu0 %743
        %747 = vrot.lane.b32.xlu0 %v507, 112
        %v748 = vpop.permute.xlu0 %747
        %749 = vrot.lane.b32.xlu0 %v511, 112
        %v750 = vpop.permute.xlu0 %749
        %v753 = vsel %vm537, %v742, %v748
        %v754 = vsel %vm537, %v744, %v750
        %v755 = vmul.f32 %v507, %v563
        %v756 = vmul.f32 %v511, %v565
        %v757 = vmul.f32 %v753, %v517
        %v758 = vmul.f32 %v754, %v518
        %761 = vrot.lane.b32.xlu0 %v757, 32
        %v762 = vpop.permute.xlu0 %761
        %763 = vrot.lane.b32.xlu0 %v758, 32
        %v764 = vpop.permute.xlu0 %763
        %v767 = vadd.f32 %v755, %v762
        %v768 = vadd.f32 %v756, %v764
        %v769 = vmul.f32 %v767, 0.17677669
        %v770 = vmul.f32 %v768, 0.17677669
        %v771 = vpack.c.bf16 %v770, %v769
        %773 = vrot.lane.b32.xlu0 %v771, 96
        %v774 = vpop.permute.xlu0 %773
        %v776 = vsel %vm619, %v774, 0
        %778 = vmatprep.subr.bf16.mxu0 0
        %779 = vmatpush1.bf16.xpose.msra.mxu0 0
        %780 = vmatprep.subr.bf16.mxu0 0
        %781 = vmatpush1.bf16.xpose.msra.mxu0 0
        %782 = vmatprep.subr.bf16.mxu0 0
        %783 = vmatpush1.bf16.xpose.msra.mxu0 0
        %784 = vmatprep.subr.bf16.mxu0 0
        %785 = vmatpush1.bf16.xpose.msra.mxu0 0
        %786 = vmatprep.subr.bf16.mxu0 0
        %787 = vmatpush1.bf16.xpose.msra.mxu0 0
        %788 = vmatprep.subr.bf16.mxu0 0
        %789 = vmatpush1.bf16.xpose.msra.mxu0 0
        %790 = vmatprep.subr.bf16.mxu0 0
        %791 = vmatpush1.bf16.xpose.msra.mxu0 0
        %792 = vmatprep.subr.bf16.mxu0 0
        %793 = vmatpush1.bf16.xpose.msra.mxu0 %v624
        %794 = vmatprep.subr.bf16.mxu0 0
        %795 = vmatpush2.bf16.xpose.msra.mxu0 0
        %796 = vmatprep.subr.bf16.mxu0 0
        %797 = vmatpush2.bf16.xpose.msra.mxu0 0
        %798 = vmatprep.subr.bf16.mxu0 0
        %799 = vmatpush2.bf16.xpose.msra.mxu0 0
        %800 = vmatprep.subr.bf16.mxu0 0
        %801 = vmatpush2.bf16.xpose.msra.mxu0 0
        %802 = vmatprep.subr.bf16.mxu0 0
        %803 = vmatpush2.bf16.xpose.msra.mxu0 0
        %804 = vmatprep.subr.bf16.mxu0 0
        %805 = vmatpush2.bf16.xpose.msra.mxu0 0
        %806 = vmatprep.subr.bf16.mxu0 0
        %807 = vmatpush2.bf16.xpose.msra.mxu0 0
        %808 = vmatprep.subr.bf16.mxu0 0
        %809 = vmatpush2.bf16.xpose.msra.mxu0 0
        %810 = vmatprep.mubr.bf16.mxu0 0
        %811 = vmatmul.mubr.bf16.gmra.mxu0 %v776
        %v812 = vpop.f32.mrf.mxu0
        %v813 = vadd.f32 0.0, %v812
        %v814 = vpop.f32.mrf.mxu0
        %v815 = vpop.f32.mrf.mxu0
        %v816 = vadd.f32 0.0, %v815
        %v817 = vpop.f32.mrf.mxu0
        %818 = vdwg.mxu0
        %v819 = vsel %vm587, %v813, -1e+30
        %v820 = vsel %vm588, %v816, -1e+30
        %v821 = vsel %vm537, %v819, -inf
        %822 = vmax.xlane.f32.xlu0 %v821
        %v823 = vpop.xlane.xlu0 %822
        %v824 = vsel %vm537, %v820, -inf
        %825 = vmax.xlane.f32.xlu0 %v824
        %v826 = vpop.xlane.xlu0 %825
        %v827 = vsub.f32 %v819, %v823
        %v828 = vsub.f32 %v820, %v826
        %v829 = vmul.f32 %v827, 1.442695
        %v830 = vpow.pop %v829
        %v831 = vmul.f32 %v828, 1.442695
        %v832 = vpow.pop %v831
        %v833 = vsel %vm537, %v830, 0.0
        %834 = vadd.xlane.f32.xlu0 %v833
        %v835 = vpop.xlane.xlu0 %834
        %v836 = vsel %vm537, %v832, 0.0
        %837 = vadd.xlane.f32.xlu0 %v836
        %v838 = vpop.xlane.xlu0 %837
        %v839 = vpack.c.bf16 %v832, %v830
        %v841 = vsel %vm537, %v839, 0
        %843 = vmatprep.subr.bf16.mxu0 0
        %844 = vmatpush1.bf16.msra.mxu0 0
        %845 = vmatprep.subr.bf16.mxu0 0
        %846 = vmatpush1.bf16.msra.mxu0 0
        %847 = vmatprep.subr.bf16.mxu0 0
        %848 = vmatpush1.bf16.msra.mxu0 0
        %849 = vmatprep.subr.bf16.mxu0 0
        %850 = vmatpush1.bf16.msra.mxu0 0
        %851 = vmatprep.subr.bf16.mxu0 0
        %852 = vmatpush1.bf16.msra.mxu0 0
        %853 = vmatprep.subr.bf16.mxu0 0
        %854 = vmatpush1.bf16.msra.mxu0 0
        %855 = vmatprep.subr.bf16.mxu0 0
        %856 = vmatpush1.bf16.msra.mxu0 0
        %857 = vmatprep.subr.bf16.mxu0 0
        %858 = vmatpush1.bf16.msra.mxu0 %v691
        %859 = vmatprep.subr.bf16.mxu0 0
        %860 = vmatpush2.bf16.msra.mxu0 0
        %861 = vmatprep.subr.bf16.mxu0 0
        %862 = vmatpush2.bf16.msra.mxu0 0
        %863 = vmatprep.subr.bf16.mxu0 0
        %864 = vmatpush2.bf16.msra.mxu0 0
        %865 = vmatprep.subr.bf16.mxu0 0
        %866 = vmatpush2.bf16.msra.mxu0 0
        %867 = vmatprep.subr.bf16.mxu0 0
        %868 = vmatpush2.bf16.msra.mxu0 0
        %869 = vmatprep.subr.bf16.mxu0 0
        %870 = vmatpush2.bf16.msra.mxu0 0
        %871 = vmatprep.subr.bf16.mxu0 0
        %872 = vmatpush2.bf16.msra.mxu0 0
        %873 = vmatprep.subr.bf16.mxu0 0
        %874 = vmatpush2.bf16.msra.mxu0 0
        %875 = vmatprep.mubr.bf16.mxu0 0
        %876 = vmatmul.mubr.bf16.gmra.mxu0 %v841
        %v877 = vpop.f32.mrf.mxu0
        %v878 = vadd.f32 0.0, %v877
        %v879 = vpop.f32.mrf.mxu0
        %v880 = vpop.f32.mrf.mxu0
        %v881 = vadd.f32 0.0, %v880
        %v882 = vpop.f32.mrf.mxu0
        %883 = vdwg.mxu0
        %v884 = vrcp.pop %v835
        %v885 = vrcp.pop %v838
        %v886 = vmul.f32 %v878, %v884
        %v887 = vmul.f32 %v881, %v885
        %888 = vrot.lane.b32.xlu0 %v589, 48
        %v889 = vpop.permute.xlu0 %888
        %890 = vrot.lane.b32.xlu0 %v590, 48
        %v891 = vpop.permute.xlu0 %890
        %894 = vrot.lane.b32.xlu0 %v507, 80
        %v895 = vpop.permute.xlu0 %894
        %896 = vrot.lane.b32.xlu0 %v511, 80
        %v897 = vpop.permute.xlu0 %896
        %v900 = vsel %vm537, %v889, %v895
        %v901 = vsel %vm537, %v891, %v897
        %902 = vrot.lane.b32.xlu0 %v515, 64
        %v903 = vpop.permute.xlu0 %902
        %904 = vrot.lane.b32.xlu0 %v516, 64
        %v905 = vpop.permute.xlu0 %904
        %v908 = vmul.f32 %v507, %v903
        %v909 = vmul.f32 %v511, %v905
        %v910 = vmul.f32 %v900, %v517
        %v911 = vmul.f32 %v901, %v518
        %914 = vrot.lane.b32.xlu0 %v910, 64
        %v915 = vpop.permute.xlu0 %914
        %916 = vrot.lane.b32.xlu0 %v911, 64
        %v917 = vpop.permute.xlu0 %916
        %v920 = vadd.f32 %v908, %v915
        %v921 = vadd.f32 %v909, %v917
        %v922 = vmul.f32 %v920, 0.17677669
        %v923 = vmul.f32 %v921, 0.17677669
        %v924 = vpack.c.bf16 %v923, %v922
        %v925 = vpack.c.bf16 %v581, %v580
        %927 = vrot.lane.b32.xlu0 %v924, 64
        %v928 = vpop.permute.xlu0 %927
        %930 = vrot.lane.b32.xlu0 %v925, 96
        %v931 = vpop.permute.xlu0 %930
        %v933 = vsel %vm619, %v928, 0
        %v936 = vsel %vm619, %v931, 0
        %938 = vmatprep.subr.bf16.mxu0 0
        %939 = vmatpush1.bf16.xpose.msra.mxu0 0
        %940 = vmatprep.subr.bf16.mxu0 0
        %941 = vmatpush1.bf16.xpose.msra.mxu0 0
        %942 = vmatprep.subr.bf16.mxu0 0
        %943 = vmatpush1.bf16.xpose.msra.mxu0 0
        %944 = vmatprep.subr.bf16.mxu0 0
        %945 = vmatpush1.bf16.xpose.msra.mxu0 0
        %946 = vmatprep.subr.bf16.mxu0 0
        %947 = vmatpush1.bf16.xpose.msra.mxu0 0
        %948 = vmatprep.subr.bf16.mxu0 0
        %949 = vmatpush1.bf16.xpose.msra.mxu0 0
        %950 = vmatprep.subr.bf16.mxu0 0
        %951 = vmatpush1.bf16.xpose.msra.mxu0 0
        %952 = vmatprep.subr.bf16.mxu0 0
        %953 = vmatpush1.bf16.xpose.msra.mxu0 %v936
        %954 = vmatprep.subr.bf16.mxu0 0
        %955 = vmatpush2.bf16.xpose.msra.mxu0 0
        %956 = vmatprep.subr.bf16.mxu0 0
        %957 = vmatpush2.bf16.xpose.msra.mxu0 0
        %958 = vmatprep.subr.bf16.mxu0 0
        %959 = vmatpush2.bf16.xpose.msra.mxu0 0
        %960 = vmatprep.subr.bf16.mxu0 0
        %961 = vmatpush2.bf16.xpose.msra.mxu0 0
        %962 = vmatprep.subr.bf16.mxu0 0
        %963 = vmatpush2.bf16.xpose.msra.mxu0 0
        %964 = vmatprep.subr.bf16.mxu0 0
        %965 = vmatpush2.bf16.xpose.msra.mxu0 0
        %966 = vmatprep.subr.bf16.mxu0 0
        %967 = vmatpush2.bf16.xpose.msra.mxu0 0
        %968 = vmatprep.subr.bf16.mxu0 0
        %969 = vmatpush2.bf16.xpose.msra.mxu0 0
        %970 = vmatprep.mubr.bf16.mxu0 0
        %971 = vmatmul.mubr.bf16.gmra.mxu0 %v933
        %v972 = vpop.f32.mrf.mxu0
        %v973 = vadd.f32 0.0, %v972
        %v974 = vpop.f32.mrf.mxu0
        %v975 = vpop.f32.mrf.mxu0
        %v976 = vadd.f32 0.0, %v975
        %v977 = vpop.f32.mrf.mxu0
        %978 = vdwg.mxu0
        %v979 = vsel %vm587, %v973, -1e+30
        %v980 = vsel %vm588, %v976, -1e+30
        %v981 = vsel %vm537, %v979, -inf
        %982 = vmax.xlane.f32.xlu0 %v981
        %v983 = vpop.xlane.xlu0 %982
        %v984 = vsel %vm537, %v980, -inf
        %985 = vmax.xlane.f32.xlu0 %v984
        %v986 = vpop.xlane.xlu0 %985
        %v987 = vsub.f32 %v979, %v983
        %v988 = vsub.f32 %v980, %v986
        %v989 = vmul.f32 %v987, 1.442695
        %v990 = vpow.pop %v989
        %v991 = vmul.f32 %v988, 1.442695
        %v992 = vpow.pop %v991
        %v993 = vsel %vm537, %v990, 0.0
        %994 = vadd.xlane.f32.xlu0 %v993
        %v995 = vpop.xlane.xlu0 %994
        %v996 = vsel %vm537, %v992, 0.0
        %997 = vadd.xlane.f32.xlu0 %v996
        %v998 = vpop.xlane.xlu0 %997
        %v999 = vpack.c.bf16 %v992, %v990
        %1000 = vrot.lane.b32.xlu0 %v688, 32
        %v1001 = vpop.permute.xlu0 %1000
        %v1004 = vsel %vm537, %v999, 0
        %1006 = vmatprep.subr.bf16.mxu0 0
        %1007 = vmatpush1.bf16.msra.mxu0 0
        %1008 = vmatprep.subr.bf16.mxu0 0
        %1009 = vmatpush1.bf16.msra.mxu0 0
        %1010 = vmatprep.subr.bf16.mxu0 0
        %1011 = vmatpush1.bf16.msra.mxu0 0
        %1012 = vmatprep.subr.bf16.mxu0 0
        %1013 = vmatpush1.bf16.msra.mxu0 0
        %1014 = vmatprep.subr.bf16.mxu0 0
        %1015 = vmatpush1.bf16.msra.mxu0 0
        %1016 = vmatprep.subr.bf16.mxu0 0
        %1017 = vmatpush1.bf16.msra.mxu0 0
        %1018 = vmatprep.subr.bf16.mxu0 0
        %1019 = vmatpush1.bf16.msra.mxu0 0
        %1020 = vmatprep.subr.bf16.mxu0 0
        %1021 = vmatpush1.bf16.msra.mxu0 %v1001
        %1022 = vmatprep.subr.bf16.mxu0 0
        %1023 = vmatpush2.bf16.msra.mxu0 0
        %1024 = vmatprep.subr.bf16.mxu0 0
        %1025 = vmatpush2.bf16.msra.mxu0 0
        %1026 = vmatprep.subr.bf16.mxu0 0
        %1027 = vmatpush2.bf16.msra.mxu0 0
        %1028 = vmatprep.subr.bf16.mxu0 0
        %1029 = vmatpush2.bf16.msra.mxu0 0
        %1030 = vmatprep.subr.bf16.mxu0 0
        %1031 = vmatpush2.bf16.msra.mxu0 0
        %1032 = vmatprep.subr.bf16.mxu0 0
        %1033 = vmatpush2.bf16.msra.mxu0 0
        %1034 = vmatprep.subr.bf16.mxu0 0
        %1035 = vmatpush2.bf16.msra.mxu0 0
        %1036 = vmatprep.subr.bf16.mxu0 0
        %1037 = vmatpush2.bf16.msra.mxu0 0
        %1038 = vmatprep.mubr.bf16.mxu0 0
        %1039 = vmatmul.mubr.bf16.gmra.mxu0 %v1004
        %v1040 = vpop.f32.mrf.mxu0
        %v1041 = vadd.f32 0.0, %v1040
        %v1042 = vpop.f32.mrf.mxu0
        %v1043 = vpop.f32.mrf.mxu0
        %v1044 = vadd.f32 0.0, %v1043
        %v1045 = vpop.f32.mrf.mxu0
        %1046 = vdwg.mxu0
        %v1047 = vrcp.pop %v995
        %v1048 = vrcp.pop %v998
        %v1049 = vmul.f32 %v1041, %v1047
        %v1050 = vmul.f32 %v1044, %v1048
        %1051 = vrot.lane.b32.xlu0 %v589, 16
        %v1052 = vpop.permute.xlu0 %1051
        %1053 = vrot.lane.b32.xlu0 %v590, 16
        %v1054 = vpop.permute.xlu0 %1053
        %1057 = vrot.lane.b32.xlu0 %v507, 48
        %v1058 = vpop.permute.xlu0 %1057
        %1059 = vrot.lane.b32.xlu0 %v511, 48
        %v1060 = vpop.permute.xlu0 %1059
        %v1063 = vsel %vm537, %v1052, %v1058
        %v1064 = vsel %vm537, %v1054, %v1060
        %1065 = vrot.lane.b32.xlu0 %v515, 96
        %v1066 = vpop.permute.xlu0 %1065
        %1067 = vrot.lane.b32.xlu0 %v516, 96
        %v1068 = vpop.permute.xlu0 %1067
        %v1071 = vmul.f32 %v507, %v1066
        %v1072 = vmul.f32 %v511, %v1068
        %v1073 = vmul.f32 %v1063, %v517
        %v1074 = vmul.f32 %v1064, %v518
        %1077 = vrot.lane.b32.xlu0 %v1073, 96
        %v1078 = vpop.permute.xlu0 %1077
        %1079 = vrot.lane.b32.xlu0 %v1074, 96
        %v1080 = vpop.permute.xlu0 %1079
        %v1083 = vadd.f32 %v1071, %v1078
        %v1084 = vadd.f32 %v1072, %v1080
        %v1085 = vmul.f32 %v1083, 0.17677669
        %v1086 = vmul.f32 %v1084, 0.17677669
        %v1087 = vpack.c.bf16 %v1086, %v1085
        %1089 = vrot.lane.b32.xlu0 %v1087, 32
        %v1090 = vpop.permute.xlu0 %1089
        %v1092 = vsel %vm619, %v1090, 0
        %1094 = vmatprep.subr.bf16.mxu0 0
        %1095 = vmatpush1.bf16.xpose.msra.mxu0 0
        %1096 = vmatprep.subr.bf16.mxu0 0
        %1097 = vmatpush1.bf16.xpose.msra.mxu0 0
        %1098 = vmatprep.subr.bf16.mxu0 0
        %1099 = vmatpush1.bf16.xpose.msra.mxu0 0
        %1100 = vmatprep.subr.bf16.mxu0 0
        %1101 = vmatpush1.bf16.xpose.msra.mxu0 0
        %1102 = vmatprep.subr.bf16.mxu0 0
        %1103 = vmatpush1.bf16.xpose.msra.mxu0 0
        %1104 = vmatprep.subr.bf16.mxu0 0
        %1105 = vmatpush1.bf16.xpose.msra.mxu0 0
        %1106 = vmatprep.subr.bf16.mxu0 0
        %1107 = vmatpush1.bf16.xpose.msra.mxu0 0
        %1108 = vmatprep.subr.bf16.mxu0 0
        %1109 = vmatpush1.bf16.xpose.msra.mxu0 %v936
        %1110 = vmatprep.subr.bf16.mxu0 0
        %1111 = vmatpush2.bf16.xpose.msra.mxu0 0
        %1112 = vmatprep.subr.bf16.mxu0 0
        %1113 = vmatpush2.bf16.xpose.msra.mxu0 0
        %1114 = vmatprep.subr.bf16.mxu0 0
        %1115 = vmatpush2.bf16.xpose.msra.mxu0 0
        %1116 = vmatprep.subr.bf16.mxu0 0
        %1117 = vmatpush2.bf16.xpose.msra.mxu0 0
        %1118 = vmatprep.subr.bf16.mxu0 0
        %1119 = vmatpush2.bf16.xpose.msra.mxu0 0
        %1120 = vmatprep.subr.bf16.mxu0 0
        %1121 = vmatpush2.bf16.xpose.msra.mxu0 0
        %1122 = vmatprep.subr.bf16.mxu0 0
        %1123 = vmatpush2.bf16.xpose.msra.mxu0 0
        %1124 = vmatprep.subr.bf16.mxu0 0
        %1125 = vmatpush2.bf16.xpose.msra.mxu0 0
        %1126 = vmatprep.mubr.bf16.mxu0 0
        %1127 = vmatmul.mubr.bf16.gmra.mxu0 %v1092
        %v1128 = vpop.f32.mrf.mxu0
        %v1129 = vadd.f32 0.0, %v1128
        %v1130 = vpop.f32.mrf.mxu0
        %v1131 = vpop.f32.mrf.mxu0
        %v1132 = vadd.f32 0.0, %v1131
        %v1133 = vpop.f32.mrf.mxu0
        %1134 = vdwg.mxu0
        %v1135 = vsel %vm587, %v1129, -1e+30
        %v1136 = vsel %vm588, %v1132, -1e+30
        %v1137 = vsel %vm537, %v1135, -inf
        %1138 = vmax.xlane.f32.xlu0 %v1137
        %v1139 = vpop.xlane.xlu0 %1138
        %v1140 = vsel %vm537, %v1136, -inf
        %1141 = vmax.xlane.f32.xlu0 %v1140
        %v1142 = vpop.xlane.xlu0 %1141
        %v1143 = vsub.f32 %v1135, %v1139
        %v1144 = vsub.f32 %v1136, %v1142
        %v1145 = vmul.f32 %v1143, 1.442695
        %v1146 = vpow.pop %v1145
        %v1147 = vmul.f32 %v1144, 1.442695
        %v1148 = vpow.pop %v1147
        %v1149 = vsel %vm537, %v1146, 0.0
        %1150 = vadd.xlane.f32.xlu0 %v1149
        %v1151 = vpop.xlane.xlu0 %1150
        %v1152 = vsel %vm537, %v1148, 0.0
        %1153 = vadd.xlane.f32.xlu0 %v1152
        %v1154 = vpop.xlane.xlu0 %1153
        %v1155 = vpack.c.bf16 %v1148, %v1146
        %v1157 = vsel %vm537, %v1155, 0
        %1159 = vmatprep.subr.bf16.mxu0 0
        %1160 = vmatpush1.bf16.msra.mxu0 0
        %1161 = vmatprep.subr.bf16.mxu0 0
        %1162 = vmatpush1.bf16.msra.mxu0 0
        %1163 = vmatprep.subr.bf16.mxu0 0
        %1164 = vmatpush1.bf16.msra.mxu0 0
        %1165 = vmatprep.subr.bf16.mxu0 0
        %1166 = vmatpush1.bf16.msra.mxu0 0
        %1167 = vmatprep.subr.bf16.mxu0 0
        %1168 = vmatpush1.bf16.msra.mxu0 0
        %1169 = vmatprep.subr.bf16.mxu0 0
        %1170 = vmatpush1.bf16.msra.mxu0 0
        %1171 = vmatprep.subr.bf16.mxu0 0
        %1172 = vmatpush1.bf16.msra.mxu0 0
        %1173 = vmatprep.subr.bf16.mxu0 0
        %1174 = vmatpush1.bf16.msra.mxu0 %v1001
        %1175 = vmatprep.subr.bf16.mxu0 0
        %1176 = vmatpush2.bf16.msra.mxu0 0
        %1177 = vmatprep.subr.bf16.mxu0 0
        %1178 = vmatpush2.bf16.msra.mxu0 0
        %1179 = vmatprep.subr.bf16.mxu0 0
        %1180 = vmatpush2.bf16.msra.mxu0 0
        %1181 = vmatprep.subr.bf16.mxu0 0
        %1182 = vmatpush2.bf16.msra.mxu0 0
        %1183 = vmatprep.subr.bf16.mxu0 0
        %1184 = vmatpush2.bf16.msra.mxu0 0
        %1185 = vmatprep.subr.bf16.mxu0 0
        %1186 = vmatpush2.bf16.msra.mxu0 0
        %1187 = vmatprep.subr.bf16.mxu0 0
        %1188 = vmatpush2.bf16.msra.mxu0 0
        %1189 = vmatprep.subr.bf16.mxu0 0
        %1190 = vmatpush2.bf16.msra.mxu0 0
        %1191 = vmatprep.mubr.bf16.mxu0 0
        %1192 = vmatmul.mubr.bf16.gmra.mxu0 %v1157
        %v1193 = vpop.f32.mrf.mxu0
        %v1194 = vadd.f32 0.0, %v1193
        %v1195 = vpop.f32.mrf.mxu0
        %v1196 = vpop.f32.mrf.mxu0
        %v1197 = vadd.f32 0.0, %v1196
        %v1198 = vpop.f32.mrf.mxu0
        %1199 = vdwg.mxu0
        %v1200 = vrcp.pop %v1151
        %v1201 = vrcp.pop %v1154
        %v1202 = vmul.f32 %v1194, %v1200
        %v1203 = vmul.f32 %v1197, %v1201
        %1206 = vrot.lane.b32.xlu0 %v886, 32
        %v1207 = vpop.permute.xlu0 %1206
        %1208 = vrot.lane.b32.xlu0 %v887, 32
        %v1209 = vpop.permute.xlu0 %1208
        %1214 = vrot.lane.b32.xlu0 %v1049, 64
        %v1215 = vpop.permute.xlu0 %1214
        %1216 = vrot.lane.b32.xlu0 %v1050, 64
        %v1217 = vpop.permute.xlu0 %1216
        %1222 = vrot.lane.b32.xlu0 %v1202, 96
        %v1223 = vpop.permute.xlu0 %1222
        %1224 = vrot.lane.b32.xlu0 %v1203, 96
        %v1225 = vpop.permute.xlu0 %1224
        %v1228 = vsel %vm619, %v739, %v1207
        %v1229 = vsel %vm619, %v740, %v1209
        %vm1230 = vcmask 523264
        %v1231 = vsel %vm1230, %v1228, %v1215
        %v1232 = vsel %vm1230, %v1229, %v1217
        %vm1233 = vcmask 785408
        %v1234 = vsel %vm1233, %v1231, %v1223
        %v1235 = vsel %vm1233, %v1232, %v1225
        %v1236 = vld [vmem:[%s4] sm:$0xf]
        %v1237 = vld [vmem:[%s4 + $0x4] sm:$0xf]
        %v1238 = vld [vmem:[%s4 + $0x8] sm:$0xf]
        %v1239 = vld [vmem:[%s4 + $0xc] sm:$0xf]
        %v1240 = vld [vmem:[%s4 + $0x10] sm:$0xf]
        %v1241 = vld [vmem:[%s4 + $0x14] sm:$0xf]
        %v1242 = vld [vmem:[%s4 + $0x18] sm:$0xf]
        %v1243 = vld [vmem:[%s4 + $0x1c] sm:$0xf]
        %v1244 = vld [vmem:[%s4 + $0x20] sm:$0xf]
        %v1245 = vld [vmem:[%s4 + $0x24] sm:$0xf]
        %v1246 = vld [vmem:[%s4 + $0x28] sm:$0xf]
        %v1247 = vld [vmem:[%s4 + $0x2c] sm:$0xf]
        %v1248 = vld [vmem:[%s4 + $0x30] sm:$0xf]
        %v1249 = vld [vmem:[%s4 + $0x34] sm:$0xf]
        %v1250 = vld [vmem:[%s4 + $0x38] sm:$0xf]
        %v1251 = vld [vmem:[%s4 + $0x3c] sm:$0xf]
        %v1252 = vpack.c.bf16 %v1235, %v1234
        %v1269 = vunpack.c.l.b16 %v1236
        %v1270 = vunpack.c.l.b16 %v1237
        %v1271 = vunpack.c.l.b16 %v1238
        %v1272 = vunpack.c.l.b16 %v1239
        %v1273 = vunpack.c.l.b16 %v1240
        %v1274 = vunpack.c.l.b16 %v1241
        %v1275 = vunpack.c.l.b16 %v1242
        %v1276 = vunpack.c.l.b16 %v1243
        %v1277 = vunpack.c.l.b16 %v1244
        %v1278 = vunpack.c.l.b16 %v1245
        %v1279 = vunpack.c.l.b16 %v1246
        %v1280 = vunpack.c.l.b16 %v1247
        %v1281 = vunpack.c.l.b16 %v1248
        %v1282 = vunpack.c.l.b16 %v1249
        %v1283 = vunpack.c.l.b16 %v1250
        %v1284 = vunpack.c.l.b16 %v1251
        %v1285 = vpack.c.b16 %v1270, %v1269
        %v1286 = vpack.c.b16 %v1272, %v1271
        %v1287 = vpack.c.b16 %v1274, %v1273
        %v1288 = vpack.c.b16 %v1276, %v1275
        %v1289 = vpack.c.b16 %v1278, %v1277
        %v1290 = vpack.c.b16 %v1280, %v1279
        %v1291 = vpack.c.b16 %v1282, %v1281
        %v1292 = vpack.c.b16 %v1284, %v1283
        %1301 = vmatprep.subr.bf16.mxu0 0
        %1302 = vmatpush1.bf16.msra.mxu0 %v1292
        %1303 = vmatprep.subr.bf16.mxu0 0
        %1304 = vmatpush1.bf16.msra.mxu0 %v1291
        %1305 = vmatprep.subr.bf16.mxu0 0
        %1306 = vmatpush1.bf16.msra.mxu0 %v1290
        %1307 = vmatprep.subr.bf16.mxu0 0
        %1308 = vmatpush1.bf16.msra.mxu0 %v1289
        %1309 = vmatprep.subr.bf16.mxu0 0
        %1310 = vmatpush1.bf16.msra.mxu0 %v1288
        %1311 = vmatprep.subr.bf16.mxu0 0
        %1312 = vmatpush1.bf16.msra.mxu0 %v1287
        %1313 = vmatprep.subr.bf16.mxu0 0
        %1314 = vmatpush1.bf16.msra.mxu0 %v1286
        %1315 = vmatprep.subr.bf16.mxu0 0
        %1316 = vmatpush1.bf16.msra.mxu0 %v1285
        %1317 = vmatprep.subr.bf16.mxu0 0
        %1318 = vmatpush2.bf16.msra.mxu0 0
        %1319 = vmatprep.subr.bf16.mxu0 0
        %1320 = vmatpush2.bf16.msra.mxu0 0
        %1321 = vmatprep.subr.bf16.mxu0 0
        %1322 = vmatpush2.bf16.msra.mxu0 0
        %1323 = vmatprep.subr.bf16.mxu0 0
        %1324 = vmatpush2.bf16.msra.mxu0 0
        %1325 = vmatprep.subr.bf16.mxu0 0
        %1326 = vmatpush2.bf16.msra.mxu0 0
        %1327 = vmatprep.subr.bf16.mxu0 0
        %1328 = vmatpush2.bf16.msra.mxu0 0
        %1329 = vmatprep.subr.bf16.mxu0 0
        %1330 = vmatpush2.bf16.msra.mxu0 0
        %1331 = vmatprep.subr.bf16.mxu0 0
        %1332 = vmatpush2.bf16.msra.mxu0 0
        %1333 = vmatprep.mubr.bf16.mxu0 0
        %1334 = vmatmul.mubr.bf16.gmra.mxu0 %v1252
        %v1335 = vpop.f32.mrf.mxu0
        %v1336 = vadd.f32 0.0, %v1335
        %v1337 = vpop.f32.mrf.mxu0
        %v1338 = vpop.f32.mrf.mxu0
        %v1339 = vadd.f32 0.0, %v1338
        %v1340 = vpop.f32.mrf.mxu0
        %1341 = vdwg.mxu0
        %v1342 = vadd.f32 %v349, %v1336
        %v1343 = vadd.f32 %v350, %v1339
        %v1344 = vmul.f32 %v1342, %v1342
        %v1345 = vmul.f32 %v1343, %v1343
        %1346 = vadd.xlane.f32.xlu0 %v1344
        %v1347 = vpop.xlane.xlu0 %1346
        %1348 = vadd.xlane.f32.xlu0 %v1345
        %v1349 = vpop.xlane.xlu0 %1348
        %v1350 = vmul.f32 %v1347, %v357
        %v1351 = vmul.f32 %v1349, %v357
        %v1352 = vadd.f32 %v1350, 1e-06
        %v1353 = vadd.f32 %v1351, 1e-06
        %v1354 = vrsqrt.pop %v1352
        %v1355 = vrsqrt.pop %v1353
        %v1356 = vmul.f32 %v1342, %v1354
        %v1357 = vmul.f32 %v1343, %v1355
        %v1358 = vld [vmem:[%s2] sm:$0x1]
        %v1360 = vlaneseq
        %v1361 = vshrl.u32 %v1360, 7
        %v1362 = vsub.s32 0, %v1361
        %v1363 = vrot.slane %v1358, %v1362
        %v1365 = vmul.f32 %v1356, %v1363
        %v1366 = vmul.f32 %v1357, %v1363
        %v1367 = vld [vmem:[%s5] sm:$0xff]
        %v1368 = vld [vmem:[%s5 + $0x8] sm:$0xff]
        %v1369 = vld [vmem:[%s5 + $0x10] sm:$0xff]
        %v1370 = vld [vmem:[%s5 + $0x18] sm:$0xff]
        %v1371 = vld [vmem:[%s5 + $0x20] sm:$0xff]
        %v1372 = vld [vmem:[%s5 + $0x28] sm:$0xff]
        %v1373 = vld [vmem:[%s5 + $0x30] sm:$0xff]
        %v1374 = vld [vmem:[%s5 + $0x38] sm:$0xff]
        %v1375 = vld [vmem:[%s5 + $0x40] sm:$0xff]
        %v1376 = vld [vmem:[%s5 + $0x48] sm:$0xff]
        %v1377 = vld [vmem:[%s5 + $0x50] sm:$0xff]
        %v1378 = vld [vmem:[%s5 + $0x58] sm:$0xff]
        %v1379 = vld [vmem:[%s5 + $0x60] sm:$0xff]
        %v1380 = vld [vmem:[%s5 + $0x68] sm:$0xff]
        %v1381 = vld [vmem:[%s5 + $0x70] sm:$0xff]
        %v1382 = vld [vmem:[%s5 + $0x78] sm:$0xff]
        %v1383 = vld [vmem:[%s5 + $0x80] sm:$0xff]
        %v1384 = vld [vmem:[%s5 + $0x88] sm:$0xff]
        %v1385 = vld [vmem:[%s5 + $0x90] sm:$0xff]
        %v1386 = vld [vmem:[%s5 + $0x98] sm:$0xff]
        %v1387 = vld [vmem:[%s5 + $0xa0] sm:$0xff]
        %v1388 = vld [vmem:[%s5 + $0xa8] sm:$0xff]
        %v1389 = vld [vmem:[%s5 + $0xb0] sm:$0xff]
        %v1390 = vld [vmem:[%s5 + $0xb8] sm:$0xff]
        %v1391 = vld [vmem:[%s5 + $0xc0] sm:$0xff]
        %v1392 = vld [vmem:[%s5 + $0xc8] sm:$0xff]
        %v1393 = vld [vmem:[%s5 + $0xd0] sm:$0xff]
        %v1394 = vld [vmem:[%s5 + $0xd8] sm:$0xff]
        %v1395 = vld [vmem:[%s5 + $0xe0] sm:$0xff]
        %v1396 = vld [vmem:[%s5 + $0xe8] sm:$0xff]
        %v1397 = vld [vmem:[%s5 + $0xf0] sm:$0xff]
        %v1398 = vld [vmem:[%s5 + $0xf8] sm:$0xff]
        %v1399 = vpack.c.bf16 %v1366, %v1365
        %v1432 = vunpack.c.l.b16 %v1367
        %v1433 = vunpack.c.h.b16 %v1367
        %v1434 = vunpack.c.l.b16 %v1368
        %v1435 = vunpack.c.h.b16 %v1368
        %v1436 = vunpack.c.l.b16 %v1369
        %v1437 = vunpack.c.h.b16 %v1369
        %v1438 = vunpack.c.l.b16 %v1370
        %v1439 = vunpack.c.h.b16 %v1370
        %v1440 = vunpack.c.l.b16 %v1371
        %v1441 = vunpack.c.h.b16 %v1371
        %v1442 = vunpack.c.l.b16 %v1372
        %v1443 = vunpack.c.h.b16 %v1372
        %v1444 = vunpack.c.l.b16 %v1373
        %v1445 = vunpack.c.h.b16 %v1373
        %v1446 = vunpack.c.l.b16 %v1374
        %v1447 = vunpack.c.h.b16 %v1374
        %v1448 = vunpack.c.l.b16 %v1375
        %v1449 = vunpack.c.h.b16 %v1375
        %v1450 = vunpack.c.l.b16 %v1376
        %v1451 = vunpack.c.h.b16 %v1376
        %v1452 = vunpack.c.l.b16 %v1377
        %v1453 = vunpack.c.h.b16 %v1377
        %v1454 = vunpack.c.l.b16 %v1378
        %v1455 = vunpack.c.h.b16 %v1378
        %v1456 = vunpack.c.l.b16 %v1379
        %v1457 = vunpack.c.h.b16 %v1379
        %v1458 = vunpack.c.l.b16 %v1380
        %v1459 = vunpack.c.h.b16 %v1380
        %v1460 = vunpack.c.l.b16 %v1381
        %v1461 = vunpack.c.h.b16 %v1381
        %v1462 = vunpack.c.l.b16 %v1382
        %v1463 = vunpack.c.h.b16 %v1382
        %v1464 = vunpack.c.l.b16 %v1383
        %v1465 = vunpack.c.h.b16 %v1383
        %v1466 = vunpack.c.l.b16 %v1384
        %v1467 = vunpack.c.h.b16 %v1384
        %v1468 = vunpack.c.l.b16 %v1385
        %v1469 = vunpack.c.h.b16 %v1385
        %v1470 = vunpack.c.l.b16 %v1386
        %v1471 = vunpack.c.h.b16 %v1386
        %v1472 = vunpack.c.l.b16 %v1387
        %v1473 = vunpack.c.h.b16 %v1387
        %v1474 = vunpack.c.l.b16 %v1388
        %v1475 = vunpack.c.h.b16 %v1388
        %v1476 = vunpack.c.l.b16 %v1389
        %v1477 = vunpack.c.h.b16 %v1389
        %v1478 = vunpack.c.l.b16 %v1390
        %v1479 = vunpack.c.h.b16 %v1390
        %v1480 = vunpack.c.l.b16 %v1391
        %v1481 = vunpack.c.h.b16 %v1391
        %v1482 = vunpack.c.l.b16 %v1392
        %v1483 = vunpack.c.h.b16 %v1392
        %v1484 = vunpack.c.l.b16 %v1393
        %v1485 = vunpack.c.h.b16 %v1393
        %v1486 = vunpack.c.l.b16 %v1394
        %v1487 = vunpack.c.h.b16 %v1394
        %v1488 = vunpack.c.l.b16 %v1395
        %v1489 = vunpack.c.h.b16 %v1395
        %v1490 = vunpack.c.l.b16 %v1396
        %v1491 = vunpack.c.h.b16 %v1396
        %v1492 = vunpack.c.l.b16 %v1397
        %v1493 = vunpack.c.h.b16 %v1397
        %v1494 = vunpack.c.l.b16 %v1398
        %v1495 = vunpack.c.h.b16 %v1398
        %v1496 = vpack.c.b16 %v1436, %v1432
        %v1497 = vpack.c.b16 %v1437, %v1433
        %v1498 = vpack.c.b16 %v1438, %v1434
        %v1499 = vpack.c.b16 %v1439, %v1435
        %v1500 = vpack.c.b16 %v1444, %v1440
        %v1501 = vpack.c.b16 %v1445, %v1441
        %v1502 = vpack.c.b16 %v1446, %v1442
        %v1503 = vpack.c.b16 %v1447, %v1443
        %v1504 = vpack.c.b16 %v1452, %v1448
        %v1505 = vpack.c.b16 %v1453, %v1449
        %v1506 = vpack.c.b16 %v1454, %v1450
        %v1507 = vpack.c.b16 %v1455, %v1451
        %v1508 = vpack.c.b16 %v1460, %v1456
        %v1509 = vpack.c.b16 %v1461, %v1457
        %v1510 = vpack.c.b16 %v1462, %v1458
        %v1511 = vpack.c.b16 %v1463, %v1459
        %v1512 = vpack.c.b16 %v1468, %v1464
        %v1513 = vpack.c.b16 %v1469, %v1465
        %v1514 = vpack.c.b16 %v1470, %v1466
        %v1515 = vpack.c.b16 %v1471, %v1467
        %v1516 = vpack.c.b16 %v1476, %v1472
        %v1517 = vpack.c.b16 %v1477, %v1473
        %v1518 = vpack.c.b16 %v1478, %v1474
        %v1519 = vpack.c.b16 %v1479, %v1475
        %v1520 = vpack.c.b16 %v1484, %v1480
        %v1521 = vpack.c.b16 %v1485, %v1481
        %v1522 = vpack.c.b16 %v1486, %v1482
        %v1523 = vpack.c.b16 %v1487, %v1483
        %v1524 = vpack.c.b16 %v1492, %v1488
        %v1525 = vpack.c.b16 %v1493, %v1489
        %v1526 = vpack.c.b16 %v1494, %v1490
        %v1527 = vpack.c.b16 %v1495, %v1491
        %1560 = vmatprep.subr.bf16.mxu0 %v1525
        %1561 = vmatpush1.bf16.msra.mxu0 %v1524
        %1562 = vmatprep.subr.bf16.mxu0 %v1521
        %1563 = vmatpush1.bf16.msra.mxu0 %v1520
        %1564 = vmatprep.subr.bf16.mxu0 %v1517
        %1565 = vmatpush1.bf16.msra.mxu0 %v1516
        %1566 = vmatprep.subr.bf16.mxu0 %v1513
        %1567 = vmatpush1.bf16.msra.mxu0 %v1512
        %1568 = vmatprep.subr.bf16.mxu0 %v1509
        %1569 = vmatpush1.bf16.msra.mxu0 %v1508
        %1570 = vmatprep.subr.bf16.mxu0 %v1505
        %1571 = vmatpush1.bf16.msra.mxu0 %v1504
        %1572 = vmatprep.subr.bf16.mxu0 %v1501
        %1573 = vmatpush1.bf16.msra.mxu0 %v1500
        %1574 = vmatprep.subr.bf16.mxu0 %v1497
        %1575 = vmatpush1.bf16.msra.mxu0 %v1496
        %1576 = vmatprep.subr.bf16.mxu0 0
        %1577 = vmatpush2.bf16.msra.mxu0 0
        %1578 = vmatprep.subr.bf16.mxu0 0
        %1579 = vmatpush2.bf16.msra.mxu0 0
        %1580 = vmatprep.subr.bf16.mxu0 0
        %1581 = vmatpush2.bf16.msra.mxu0 0
        %1582 = vmatprep.subr.bf16.mxu0 0
        %1583 = vmatpush2.bf16.msra.mxu0 0
        %1584 = vmatprep.subr.bf16.mxu0 0
        %1585 = vmatpush2.bf16.msra.mxu0 0
        %1586 = vmatprep.subr.bf16.mxu0 0
        %1587 = vmatpush2.bf16.msra.mxu0 0
        %1588 = vmatprep.subr.bf16.mxu0 0
        %1589 = vmatpush2.bf16.msra.mxu0 0
        %1590 = vmatprep.subr.bf16.mxu0 0
        %1591 = vmatpush2.bf16.msra.mxu0 0
        %1592 = vmatprep.mubr.bf16.mxu0 0
        %1593 = vmatmul.mubr.bf16.gmra.mxu0 %v1399
        %v1594 = vpop.f32.mrf.mxu0
        %v1595 = vadd.f32 0.0, %v1594
        %v1596 = vpop.f32.mrf.mxu0
        %v1597 = vadd.f32 0.0, %v1596
        %v1598 = vpop.f32.mrf.mxu0
        %v1599 = vadd.f32 0.0, %v1598
        %v1600 = vpop.f32.mrf.mxu0
        %v1601 = vadd.f32 0.0, %v1600
        %1602 = vdwg.mxu0
        %1603 = vmatprep.subr.bf16.mxu0 %v1527
        %1604 = vmatpush1.bf16.msra.mxu0 %v1526
        %1605 = vmatprep.subr.bf16.mxu0 %v1523
        %1606 = vmatpush1.bf16.msra.mxu0 %v1522
        %1607 = vmatprep.subr.bf16.mxu0 %v1519
        %1608 = vmatpush1.bf16.msra.mxu0 %v1518
        %1609 = vmatprep.subr.bf16.mxu0 %v1515
        %1610 = vmatpush1.bf16.msra.mxu0 %v1514
        %1611 = vmatprep.subr.bf16.mxu0 %v1511
        %1612 = vmatpush1.bf16.msra.mxu0 %v1510
        %1613 = vmatprep.subr.bf16.mxu0 %v1507
        %1614 = vmatpush1.bf16.msra.mxu0 %v1506
        %1615 = vmatprep.subr.bf16.mxu0 %v1503
        %1616 = vmatpush1.bf16.msra.mxu0 %v1502
        %1617 = vmatprep.subr.bf16.mxu0 %v1499
        %1618 = vmatpush1.bf16.msra.mxu0 %v1498
        %1619 = vmatprep.subr.bf16.mxu0 0
        %1620 = vmatpush2.bf16.msra.mxu0 0
        %1621 = vmatprep.subr.bf16.mxu0 0
        %1622 = vmatpush2.bf16.msra.mxu0 0
        %1623 = vmatprep.subr.bf16.mxu0 0
        %1624 = vmatpush2.bf16.msra.mxu0 0
        %1625 = vmatprep.subr.bf16.mxu0 0
        %1626 = vmatpush2.bf16.msra.mxu0 0
        %1627 = vmatprep.subr.bf16.mxu0 0
        %1628 = vmatpush2.bf16.msra.mxu0 0
        %1629 = vmatprep.subr.bf16.mxu0 0
        %1630 = vmatpush2.bf16.msra.mxu0 0
        %1631 = vmatprep.subr.bf16.mxu0 0
        %1632 = vmatpush2.bf16.msra.mxu0 0
        %1633 = vmatprep.subr.bf16.mxu0 0
        %1634 = vmatpush2.bf16.msra.mxu0 0
        %1635 = vmatprep.mubr.bf16.mxu0 0
        %1636 = vmatmul.mubr.bf16.gmra.mxu0 %v1399
        %v1637 = vpop.f32.mrf.mxu0
        %v1638 = vadd.f32 0.0, %v1637
        %v1639 = vpop.f32.mrf.mxu0
        %v1640 = vadd.f32 0.0, %v1639
        %v1641 = vpop.f32.mrf.mxu0
        %v1642 = vadd.f32 0.0, %v1641
        %v1643 = vpop.f32.mrf.mxu0
        %v1644 = vadd.f32 0.0, %v1643
        %1645 = vdwg.mxu0
        %v1646 = vxor.u32 %v1595, 2147483648
        %v1647 = vxor.u32 %v1597, 2147483648
        %v1648 = vxor.u32 %v1599, 2147483648
        %v1649 = vxor.u32 %v1601, 2147483648
        %v1650 = vmul.f32 %v1646, 1.442695
        %v1651 = vpow.pop %v1650
        %v1652 = vmul.f32 %v1647, 1.442695
        %v1653 = vpow.pop %v1652
        %v1654 = vmul.f32 %v1648, 1.442695
        %v1655 = vpow.pop %v1654
        %v1656 = vmul.f32 %v1649, 1.442695
        %v1657 = vpow.pop %v1656
        %v1658 = vadd.f32 %v1651, 1.0
        %v1659 = vadd.f32 %v1653, 1.0
        %v1660 = vadd.f32 %v1655, 1.0
        %v1661 = vadd.f32 %v1657, 1.0
        %v1662 = vrcp.pop %v1658
        %v1663 = vmul.f32 1.0, %v1662
        %v1664 = vrcp.pop %v1659
        %v1665 = vmul.f32 1.0, %v1664
        %v1666 = vrcp.pop %v1660
        %v1667 = vmul.f32 1.0, %v1666
        %v1668 = vrcp.pop %v1661
        %v1669 = vmul.f32 1.0, %v1668
        %v1670 = vmul.f32 %v1595, %v1663
        %v1671 = vmul.f32 %v1597, %v1665
        %v1672 = vmul.f32 %v1599, %v1667
        %v1673 = vmul.f32 %v1601, %v1669
        %v1674 = vmul.f32 %v1670, %v1638
        %v1675 = vmul.f32 %v1671, %v1640
        %v1676 = vmul.f32 %v1672, %v1642
        %v1677 = vmul.f32 %v1673, %v1644
        %v1678 = vld [vmem:[%s6] sm:$0xf]
        %v1679 = vld [vmem:[%s6 + $0x4] sm:$0xf]
        %v1680 = vld [vmem:[%s6 + $0x8] sm:$0xf]
        %v1681 = vld [vmem:[%s6 + $0xc] sm:$0xf]
        %v1682 = vld [vmem:[%s6 + $0x10] sm:$0xf]
        %v1683 = vld [vmem:[%s6 + $0x14] sm:$0xf]
        %v1684 = vld [vmem:[%s6 + $0x18] sm:$0xf]
        %v1685 = vld [vmem:[%s6 + $0x1c] sm:$0xf]
        %v1686 = vld [vmem:[%s6 + $0x20] sm:$0xf]
        %v1687 = vld [vmem:[%s6 + $0x24] sm:$0xf]
        %v1688 = vld [vmem:[%s6 + $0x28] sm:$0xf]
        %v1689 = vld [vmem:[%s6 + $0x2c] sm:$0xf]
        %v1690 = vld [vmem:[%s6 + $0x30] sm:$0xf]
        %v1691 = vld [vmem:[%s6 + $0x34] sm:$0xf]
        %v1692 = vld [vmem:[%s6 + $0x38] sm:$0xf]
        %v1693 = vld [vmem:[%s6 + $0x3c] sm:$0xf]
        %v1694 = vld [vmem:[%s6 + $0x40] sm:$0xf]
        %v1695 = vld [vmem:[%s6 + $0x44] sm:$0xf]
        %v1696 = vld [vmem:[%s6 + $0x48] sm:$0xf]
        %v1697 = vld [vmem:[%s6 + $0x4c] sm:$0xf]
        %v1698 = vld [vmem:[%s6 + $0x50] sm:$0xf]
        %v1699 = vld [vmem:[%s6 + $0x54] sm:$0xf]
        %v1700 = vld [vmem:[%s6 + $0x58] sm:$0xf]
        %v1701 = vld [vmem:[%s6 + $0x5c] sm:$0xf]
        %v1702 = vld [vmem:[%s6 + $0x60] sm:$0xf]
        %v1703 = vld [vmem:[%s6 + $0x64] sm:$0xf]
        %v1704 = vld [vmem:[%s6 + $0x68] sm:$0xf]
        %v1705 = vld [vmem:[%s6 + $0x6c] sm:$0xf]
        %v1706 = vld [vmem:[%s6 + $0x70] sm:$0xf]
        %v1707 = vld [vmem:[%s6 + $0x74] sm:$0xf]
        %v1708 = vld [vmem:[%s6 + $0x78] sm:$0xf]
        %v1709 = vld [vmem:[%s6 + $0x7c] sm:$0xf]
        %v1710 = vpack.c.bf16 %v1676, %v1674
        %v1711 = vpack.c.bf16 %v1677, %v1675
        %v1744 = vunpack.c.l.b16 %v1678
        %v1745 = vunpack.c.l.b16 %v1679
        %v1746 = vunpack.c.l.b16 %v1680
        %v1747 = vunpack.c.l.b16 %v1681
        %v1748 = vunpack.c.l.b16 %v1682
        %v1749 = vunpack.c.l.b16 %v1683
        %v1750 = vunpack.c.l.b16 %v1684
        %v1751 = vunpack.c.l.b16 %v1685
        %v1752 = vunpack.c.l.b16 %v1686
        %v1753 = vunpack.c.l.b16 %v1687
        %v1754 = vunpack.c.l.b16 %v1688
        %v1755 = vunpack.c.l.b16 %v1689
        %v1756 = vunpack.c.l.b16 %v1690
        %v1757 = vunpack.c.l.b16 %v1691
        %v1758 = vunpack.c.l.b16 %v1692
        %v1759 = vunpack.c.l.b16 %v1693
        %v1760 = vunpack.c.l.b16 %v1694
        %v1761 = vunpack.c.l.b16 %v1695
        %v1762 = vunpack.c.l.b16 %v1696
        %v1763 = vunpack.c.l.b16 %v1697
        %v1764 = vunpack.c.l.b16 %v1698
        %v1765 = vunpack.c.l.b16 %v1699
        %v1766 = vunpack.c.l.b16 %v1700
        %v1767 = vunpack.c.l.b16 %v1701
        %v1768 = vunpack.c.l.b16 %v1702
        %v1769 = vunpack.c.l.b16 %v1703
        %v1770 = vunpack.c.l.b16 %v1704
        %v1771 = vunpack.c.l.b16 %v1705
        %v1772 = vunpack.c.l.b16 %v1706
        %v1773 = vunpack.c.l.b16 %v1707
        %v1774 = vunpack.c.l.b16 %v1708
        %v1775 = vunpack.c.l.b16 %v1709
        %v1776 = vpack.c.b16 %v1745, %v1744
        %v1777 = vpack.c.b16 %v1747, %v1746
        %v1778 = vpack.c.b16 %v1749, %v1748
        %v1779 = vpack.c.b16 %v1751, %v1750
        %v1780 = vpack.c.b16 %v1753, %v1752
        %v1781 = vpack.c.b16 %v1755, %v1754
        %v1782 = vpack.c.b16 %v1757, %v1756
        %v1783 = vpack.c.b16 %v1759, %v1758
        %v1784 = vpack.c.b16 %v1761, %v1760
        %v1785 = vpack.c.b16 %v1763, %v1762
        %v1786 = vpack.c.b16 %v1765, %v1764
        %v1787 = vpack.c.b16 %v1767, %v1766
        %v1788 = vpack.c.b16 %v1769, %v1768
        %v1789 = vpack.c.b16 %v1771, %v1770
        %v1790 = vpack.c.b16 %v1773, %v1772
        %v1791 = vpack.c.b16 %v1775, %v1774
        %1808 = vmatprep.subr.bf16.mxu0 0
        %1809 = vmatpush1.bf16.msra.mxu0 %v1783
        %1810 = vmatprep.subr.bf16.mxu0 0
        %1811 = vmatpush1.bf16.msra.mxu0 %v1782
        %1812 = vmatprep.subr.bf16.mxu0 0
        %1813 = vmatpush1.bf16.msra.mxu0 %v1781
        %1814 = vmatprep.subr.bf16.mxu0 0
        %1815 = vmatpush1.bf16.msra.mxu0 %v1780
        %1816 = vmatprep.subr.bf16.mxu0 0
        %1817 = vmatpush1.bf16.msra.mxu0 %v1779
        %1818 = vmatprep.subr.bf16.mxu0 0
        %1819 = vmatpush1.bf16.msra.mxu0 %v1778
        %1820 = vmatprep.subr.bf16.mxu0 0
        %1821 = vmatpush1.bf16.msra.mxu0 %v1777
        %1822 = vmatprep.subr.bf16.mxu0 0
        %1823 = vmatpush1.bf16.msra.mxu0 %v1776
        %1824 = vmatprep.subr.bf16.mxu0 0
        %1825 = vmatpush2.bf16.msra.mxu0 %v1791
        %1826 = vmatprep.subr.bf16.mxu0 0
        %1827 = vmatpush2.bf16.msra.mxu0 %v1790
        %1828 = vmatprep.subr.bf16.mxu0 0
        %1829 = vmatpush2.bf16.msra.mxu0 %v1789
        %1830 = vmatprep.subr.bf16.mxu0 0
        %1831 = vmatpush2.bf16.msra.mxu0 %v1788
        %1832 = vmatprep.subr.bf16.mxu0 0
        %1833 = vmatpush2.bf16.msra.mxu0 %v1787
        %1834 = vmatprep.subr.bf16.mxu0 0
        %1835 = vmatpush2.bf16.msra.mxu0 %v1786
        %1836 = vmatprep.subr.bf16.mxu0 0
        %1837 = vmatpush2.bf16.msra.mxu0 %v1785
        %1838 = vmatprep.subr.bf16.mxu0 0
        %1839 = vmatpush2.bf16.msra.mxu0 %v1784
        %1840 = vmatprep.mubr.bf16.mxu0 %v1711
        %1841 = vmatmul.mubr.bf16.gmra.mxu0 %v1710
        %v1842 = vpop.f32.mrf.mxu0
        %v1843 = vadd.f32 0.0, %v1842
        %v1844 = vpop.f32.mrf.mxu0
        %v1845 = vpop.f32.mrf.mxu0
        %v1846 = vadd.f32 0.0, %v1845
        %v1847 = vpop.f32.mrf.mxu0
        %1848 = vdwg.mxu0
        %v1849 = vadd.f32 %v1342, %v1843
        %v1850 = vadd.f32 %v1343, %v1846
        %1851 = vst [vmem:[%s347] sm:$0xff] %v1849
        %1852 = vst [vmem:[%s347 + $0x8] sm:$0xff] %v1850
        %p1853 = scmp.lt.s32.totalorder %s21, 1
        %s1854 = scalar_select %p1853, %s21, 1
        %s1855 = smul.addr %s1854, 2
        %s1856 = smul.addr %s1855, 8
        %s1857 = scalar_lea.vmem %s9, %s1856
        // Predicated region
        $region61: #{_lambda_.3} parent=55 // pred_check
          %p1858 = pneg %p233
        $region62: #{_lambda_.3} parent=55 // pred_check_branch
          %1860 = sbr.rel (%p1858) target = $region64
        $region63: #{_lambda_.3} parent=55 // pred_region
          _
        $region64: #{_lambda_.3} parent=55 // pred_fallthru
          _
      $region56: #{_lambda_.3} parent=5 // pred_fallthru
        _
      %p1861 = scmp.le.s32.totalorder 2, %s16
      // Predicated region
      $region65: #{_lambda_.3} parent=5 // pred_check
        %p1862 = pneg %p1861
      $region66: #{_lambda_.3} parent=5 // pred_check_branch
        %1864 = sbr.rel (%p1862) target = $region68
      $region67: #{_lambda_.3} parent=5 // pred_region
        %s1865 = ssub.s32 %s16, 2
        // Predicated region
        $region69: #{_lambda_.3} parent=67 // pred_check
          %p1866 = pneg %p239
        $region70: #{_lambda_.3} parent=67 // pred_check_branch
          %1868 = sbr.rel (%p1866) target = $region72
        $region71: #{_lambda_.3} parent=67 // pred_region
          %p1869 = scmp.lt.s32.totalorder %s22, 1
          %s1870 = scalar_select %p1869, %s22, 1
          %s1871 = smul.addr %s1870, 2
          %s1872 = smul.addr %s1871, 8
          %s1873 = scalar_lea.vmem %s9, %s1872
        $region72: #{_lambda_.3} parent=67 // pred_fallthru
          _
      $region68: #{_lambda_.3} parent=5 // pred_fallthru
        _
    $region6: #{_lambda_.3} parent=1 // loop_footer
      %s20 = sadd.s32 1, %s16
    $region7: #{_lambda_.3} parent=1 // loop_footer_branch
      %15 = sbr.rel target = $region3
    $region8: #{_lambda_.3} parent=1 // loop_exit
      _
    %1874 = vsyncpa [#allocation3], 1
    %s1875 = scalar_lea.sflag [#allocation3], 1
    %1876 = vsyncpa %s1875, 1

</llo_original>
